<compile_context>
chip_gen: v7x
topology: tpu7x:2x2x1
jax: 0.10.0
libtpu: 0.0.40
codegen_flags: <defaults>
</compile_context>

<pallas_src>
import functools

import jax
import jax.numpy as jnp
from jax.experimental import pallas as pl
from jax.experimental.pallas import tpu as pltpu

EPS = 1e-5                                # PyTorch GroupNorm default eps
VMEM_LIMIT_BYTES = 64 * 1024 * 1024       # > 32 MiB default, within v7x physical VMEM


# ---------------------------------------------------------------------------
# In-kernel helpers
# ---------------------------------------------------------------------------
def _gn_swish(x, m, gamma, beta, gmat, gmat_t, count):
    """GroupNorm (centered two-pass variance) + Swish on a halo-padded activation.

    x:     (Np, C) f32, halo/junk outside true-image positions
    m:     (Np, 1) f32 mask, 1.0 at true-image positions
    gamma/beta: (1, C); gmat: (C, G) one-hot channel->group; gmat_t: (G, C)
    count: elements per (batch, group) = H*W*(C//G)
    Returns (Np, C) with halo/junk positions zeroed (ready for the 3x3 conv taps).
    """
    xm = x * m
    s1 = jnp.sum(xm, axis=0, keepdims=True)                                    # (1, C)
    mean_c = jnp.dot(jnp.dot(s1, gmat, preferred_element_type=jnp.float32),
                     gmat_t, preferred_element_type=jnp.float32) / count       # (1, C)
    xc = (x - mean_c) * m                                                      # centered
    s2 = jnp.sum(xc * xc, axis=0, keepdims=True)                               # (1, C)
    var_c = jnp.dot(jnp.dot(s2, gmat, preferred_element_type=jnp.float32),
                    gmat_t, preferred_element_type=jnp.float32) / count        # (1, C)
    inv = jax.lax.rsqrt(var_c + EPS)
    y = (x - mean_c) * inv * gamma + beta
    y = y * jax.nn.sigmoid(y)                                                  # Swish
    return y * m                                                               # re-zero halo


def _conv3x3(y, w_ref, H, W, cdtype):
    """3x3 SAME conv as 9 shifted matmuls on the flattened zero-halo activation.

    y:     ((H+4)*(W+2), Cin) f32, halo positions zero
    w_ref: (9, Cin, Cout) ref, tap index = dy*3 + dx
    Returns (H*(W+2), Cout) f32 on the padded-width grid (halo grid rows 2..H+1,
    all W+2 columns; the 2 halo columns per row carry junk, masked/sliced later).
    """
    Wp = W + 2
    HWp = H * Wp
    acc = None
    for dy in range(3):
        for dx in range(3):
            start = (dy + 1) * Wp + (dx - 1)            # shift of tap (dy-1, dx-1)
            tap = y[start:start + HWp, :].astype(cdtype)
            part = jnp.dot(tap, w_ref[dy * 3 + dx],
                           preferred_element_type=jnp.float32)
            acc = part if acc is None else acc + part
    return acc


# ---------------------------------------------------------------------------
# Pallas kernels (one batch element per grid step)
# ---------------------------------------------------------------------------
def _stage1_kernel(x_ref, m_ref, gamma_ref, beta_ref, gmat_ref, gmat_t_ref,
                   w_ref, b_ref, temb_ref, o_ref, *, n_groups, H, W, cdtype):
    """h = conv1(Swish(GroupNorm(x))) + b1 + time_emb, emitted in zero-halo layout."""
    Wp = W + 2
    C = x_ref.shape[-1]
    count = jnp.float32(H * W * (C // n_groups))
    y = _gn_swish(x_ref[0], m_ref[...], gamma_ref[...], beta_ref[...],
                  gmat_ref[...], gmat_t_ref[...], count)
    res = _conv3x3(y, w_ref, H, W, cdtype) + b_ref[...] + temb_ref[0]
    # Write directly in the halo layout stage 2 consumes (border rows must be finite).
    o_ref[...] = jnp.zeros(o_ref.shape, o_ref.dtype)
    o_ref[0, 2 * Wp:(H + 2) * Wp, :] = res


def _stage2_kernel(h_ref, x_ref, m_ref, gamma_ref, beta_ref, gmat_ref, gmat_t_ref,
                   w_ref, b_ref, ws_ref, bs_ref, o_ref, *, n_groups, H, W, cdtype):
    """out = conv2(Swish(GroupNorm(h))) + b2 + (x @ Ws + bs)  (1x1 shortcut fused)."""
    Wp = W + 2
    C = h_ref.shape[-1]
    count = jnp.float32(H * W * (C // n_groups))
    y = _gn_swish(h_ref[0], m_ref[...], gamma_ref[...], beta_ref[...],
                  gmat_ref[...], gmat_t_ref[...], count)
    # TODO(synk): nn.Dropout(0.1) is identity in eval mode; train-mode RNG masking not modeled.
    acc = _conv3x3(y, w_ref, H, W, cdtype) + b_ref[...]
    xs = x_ref[0, 2 * Wp:(H + 2) * Wp, :].astype(cdtype)   # original x, interior rows
    sc = jnp.dot(xs, ws_ref[...], preferred_element_type=jnp.float32) + bs_ref[...]
    o_ref[0] = acc + sc


# ---------------------------------------------------------------------------
# JAX glue + pallas_call wrappers
# ---------------------------------------------------------------------------
def _halo_flatten(x_nhwc):
    """(B,H,W,C) -> (B,(H+4)*(W+2),C): zero halo of 2 rows top/bottom, 1 col each side."""
    B, H, W, C = x_nhwc.shape
    xp = jnp.pad(x_nhwc, ((0, 0), (2, 2), (1, 1), (0, 0)))
    return xp.reshape(B, (H + 4) * (W + 2), C)


def _halo_mask(H, W):
    Wp = W + 2
    r = jnp.arange(H + 4)[:, None]
    c = jnp.arange(Wp)[None, :]
    m = ((r >= 2) & (r < H + 2) & (c >= 1) & (c < W + 1)).astype(jnp.float32)
    return m.reshape((H + 4) * Wp, 1)


def _group_matrix(C, G):
    return (jnp.arange(C)[:, None] // (C // G) == jnp.arange(G)[None, :]).astype(jnp.float32)


def _stage1(xpad, mask, gamma, beta, gmat, w9, bias, temb, *, n_groups, H, W, cdtype):
    B, Np, Cin = xpad.shape
    Cout = w9.shape[-1]
    G = n_groups
    kernel = functools.partial(_stage1_kernel, n_groups=G, H=H, W=W, cdtype=cdtype)
    return pl.pallas_call(
        kernel,
        out_shape=jax.ShapeDtypeStruct((B, Np, Cout), jnp.float32),
        grid=(B,),
        in_specs=[
            pl.BlockSpec((1, Np, Cin), lambda b: (b, 0, 0)),    # x (halo layout)
            pl.BlockSpec((Np, 1), lambda b: (0, 0)),            # interior mask
            pl.BlockSpec((1, Cin), lambda b: (0, 0)),           # GN gamma
            pl.BlockSpec((1, Cin), lambda b: (0, 0)),           # GN beta
            pl.BlockSpec((Cin, G), lambda b: (0, 0)),           # channel->group one-hot
            pl.BlockSpec((G, Cin), lambda b: (0, 0)),
            pl.BlockSpec((9, Cin, Cout), lambda b: (0, 0, 0)),  # conv1 taps
            pl.BlockSpec((1, Cout), lambda b: (0, 0)),          # conv1 bias
            pl.BlockSpec((1, 1, Cout), lambda b: (b, 0, 0)),    # time embedding
        ],
        out_specs=pl.BlockSpec((1, Np, Cout), lambda b: (b, 0, 0)),
        compiler_params=pltpu.CompilerParams(
            dimension_semantics=("parallel",),
            vmem_limit_bytes=VMEM_LIMIT_BYTES,
        ),
    )(xpad, mask, gamma.reshape(1, Cin), beta.reshape(1, Cin), gmat, gmat.T,
      w9, bias.reshape(1, Cout), temb)


def _stage2(h, xpad, mask, gamma, beta, gmat, w9, bias, ws, bs, *, n_groups, H, W, cdtype):
    B, Np, Cout = h.shape
    Cin = xpad.shape[-1]
    G = n_groups
    HWp = H * (W + 2)
    kernel = functools.partial(_stage2_kernel, n_groups=G, H=H, W=W, cdtype=cdtype)
    return pl.pallas_call(
        kernel,
        out_shape=jax.ShapeDtypeStruct((B, HWp, Cout), jnp.float32),
        grid=(B,),
        in_specs=[
            pl.BlockSpec((1, Np, Cout), lambda b: (b, 0, 0)),    # h (halo layout)
            pl.BlockSpec((1, Np, Cin), lambda b: (b, 0, 0)),     # original x (for shortcut)
            pl.BlockSpec((Np, 1), lambda b: (0, 0)),             # interior mask
            pl.BlockSpec((1, Cout), lambda b: (0, 0)),           # GN gamma
            pl.BlockSpec((1, Cout), lambda b: (0, 0)),           # GN beta
            pl.BlockSpec((Cout, G), lambda b: (0, 0)),
            pl.BlockSpec((G, Cout), lambda b: (0, 0)),
            pl.BlockSpec((9, Cout, Cout), lambda b: (0, 0, 0)),  # conv2 taps
            pl.BlockSpec((1, Cout), lambda b: (0, 0)),           # conv2 bias
            pl.BlockSpec((Cin, Cout), lambda b: (0, 0)),         # 1x1 shortcut weight
            pl.BlockSpec((1, Cout), lambda b: (0, 0)),           # shortcut bias
        ],
        out_specs=pl.BlockSpec((1, HWp, Cout), lambda b: (b, 0, 0)),
        compiler_params=pltpu.CompilerParams(
            dimension_semantics=("parallel",),
            vmem_limit_bytes=VMEM_LIMIT_BYTES,
        ),
    )(h, xpad, mask, gamma.reshape(1, Cout), beta.reshape(1, Cout), gmat, gmat.T,
      w9, bias.reshape(1, Cout), ws, bs.reshape(1, Cout))


def residual_block_forward(x_nchw, t, p, n_groups, conv_dtype=jnp.float32):
    """Pallas implementation of ResidualBlock.forward (eval mode)."""
    B, Cin, H, W = x_nchw.shape
    Cout = p["w1"].shape[0]
    Wp = W + 2

    # NCHW -> zero-halo flattened NHWC (the only XLA layout pass on the activation).
    x_nhwc = jnp.transpose(x_nchw, (0, 2, 3, 1))
    xpad = _halo_flatten(x_nhwc)                          # (B, (H+4)*Wp, Cin)
    mask = _halo_mask(H, W)                               # ((H+4)*Wp, 1)

    gmat1 = _group_matrix(Cin, n_groups)
    gmat2 = _group_matrix(Cout, n_groups)

    # Time embedding: tiny (B,Tch)x(Tch,Cout) matmul -> plain JAX, fused by XLA.
    ts = t * jax.nn.sigmoid(t)
    temb = (ts @ p["wt"].T + p["bt"]).reshape(B, 1, Cout)

    # PyTorch OIHW -> (9, Cin, Cout) tap matrices (tap = dy*3+dx), MXU-ready dtype.
    w1_9 = jnp.transpose(p["w1"], (2, 3, 1, 0)).reshape(9, Cin, Cout).astype(conv_dtype)
    w2_9 = jnp.transpose(p["w2"], (2, 3, 1, 0)).reshape(9, Cout, Cout).astype(conv_dtype)
    if "ws" in p:                                         # 1x1 shortcut conv
        ws = p["ws"][:, :, 0, 0].T.astype(conv_dtype)     # (Cin, Cout)
        bs = p["bs"]
    else:                                                 # identity shortcut (Cin == Cout)
        ws = jnp.eye(Cin, dtype=conv_dtype)
        bs = jnp.zeros((Cout,), jnp.float32)

    h = _stage1(xpad, mask, p["gn1_w"], p["gn1_b"], gmat1, w1_9, p["b1"], temb,
                n_groups=n_groups, H=H, W=W, cdtype=conv_dtype)
    out = _stage2(h, xpad, mask, p["gn2_w"], p["gn2_b"], gmat2, w2_9, p["b2"], ws, bs,
                  n_groups=n_groups, H=H, W=W, cdtype=conv_dtype)

    # (B, H*Wp, Cout) padded-width rows -> drop halo columns -> NCHW
    out = out.reshape(B, H, Wp, Cout)[:, :, 1:W + 1, :]
    return jnp.transpose(out, (0, 3, 1, 2))


# ---------------------------------------------------------------------------
# Pure-JAX reference (validation only)
# ---------------------------------------------------------------------------
def ref_forward(x_nchw, t, p, n_groups):
    x = jnp.transpose(x_nchw, (0, 2, 3, 1))

    def gn(v, gamma, beta):
        B, H, W, C = v.shape
        G = n_groups
        vg = v.reshape(B, H * W, G, C // G)
        mean = vg.mean(axis=(1, 3), keepdims=True)
        var = ((vg - mean) ** 2).mean(axis=(1, 3), keepdims=True)
        vn = ((vg - mean) / jnp.sqrt(var + EPS)).reshape(B, H, W, C)
        return vn * gamma + beta

    def swish(v):
        return v * jax.nn.sigmoid(v)

    def conv(v, w_pt, b_pt):
        w = jnp.transpose(w_pt, (2, 3, 1, 0))  # HWIO
        y = jax.lax.conv_general_dilated(v, w, (1, 1), "SAME",
                                         dimension_numbers=("NHWC", "HWIO", "NHWC"))
        return y + b_pt

    h = conv(swish(gn(x, p["gn1_w"], p["gn1_b"])), p["w1"], p["b1"])
    temb = swish(t) @ p["wt"].T + p["bt"]
    h = h + temb[:, None, None, :]
    h = conv(swish(gn(h, p["gn2_w"], p["gn2_b"])), p["w2"], p["b2"])
    sc = x @ p["ws"][:, :, 0, 0].T + p["bs"]
    return jnp.transpose(h + sc, (0, 3, 1, 2))


# ---------------------------------------------------------------------------
if __name__ == "__main__":
    # Cin != Cout exercises the 1x1 shortcut; n_groups divides both channel counts.
    B, Cin, Cout, Tch, H, W, G = 2, 8, 16, 32, 16, 16, 4

    key = jax.random.PRNGKey(0)
    ks = jax.random.split(key, 16)
    x = jax.random.normal(ks[0], (B, Cin, H, W), jnp.float32)
    t = jax.random.normal(ks[1], (B, Tch), jnp.float32)

    params = {
        "gn1_w": 1.0 + 0.1 * jax.random.normal(ks[2], (Cin,), jnp.float32),
        "gn1_b": 0.1 * jax.random.normal(ks[3], (Cin,), jnp.float32),
        "w1": 0.1 * jax.random.normal(ks[4], (Cout, Cin, 3, 3), jnp.float32),
        "b1": 0.1 * jax.random.normal(ks[5], (Cout,), jnp.float32),
        "gn2_w": 1.0 + 0.1 * jax.random.normal(ks[6], (Cout,), jnp.float32),
        "gn2_b": 0.1 * jax.random.normal(ks[7], (Cout,), jnp.float32),
        "w2": 0.1 * jax.random.normal(ks[8], (Cout, Cout, 3, 3), jnp.float32),
        "b2": 0.1 * jax.random.normal(ks[9], (Cout,), jnp.float32),
        "wt": 0.1 * jax.random.normal(ks[10], (Cout, Tch), jnp.float32),
        "bt": 0.1 * jax.random.normal(ks[11], (Cout,), jnp.float32),
        "ws": 0.1 * jax.random.normal(ks[12], (Cout, Cin, 1, 1), jnp.float32),
        "bs": 0.1 * jax.random.normal(ks[13], (Cout,), jnp.float32),
    }

    ref = ref_forward(x, t, params, n_groups=G)

    # f32 MXU path
    out = residual_block_forward(x, t, params, n_groups=G)
    out = jax.block_until_ready(out)
    assert out.shape == (B, Cout, H, W)
    err = float(jnp.max(jnp.abs(out - ref)))
    assert jnp.allclose(out, ref, atol=1e-2, rtol=1e-2), err

    # bf16 MXU path (2x MXU throughput, half the matmul bytes); looser tolerance.
    out_bf16 = residual_block_forward(x, t, params, n_groups=G,
                                      conv_dtype=jnp.bfloat16)
    out_bf16 = jax.block_until_ready(out_bf16)
    err_bf16 = float(jnp.max(jnp.abs(out_bf16 - ref)))
    assert jnp.allclose(out_bf16, ref, atol=5e-2, rtol=5e-2), err_bf16

    print("KERNEL_OK")
</pallas_src>

<mosaic_0001>
module attributes {stable_mosaic.version = 11 : i64} {
  func.func @_stage1_kernel(%arg0: i32, %arg1: memref<1x360x8xf32, #tpu.memory_space<vmem>>, %arg2: memref<360x1xf32, #tpu.memory_space<vmem>>, %arg3: memref<1x8xf32, #tpu.memory_space<vmem>>, %arg4: memref<1x8xf32, #tpu.memory_space<vmem>>, %arg5: memref<8x4xf32, #tpu.memory_space<vmem>>, %arg6: memref<4x8xf32, #tpu.memory_space<vmem>>, %arg7: memref<9x8x16xf32, #tpu.memory_space<vmem>>, %arg8: memref<1x16xf32, #tpu.memory_space<vmem>>, %arg9: memref<1x1x16xf32, #tpu.memory_space<vmem>>, %arg10: memref<1x360x16xf32, #tpu.memory_space<vmem>>) attributes {dimension_semantics = [#tpu.dimension_semantics<parallel>], iteration_bounds = array<i64: 2>, scalar_prefetch = 0 : i64, scratch_operands = 0 : i64, tpu.core_type = #tpu.core_type<tc>, window_params = [{transform_indices = @transform_0, window_bounds = array<i64: 1, 360, 8>}, {pipeline_mode = #tpu.pipeline_mode<synchronous>, transform_indices = @transform_1, window_bounds = array<i64: 360, 1>}, {pipeline_mode = #tpu.pipeline_mode<synchronous>, transform_indices = @transform_2, window_bounds = array<i64: 1, 8>}, {pipeline_mode = #tpu.pipeline_mode<synchronous>, transform_indices = @transform_3, window_bounds = array<i64: 1, 8>}, {pipeline_mode = #tpu.pipeline_mode<synchronous>, transform_indices = @transform_4, window_bounds = array<i64: 8, 4>}, {pipeline_mode = #tpu.pipeline_mode<synchronous>, transform_indices = @transform_5, window_bounds = array<i64: 4, 8>}, {pipeline_mode = #tpu.pipeline_mode<synchronous>, transform_indices = @transform_6, window_bounds = array<i64: 9, 8, 16>}, {pipeline_mode = #tpu.pipeline_mode<synchronous>, transform_indices = @transform_7, window_bounds = array<i64: 1, 16>}, {transform_indices = @transform_8, window_bounds = array<i64: 1, 1, 16>}, {transform_indices = @transform_9, window_bounds = array<i64: 1, 360, 16>}]} {
    %c0 = arith.constant 0 : index
    %c0_0 = arith.constant 0 : index
    %c0_1 = arith.constant 0 : index
    %0 = vector.load %arg1[%c0, %c0_0, %c0_1] : memref<1x360x8xf32, #tpu.memory_space<vmem>>, vector<1x360x8xf32>
    %1 = vector.shape_cast %0 : vector<1x360x8xf32> to vector<360x8xf32>
    %c0_2 = arith.constant 0 : index
    %c0_3 = arith.constant 0 : index
    %2 = vector.load %arg2[%c0_2, %c0_3] : memref<360x1xf32, #tpu.memory_space<vmem>>, vector<360x1xf32>
    %c0_4 = arith.constant 0 : index
    %c0_5 = arith.constant 0 : index
    %3 = vector.load %arg3[%c0_4, %c0_5] : memref<1x8xf32, #tpu.memory_space<vmem>>, vector<1x8xf32>
    %c0_6 = arith.constant 0 : index
    %c0_7 = arith.constant 0 : index
    %4 = vector.load %arg4[%c0_6, %c0_7] : memref<1x8xf32, #tpu.memory_space<vmem>>, vector<1x8xf32>
    %c0_8 = arith.constant 0 : index
    %c0_9 = arith.constant 0 : index
    %5 = vector.load %arg5[%c0_8, %c0_9] : memref<8x4xf32, #tpu.memory_space<vmem>>, vector<8x4xf32>
    %c0_10 = arith.constant 0 : index
    %c0_11 = arith.constant 0 : index
    %6 = vector.load %arg6[%c0_10, %c0_11] : memref<4x8xf32, #tpu.memory_space<vmem>>, vector<4x8xf32>
    %7 = vector.broadcast %2 : vector<360x1xf32> to vector<360x8xf32>
    %8 = arith.mulf %1, %7 : vector<360x8xf32>
    %cst = arith.constant dense<0.000000e+00> : vector<8xf32>
    %9 = vector.multi_reduction <add>, %8, %cst [0] : vector<360x8xf32> to vector<8xf32>
    %10 = vector.shape_cast %9 : vector<8xf32> to vector<1x8xf32>
    %cst_12 = arith.constant dense<0.000000e+00> : vector<1x4xf32>
    %11 = tpu.matmul %10, %5, %cst_12 {dimension_numbers = #tpu.dot_dimension_numbers<[1], [0], [0], [1], [0, 0, 1, 1], [], []>} : vector<1x8xf32>, vector<8x4xf32>, vector<1x4xf32> -> vector<1x4xf32>
    %cst_13 = arith.constant dense<0.000000e+00> : vector<1x8xf32>
    %12 = tpu.matmul %11, %6, %cst_13 {dimension_numbers = #tpu.dot_dimension_numbers<[1], [0], [0], [1], [0, 0, 1, 1], [], []>} : vector<1x4xf32>, vector<4x8xf32>, vector<1x8xf32> -> vector<1x8xf32>
    %cst_14 = arith.constant 5.120000e+02 : f32
    %13 = vector.broadcast %cst_14 : f32 to vector<1x8xf32>
    %14 = arith.divf %12, %13 : vector<1x8xf32>
    %15 = vector.broadcast %14 : vector<1x8xf32> to vector<360x8xf32>
    %16 = arith.subf %1, %15 : vector<360x8xf32>
    %17 = vector.broadcast %2 : vector<360x1xf32> to vector<360x8xf32>
    %18 = arith.mulf %16, %17 : vector<360x8xf32>
    %19 = arith.mulf %18, %18 : vector<360x8xf32>
    %cst_15 = arith.constant dense<0.000000e+00> : vector<8xf32>
    %20 = vector.multi_reduction <add>, %19, %cst_15 [0] : vector<360x8xf32> to vector<8xf32>
    %21 = vector.shape_cast %20 : vector<8xf32> to vector<1x8xf32>
    %cst_16 = arith.constant dense<0.000000e+00> : vector<1x4xf32>
    %22 = tpu.matmul %21, %5, %cst_16 {dimension_numbers = #tpu.dot_dimension_numbers<[1], [0], [0], [1], [0, 0, 1, 1], [], []>} : vector<1x8xf32>, vector<8x4xf32>, vector<1x4xf32> -> vector<1x4xf32>
    %cst_17 = arith.constant dense<0.000000e+00> : vector<1x8xf32>
    %23 = tpu.matmul %22, %6, %cst_17 {dimension_numbers = #tpu.dot_dimension_numbers<[1], [0], [0], [1], [0, 0, 1, 1], [], []>} : vector<1x4xf32>, vector<4x8xf32>, vector<1x8xf32> -> vector<1x8xf32>
    %cst_18 = arith.constant 5.120000e+02 : f32
    %24 = vector.broadcast %cst_18 : f32 to vector<1x8xf32>
    %25 = arith.divf %23, %24 : vector<1x8xf32>
    %cst_19 = arith.constant 9.99999974E-6 : f32
    %26 = vector.broadcast %cst_19 : f32 to vector<1x8xf32>
    %27 = arith.addf %25, %26 : vector<1x8xf32>
    %28 = math.rsqrt %27 : vector<1x8xf32>
    %29 = vector.broadcast %14 : vector<1x8xf32> to vector<360x8xf32>
    %30 = arith.subf %1, %29 : vector<360x8xf32>
    %31 = vector.broadcast %28 : vector<1x8xf32> to vector<360x8xf32>
    %32 = arith.mulf %30, %31 : vector<360x8xf32>
    %33 = vector.broadcast %3 : vector<1x8xf32> to vector<360x8xf32>
    %34 = arith.mulf %32, %33 : vector<360x8xf32>
    %35 = vector.broadcast %4 : vector<1x8xf32> to vector<360x8xf32>
    %36 = arith.addf %34, %35 : vector<360x8xf32>
    %37 = arith.negf %36 : vector<360x8xf32>
    %38 = math.exp %37 : vector<360x8xf32>
    %cst_20 = arith.constant 1.000000e+00 : f32
    %39 = vector.broadcast %cst_20 : f32 to vector<360x8xf32>
    %40 = arith.addf %39, %38 : vector<360x8xf32>
    %41 = arith.divf %39, %40 : vector<360x8xf32>
    %42 = arith.mulf %36, %41 : vector<360x8xf32>
    %43 = vector.broadcast %2 : vector<360x1xf32> to vector<360x8xf32>
    %44 = arith.mulf %42, %43 : vector<360x8xf32>
    %45 = vector.extract_strided_slice %44 {offsets = [17, 0], sizes = [288, 8], strides = [1, 1]} : vector<360x8xf32> to vector<288x8xf32>
    %c0_21 = arith.constant 0 : index
    %c0_22 = arith.constant 0 : index
    %c0_23 = arith.constant 0 : index
    %46 = vector.load %arg7[%c0_21, %c0_22, %c0_23] : memref<9x8x16xf32, #tpu.memory_space<vmem>>, vector<1x8x16xf32>
    %47 = vector.shape_cast %46 : vector<1x8x16xf32> to vector<8x16xf32>
    %cst_24 = arith.constant dense<0.000000e+00> : vector<288x16xf32>
    %48 = tpu.matmul %45, %47, %cst_24 {dimension_numbers = #tpu.dot_dimension_numbers<[1], [0], [0], [1], [0, 0, 1, 1], [], []>} : vector<288x8xf32>, vector<8x16xf32>, vector<288x16xf32> -> vector<288x16xf32>
    %49 = vector.extract_strided_slice %44 {offsets = [18, 0], sizes = [288, 8], strides = [1, 1]} : vector<360x8xf32> to vector<288x8xf32>
    %c1 = arith.constant 1 : index
    %c0_25 = arith.constant 0 : index
    %c0_26 = arith.constant 0 : index
    %50 = vector.load %arg7[%c1, %c0_25, %c0_26] : memref<9x8x16xf32, #tpu.memory_space<vmem>>, vector<1x8x16xf32>
    %51 = vector.shape_cast %50 : vector<1x8x16xf32> to vector<8x16xf32>
    %cst_27 = arith.constant dense<0.000000e+00> : vector<288x16xf32>
    %52 = tpu.matmul %49, %51, %cst_27 {dimension_numbers = #tpu.dot_dimension_numbers<[1], [0], [0], [1], [0, 0, 1, 1], [], []>} : vector<288x8xf32>, vector<8x16xf32>, vector<288x16xf32> -> vector<288x16xf32>
    %53 = arith.addf %48, %52 : vector<288x16xf32>
    %54 = vector.extract_strided_slice %44 {offsets = [19, 0], sizes = [288, 8], strides = [1, 1]} : vector<360x8xf32> to vector<288x8xf32>
    %c2 = arith.constant 2 : index
    %c0_28 = arith.constant 0 : index
    %c0_29 = arith.constant 0 : index
    %55 = vector.load %arg7[%c2, %c0_28, %c0_29] : memref<9x8x16xf32, #tpu.memory_space<vmem>>, vector<1x8x16xf32>
    %56 = vector.shape_cast %55 : vector<1x8x16xf32> to vector<8x16xf32>
    %cst_30 = arith.constant dense<0.000000e+00> : vector<288x16xf32>
    %57 = tpu.matmul %54, %56, %cst_30 {dimension_numbers = #tpu.dot_dimension_numbers<[1], [0], [0], [1], [0, 0, 1, 1], [], []>} : vector<288x8xf32>, vector<8x16xf32>, vector<288x16xf32> -> vector<288x16xf32>
    %58 = arith.addf %53, %57 : vector<288x16xf32>
    %59 = vector.extract_strided_slice %44 {offsets = [35, 0], sizes = [288, 8], strides = [1, 1]} : vector<360x8xf32> to vector<288x8xf32>
    %c3 = arith.constant 3 : index
    %c0_31 = arith.constant 0 : index
    %c0_32 = arith.constant 0 : index
    %60 = vector.load %arg7[%c3, %c0_31, %c0_32] : memref<9x8x16xf32, #tpu.memory_space<vmem>>, vector<1x8x16xf32>
    %61 = vector.shape_cast %60 : vector<1x8x16xf32> to vector<8x16xf32>
    %cst_33 = arith.constant dense<0.000000e+00> : vector<288x16xf32>
    %62 = tpu.matmul %59, %61, %cst_33 {dimension_numbers = #tpu.dot_dimension_numbers<[1], [0], [0], [1], [0, 0, 1, 1], [], []>} : vector<288x8xf32>, vector<8x16xf32>, vector<288x16xf32> -> vector<288x16xf32>
    %63 = arith.addf %58, %62 : vector<288x16xf32>
    %64 = vector.extract_strided_slice %44 {offsets = [36, 0], sizes = [288, 8], strides = [1, 1]} : vector<360x8xf32> to vector<288x8xf32>
    %c4 = arith.constant 4 : index
    %c0_34 = arith.constant 0 : index
    %c0_35 = arith.constant 0 : index
    %65 = vector.load %arg7[%c4, %c0_34, %c0_35] : memref<9x8x16xf32, #tpu.memory_space<vmem>>, vector<1x8x16xf32>
    %66 = vector.shape_cast %65 : vector<1x8x16xf32> to vector<8x16xf32>
    %cst_36 = arith.constant dense<0.000000e+00> : vector<288x16xf32>
    %67 = tpu.matmul %64, %66, %cst_36 {dimension_numbers = #tpu.dot_dimension_numbers<[1], [0], [0], [1], [0, 0, 1, 1], [], []>} : vector<288x8xf32>, vector<8x16xf32>, vector<288x16xf32> -> vector<288x16xf32>
    %68 = arith.addf %63, %67 : vector<288x16xf32>
    %69 = vector.extract_strided_slice %44 {offsets = [37, 0], sizes = [288, 8], strides = [1, 1]} : vector<360x8xf32> to vector<288x8xf32>
    %c5 = arith.constant 5 : index
    %c0_37 = arith.constant 0 : index
    %c0_38 = arith.constant 0 : index
    %70 = vector.load %arg7[%c5, %c0_37, %c0_38] : memref<9x8x16xf32, #tpu.memory_space<vmem>>, vector<1x8x16xf32>
    %71 = vector.shape_cast %70 : vector<1x8x16xf32> to vector<8x16xf32>
    %cst_39 = arith.constant dense<0.000000e+00> : vector<288x16xf32>
    %72 = tpu.matmul %69, %71, %cst_39 {dimension_numbers = #tpu.dot_dimension_numbers<[1], [0], [0], [1], [0, 0, 1, 1], [], []>} : vector<288x8xf32>, vector<8x16xf32>, vector<288x16xf32> -> vector<288x16xf32>
    %73 = arith.addf %68, %72 : vector<288x16xf32>
    %74 = vector.extract_strided_slice %44 {offsets = [53, 0], sizes = [288, 8], strides = [1, 1]} : vector<360x8xf32> to vector<288x8xf32>
    %c6 = arith.constant 6 : index
    %c0_40 = arith.constant 0 : index
    %c0_41 = arith.constant 0 : index
    %75 = vector.load %arg7[%c6, %c0_40, %c0_41] : memref<9x8x16xf32, #tpu.memory_space<vmem>>, vector<1x8x16xf32>
    %76 = vector.shape_cast %75 : vector<1x8x16xf32> to vector<8x16xf32>
    %cst_42 = arith.constant dense<0.000000e+00> : vector<288x16xf32>
    %77 = tpu.matmul %74, %76, %cst_42 {dimension_numbers = #tpu.dot_dimension_numbers<[1], [0], [0], [1], [0, 0, 1, 1], [], []>} : vector<288x8xf32>, vector<8x16xf32>, vector<288x16xf32> -> vector<288x16xf32>
    %78 = arith.addf %73, %77 : vector<288x16xf32>
    %79 = vector.extract_strided_slice %44 {offsets = [54, 0], sizes = [288, 8], strides = [1, 1]} : vector<360x8xf32> to vector<288x8xf32>
    %c7 = arith.constant 7 : index
    %c0_43 = arith.constant 0 : index
    %c0_44 = arith.constant 0 : index
    %80 = vector.load %arg7[%c7, %c0_43, %c0_44] : memref<9x8x16xf32, #tpu.memory_space<vmem>>, vector<1x8x16xf32>
    %81 = vector.shape_cast %80 : vector<1x8x16xf32> to vector<8x16xf32>
    %cst_45 = arith.constant dense<0.000000e+00> : vector<288x16xf32>
    %82 = tpu.matmul %79, %81, %cst_45 {dimension_numbers = #tpu.dot_dimension_numbers<[1], [0], [0], [1], [0, 0, 1, 1], [], []>} : vector<288x8xf32>, vector<8x16xf32>, vector<288x16xf32> -> vector<288x16xf32>
    %83 = arith.addf %78, %82 : vector<288x16xf32>
    %84 = vector.extract_strided_slice %44 {offsets = [55, 0], sizes = [288, 8], strides = [1, 1]} : vector<360x8xf32> to vector<288x8xf32>
    %c8 = arith.constant 8 : index
    %c0_46 = arith.constant 0 : index
    %c0_47 = arith.constant 0 : index
    %85 = vector.load %arg7[%c8, %c0_46, %c0_47] : memref<9x8x16xf32, #tpu.memory_space<vmem>>, vector<1x8x16xf32>
    %86 = vector.shape_cast %85 : vector<1x8x16xf32> to vector<8x16xf32>
    %cst_48 = arith.constant dense<0.000000e+00> : vector<288x16xf32>
    %87 = tpu.matmul %84, %86, %cst_48 {dimension_numbers = #tpu.dot_dimension_numbers<[1], [0], [0], [1], [0, 0, 1, 1], [], []>} : vector<288x8xf32>, vector<8x16xf32>, vector<288x16xf32> -> vector<288x16xf32>
    %88 = arith.addf %83, %87 : vector<288x16xf32>
    %c0_49 = arith.constant 0 : index
    %c0_50 = arith.constant 0 : index
    %89 = vector.load %arg8[%c0_49, %c0_50] : memref<1x16xf32, #tpu.memory_space<vmem>>, vector<1x16xf32>
    %90 = vector.broadcast %89 : vector<1x16xf32> to vector<288x16xf32>
    %91 = arith.addf %88, %90 : vector<288x16xf32>
    %c0_51 = arith.constant 0 : index
    %c0_52 = arith.constant 0 : index
    %c0_53 = arith.constant 0 : index
    %92 = vector.load %arg9[%c0_51, %c0_52, %c0_53] : memref<1x1x16xf32, #tpu.memory_space<vmem>>, vector<1x1x16xf32>
    %93 = vector.shape_cast %92 : vector<1x1x16xf32> to vector<1x16xf32>
    %94 = vector.broadcast %93 : vector<1x16xf32> to vector<288x16xf32>
    %95 = arith.addf %91, %94 : vector<288x16xf32>
    %cst_54 = arith.constant 0.000000e+00 : f32
    %96 = vector.broadcast %cst_54 : f32 to vector<1x360x16xf32>
    %c0_55 = arith.constant 0 : index
    %c0_56 = arith.constant 0 : index
    %c0_57 = arith.constant 0 : index
    %97 = vector.load %arg10[%c0_55, %c0_56, %c0_57] : memref<1x360x16xf32, #tpu.memory_space<vmem>>, vector<1x360x16xf32>
    tpu.vector_store %arg10[%c0_55, %c0_56, %c0_57], %96 {strides = array<i32>} : memref<1x360x16xf32, #tpu.memory_space<vmem>>, vector<1x360x16xf32>,
    %c0_58 = arith.constant 0 : index
    %c36 = arith.constant 36 : index
    %c0_59 = arith.constant 0 : index
    %98 = vector.load %arg10[%c0_58, %c36, %c0_59] : memref<1x360x16xf32, #tpu.memory_space<vmem>>, vector<1x288x16xf32>
    %99 = vector.shape_cast %98 : vector<1x288x16xf32> to vector<288x16xf32>
    %100 = vector.shape_cast %95 : vector<288x16xf32> to vector<1x288x16xf32>
    tpu.vector_store %arg10[%c0_58, %c36, %c0_59], %100 {strides = array<i32>} : memref<1x360x16xf32, #tpu.memory_space<vmem>>, vector<1x288x16xf32>,
    return
  }
  func.func @transform_0(%arg0: i32) -> (i32, i32, i32) {
    %c0_i32 = arith.constant 0 : i32
    %c0_i32_0 = arith.constant 0 : i32
    %c0_i32_1 = arith.constant 0 : i32
    return %arg0, %c0_i32, %c0_i32_0 : i32, i32, i32
  }
  func.func @transform_1(%arg0: i32) -> (i32, i32) {
    %c0_i32 = arith.constant 0 : i32
    %c0_i32_0 = arith.constant 0 : i32
    %c0_i32_1 = arith.constant 0 : i32
    return %c0_i32, %c0_i32_0 : i32, i32
  }
  func.func @transform_2(%arg0: i32) -> (i32, i32) {
    %c0_i32 = arith.constant 0 : i32
    %c0_i32_0 = arith.constant 0 : i32
    %c0_i32_1 = arith.constant 0 : i32
    return %c0_i32, %c0_i32_0 : i32, i32
  }
  func.func @transform_3(%arg0: i32) -> (i32, i32) {
    %c0_i32 = arith.constant 0 : i32
    %c0_i32_0 = arith.constant 0 : i32
    %c0_i32_1 = arith.constant 0 : i32
    return %c0_i32, %c0_i32_0 : i32, i32
  }
  func.func @transform_4(%arg0: i32) -> (i32, i32) {
    %c0_i32 = arith.constant 0 : i32
    %c0_i32_0 = arith.constant 0 : i32
    %c0_i32_1 = arith.constant 0 : i32
    return %c0_i32, %c0_i32_0 : i32, i32
  }
  func.func @transform_5(%arg0: i32) -> (i32, i32) {
    %c0_i32 = arith.constant 0 : i32
    %c0_i32_0 = arith.constant 0 : i32
    %c0_i32_1 = arith.constant 0 : i32
    return %c0_i32, %c0_i32_0 : i32, i32
  }
  func.func @transform_6(%arg0: i32) -> (i32, i32, i32) {
    %c0_i32 = arith.constant 0 : i32
    %c0_i32_0 = arith.constant 0 : i32
    %c0_i32_1 = arith.constant 0 : i32
    %c0_i32_2 = arith.constant 0 : i32
    return %c0_i32, %c0_i32_0, %c0_i32_1 : i32, i32, i32
  }
  func.func @transform_7(%arg0: i32) -> (i32, i32) {
    %c0_i32 = arith.constant 0 : i32
    %c0_i32_0 = arith.constant 0 : i32
    %c0_i32_1 = arith.constant 0 : i32
    return %c0_i32, %c0_i32_0 : i32, i32
  }
  func.func @transform_8(%arg0: i32) -> (i32, i32, i32) {
    %c0_i32 = arith.constant 0 : i32
    %c0_i32_0 = arith.constant 0 : i32
    %c0_i32_1 = arith.constant 0 : i32
    return %arg0, %c0_i32, %c0_i32_0 : i32, i32, i32
  }
  func.func @transform_9(%arg0: i32) -> (i32, i32, i32) {
    %c0_i32 = arith.constant 0 : i32
    %c0_i32_0 = arith.constant 0 : i32
    %c0_i32_1 = arith.constant 0 : i32
    return %arg0, %c0_i32, %c0_i32_0 : i32, i32, i32
  }
}

</mosaic_0001>

<llo_original>
// kernel: tpu_custom_call.1
$region0: #{tpu_custom_call.1}
  #allocation0 [shape = 'u32[]', space=smem, size = 0x4, offset = 0x4, fixed_abs, tag = 'smem constant byte address 0x4 - core index']
  #allocation1 [shape = 'u32[144,128]{1,0:T(1,128)}', space=vmem, size = 0x12000, scoped, tag = 'internal scratch']
  %s0 = inlined_call_operand.hbm [shape: f32[2,360,8], index: 0, kind: input, shape index: {}]
  %s1 = inlined_call_operand.hbm [shape: f32[360,1], index: 1, kind: input, shape index: {}]
  %s2 = inlined_call_operand.hbm [shape: f32[1,8], index: 2, kind: input, shape index: {}]
  %s3 = inlined_call_operand.hbm [shape: f32[1,8], index: 3, kind: input, shape index: {}]
  %s4 = inlined_call_operand.hbm [shape: f32[8,4], index: 4, kind: input, shape index: {}]
  %s5 = inlined_call_operand.hbm [shape: f32[4,8], index: 5, kind: input, shape index: {}]
  %s6 = inlined_call_operand.hbm [shape: f32[9,8,16], index: 6, kind: input, shape index: {}]
  %s7 = inlined_call_operand.hbm [shape: f32[1,16], index: 7, kind: input, shape index: {}]
  %s8 = inlined_call_operand.hbm [shape: f32[2,1,16], index: 8, kind: input, shape index: {}]
  %s9 = inlined_call_operand.hbm [shape: f32[2,360,16], index: 9, kind: output, shape index: {}]
  %s10 = sld [smem:[#allocation0]]
  $region105: #{tpu_custom_call.1} parent=0
    _
  %s12 = ssub.s32 1, %s10
  %s13 = scalar_select 0, %s12, %s10
  $region1: #{tpu_custom_call.1} parent=0
    #allocation2 [shape = 'u8[368640]{0}', space=vmem, size = 0x5a000, scoped, tag = 'input window, operand 0']
    #allocation3 [shape = 's32[2]{0}', space=sflag, size = 0x8, scoped, tag = 'scoped memory for tpu_custom_call.1']
    #allocation4 [shape = 's32[2]{0}', space=sflag, size = 0x8, scoped, tag = 'scoped memory for tpu_custom_call.1']
    #allocation5 [shape = 'u8[184320]{0}', space=vmem, size = 0x2d000, scoped, tag = 'input window, operand 1, single buffered']
    #allocation6 [shape = 's32[1]{0}', space=sflag, size = 0x4, scoped, tag = 'scoped memory for tpu_custom_call.1']
    #allocation7 [shape = 'u8[512]{0}', space=vmem, size = 0x400, scoped, tag = 'input window, operand 2, single buffered']
    #allocation8 [shape = 'u8[512]{0}', space=vmem, size = 0x400, scoped, tag = 'input window, operand 3, single buffered']
    #allocation9 [shape = 's32[1]{0}', space=sflag, size = 0x4, scoped, tag = 'scoped memory for tpu_custom_call.1']
    #allocation10 [shape = 'u8[4096]{0}', space=vmem, size = 0x1000, scoped, tag = 'input window, operand 4, single buffered']
    #allocation11 [shape = 'u8[2048]{0}', space=vmem, size = 0x800, scoped, tag = 'input window, operand 5, single buffered']
    #allocation12 [shape = 's32[1]{0}', space=sflag, size = 0x4, scoped, tag = 'scoped memory for tpu_custom_call.1']
    #allocation13 [shape = 'u8[36864]{0}', space=vmem, size = 0x9000, scoped, tag = 'input window, operand 6, single buffered']
    #allocation14 [shape = 'u8[512]{0}', space=vmem, size = 0x400, scoped, tag = 'input window, operand 7, single buffered']
    #allocation15 [shape = 's32[1]{0}', space=sflag, size = 0x4, scoped, tag = 'scoped memory for tpu_custom_call.1']
    #allocation16 [shape = 'u8[1024]{0}', space=vmem, size = 0x400, scoped, tag = 'input window, operand 8']
    #allocation17 [shape = 'u8[368640]{0}', space=vmem, size = 0x5a000, scoped, tag = 'output window, operand 0']
    %14 = vsyncpa [#allocation3], 0
    %s15 = scalar_lea.sflag [#allocation3], 1
    %16 = vsyncpa %s15, 0
    %17 = vsyncpa [#allocation6], 0
    %18 = vsyncpa [#allocation9], 0
    %19 = vsyncpa [#allocation12], 0
    %20 = vsyncpa [#allocation15], 0
    %21 = vsyncpa [#allocation4], 0
    %s22 = scalar_lea.sflag [#allocation4], 1
    %23 = vsyncpa %s22, 0
    loop: start=0, step=1, limit=4
    $region2: #{tpu_custom_call.1} parent=1 // loop_pre_header
      _
    $region3: #{tpu_custom_call.1} parent=1 // loop_header
      %s25 = sphi 0, %s29
      %p26 = scmp.ge.s32.totalorder %s25, 4
      %s35 = sphi 0, %s37
      %s38 = sphi 0, %s35
      %s39 = sphi 0, %s38
      %s55 = sphi 0, %s39
      %s59 = sphi 0, %s59
      %s61 = sphi 0, %s59
      %s62 = sphi 0, %s61
      %s76 = sphi 0, %s62
      %s80 = sphi 0, %s80
      %s82 = sphi 0, %s80
      %s83 = sphi 0, %s82
      %s97 = sphi 0, %s83
      %s101 = sphi 0, %s101
      %s103 = sphi 0, %s101
      %s104 = sphi 0, %s103
      %s118 = sphi 0, %s104
      %s122 = sphi 0, %s122
      %s124 = sphi 0, %s122
      %s125 = sphi 0, %s124
      %s139 = sphi 0, %s125
      %s143 = sphi 0, %s143
      %s145 = sphi 0, %s143
      %s146 = sphi 0, %s145
      %s160 = sphi 0, %s146
      %s164 = sphi 0, %s164
      %s166 = sphi 0, %s164
      %s167 = sphi 0, %s166
      %s181 = sphi 0, %s167
      %s185 = sphi 0, %s185
      %s187 = sphi 0, %s185
      %s188 = sphi 0, %s187
      %s202 = sphi 0, %s188
      %s208 = sphi 0, %s210
      %s211 = sphi 0, %s208
      %s212 = sphi 0, %s211
      %s228 = sphi 0, %s212
      %s234 = sphi 0, %s236
      %s237 = sphi 0, %s234
      %s238 = sphi 0, %s237
      %s254 = sphi 0, %s238
    $region4: #{tpu_custom_call.1} parent=1 // loop_header_branch
      %28 = sbr.rel (%p26) target = $region8
    $region5: #{tpu_custom_call.1} parent=1 // loop_body
      %s30 = ssub.s32 %s25, 1
      %s31 = ssub.s32 %s25, 2
      %s32 = sadd.s32 %s25, 1
      %s33 = ssub.s32 %s25, %s32
      %p34 = scmp.eq.s32.totalorder %s33, 0
      %s36 = sadd.s32 %s35, 1
      %s37 = scalar_select %p34, %s35, %s36
      %p40 = pneg %p34
      %p41 = scmp.eq.s32.totalorder %s25, 1
      %p42 = por %p40, %p41
      %p43 = scmp.ne.s32.totalorder %s35, %s38
      %p44 = scmp.eq.s32.totalorder %s25, 0
      %p45 = por %p43, %p44
      %p46 = scmp.ne.s32.totalorder %s35, %s38
      %p47 = scmp.eq.s32.totalorder %s30, 1
      %p48 = por %p46, %p47
      %p49 = scmp.ne.s32.totalorder %s38, %s39
      %p50 = scmp.eq.s32.totalorder %s30, 0
      %p51 = por %p49, %p50
      %p52 = scmp.ne.s32.totalorder %s38, %s39
      %p53 = scmp.eq.s32.totalorder %s31, 1
      %p54 = por %p52, %p53
      %p56 = scmp.ne.s32.totalorder %s39, %s55
      %p57 = scmp.eq.s32.totalorder %s31, 0
      %p58 = por %p56, %p57
      %s60 = sadd.s32 %s59, 1
      %p63 = scmp.eq.s32.totalorder %s25, 1
      %p64 = scmp.ne.s32.totalorder %s59, %s61
      %p65 = scmp.eq.s32.totalorder %s25, 0
      %p66 = por %p64, %p65
      %p67 = scmp.ne.s32.totalorder %s59, %s61
      %p68 = scmp.eq.s32.totalorder %s30, 1
      %p69 = por %p67, %p68
      %p70 = scmp.ne.s32.totalorder %s61, %s62
      %p71 = scmp.eq.s32.totalorder %s30, 0
      %p72 = por %p70, %p71
      %p73 = scmp.ne.s32.totalorder %s61, %s62
      %p74 = scmp.eq.s32.totalorder %s31, 1
      %p75 = por %p73, %p74
      %p77 = scmp.ne.s32.totalorder %s62, %s76
      %p78 = scmp.eq.s32.totalorder %s31, 0
      %p79 = por %p77, %p78
      %s81 = sadd.s32 %s80, 1
      %p84 = scmp.eq.s32.totalorder %s25, 1
      %p85 = scmp.ne.s32.totalorder %s80, %s82
      %p86 = scmp.eq.s32.totalorder %s25, 0
      %p87 = por %p85, %p86
      %p88 = scmp.ne.s32.totalorder %s80, %s82
      %p89 = scmp.eq.s32.totalorder %s30, 1
      %p90 = por %p88, %p89
      %p91 = scmp.ne.s32.totalorder %s82, %s83
      %p92 = scmp.eq.s32.totalorder %s30, 0
      %p93 = por %p91, %p92
      %p94 = scmp.ne.s32.totalorder %s82, %s83
      %p95 = scmp.eq.s32.totalorder %s31, 1
      %p96 = por %p94, %p95
      %p98 = scmp.ne.s32.totalorder %s83, %s97
      %p99 = scmp.eq.s32.totalorder %s31, 0
      %p100 = por %p98, %p99
      %s102 = sadd.s32 %s101, 1
      %p105 = scmp.eq.s32.totalorder %s25, 1
      %p106 = scmp.ne.s32.totalorder %s101, %s103
      %p107 = scmp.eq.s32.totalorder %s25, 0
      %p108 = por %p106, %p107
      %p109 = scmp.ne.s32.totalorder %s101, %s103
      %p110 = scmp.eq.s32.totalorder %s30, 1
      %p111 = por %p109, %p110
      %p112 = scmp.ne.s32.totalorder %s103, %s104
      %p113 = scmp.eq.s32.totalorder %s30, 0
      %p114 = por %p112, %p113
      %p115 = scmp.ne.s32.totalorder %s103, %s104
      %p116 = scmp.eq.s32.totalorder %s31, 1
      %p117 = por %p115, %p116
      %p119 = scmp.ne.s32.totalorder %s104, %s118
      %p120 = scmp.eq.s32.totalorder %s31, 0
      %p121 = por %p119, %p120
      %s123 = sadd.s32 %s122, 1
      %p126 = scmp.eq.s32.totalorder %s25, 1
      %p127 = scmp.ne.s32.totalorder %s122, %s124
      %p128 = scmp.eq.s32.totalorder %s25, 0
      %p129 = por %p127, %p128
      %p130 = scmp.ne.s32.totalorder %s122, %s124
      %p131 = scmp.eq.s32.totalorder %s30, 1
      %p132 = por %p130, %p131
      %p133 = scmp.ne.s32.totalorder %s124, %s125
      %p134 = scmp.eq.s32.totalorder %s30, 0
      %p135 = por %p133, %p134
      %p136 = scmp.ne.s32.totalorder %s124, %s125
      %p137 = scmp.eq.s32.totalorder %s31, 1
      %p138 = por %p136, %p137
      %p140 = scmp.ne.s32.totalorder %s125, %s139
      %p141 = scmp.eq.s32.totalorder %s31, 0
      %p142 = por %p140, %p141
      %s144 = sadd.s32 %s143, 1
      %p147 = scmp.eq.s32.totalorder %s25, 1
      %p148 = scmp.ne.s32.totalorder %s143, %s145
      %p149 = scmp.eq.s32.totalorder %s25, 0
      %p150 = por %p148, %p149
      %p151 = scmp.ne.s32.totalorder %s143, %s145
      %p152 = scmp.eq.s32.totalorder %s30, 1
      %p153 = por %p151, %p152
      %p154 = scmp.ne.s32.totalorder %s145, %s146
      %p155 = scmp.eq.s32.totalorder %s30, 0
      %p156 = por %p154, %p155
      %p157 = scmp.ne.s32.totalorder %s145, %s146
      %p158 = scmp.eq.s32.totalorder %s31, 1
      %p159 = por %p157, %p158
      %p161 = scmp.ne.s32.totalorder %s146, %s160
      %p162 = scmp.eq.s32.totalorder %s31, 0
      %p163 = por %p161, %p162
      %s165 = sadd.s32 %s164, 1
      %p168 = scmp.eq.s32.totalorder %s25, 1
      %p169 = scmp.ne.s32.totalorder %s164, %s166
      %p170 = scmp.eq.s32.totalorder %s25, 0
      %p171 = por %p169, %p170
      %p172 = scmp.ne.s32.totalorder %s164, %s166
      %p173 = scmp.eq.s32.totalorder %s30, 1
      %p174 = por %p172, %p173
      %p175 = scmp.ne.s32.totalorder %s166, %s167
      %p176 = scmp.eq.s32.totalorder %s30, 0
      %p177 = por %p175, %p176
      %p178 = scmp.ne.s32.totalorder %s166, %s167
      %p179 = scmp.eq.s32.totalorder %s31, 1
      %p180 = por %p178, %p179
      %p182 = scmp.ne.s32.totalorder %s167, %s181
      %p183 = scmp.eq.s32.totalorder %s31, 0
      %p184 = por %p182, %p183
      %s186 = sadd.s32 %s185, 1
      %p189 = scmp.eq.s32.totalorder %s25, 1
      %p190 = scmp.ne.s32.totalorder %s185, %s187
      %p191 = scmp.eq.s32.totalorder %s25, 0
      %p192 = por %p190, %p191
      %p193 = scmp.ne.s32.totalorder %s185, %s187
      %p194 = scmp.eq.s32.totalorder %s30, 1
      %p195 = por %p193, %p194
      %p196 = scmp.ne.s32.totalorder %s187, %s188
      %p197 = scmp.eq.s32.totalorder %s30, 0
      %p198 = por %p196, %p197
      %p199 = scmp.ne.s32.totalorder %s187, %s188
      %p200 = scmp.eq.s32.totalorder %s31, 1
      %p201 = por %p199, %p200
      %p203 = scmp.ne.s32.totalorder %s188, %s202
      %p204 = scmp.eq.s32.totalorder %s31, 0
      %p205 = por %p203, %p204
      %s206 = ssub.s32 %s25, %s32
      %p207 = scmp.eq.s32.totalorder %s206, 0
      %s209 = sadd.s32 %s208, 1
      %s210 = scalar_select %p207, %s208, %s209
      %p213 = pneg %p207
      %p214 = scmp.eq.s32.totalorder %s25, 1
      %p215 = por %p213, %p214
      %p216 = scmp.ne.s32.totalorder %s208, %s211
      %p217 = scmp.eq.s32.totalorder %s25, 0
      %p218 = por %p216, %p217
      %p219 = scmp.ne.s32.totalorder %s208, %s211
      %p220 = scmp.eq.s32.totalorder %s30, 1
      %p221 = por %p219, %p220
      %p222 = scmp.ne.s32.totalorder %s211, %s212
      %p223 = scmp.eq.s32.totalorder %s30, 0
      %p224 = por %p222, %p223
      %p225 = scmp.ne.s32.totalorder %s211, %s212
      %p226 = scmp.eq.s32.totalorder %s31, 1
      %p227 = por %p225, %p226
      %p229 = scmp.ne.s32.totalorder %s212, %s228
      %p230 = scmp.eq.s32.totalorder %s31, 0
      %p231 = por %p229, %p230
      %s232 = ssub.s32 %s25, %s32
      %p233 = scmp.eq.s32.totalorder %s232, 0
      %s235 = sadd.s32 %s234, 1
      %s236 = scalar_select %p233, %s234, %s235
      %p239 = pneg %p233
      %p240 = scmp.eq.s32.totalorder %s25, 1
      %p241 = por %p239, %p240
      %p242 = scmp.ne.s32.totalorder %s234, %s237
      %p243 = scmp.eq.s32.totalorder %s25, 0
      %p244 = por %p242, %p243
      %p245 = scmp.ne.s32.totalorder %s234, %s237
      %p246 = scmp.eq.s32.totalorder %s30, 1
      %p247 = por %p245, %p246
      %p248 = scmp.ne.s32.totalorder %s237, %s238
      %p249 = scmp.eq.s32.totalorder %s30, 0
      %p250 = por %p248, %p249
      %p251 = scmp.ne.s32.totalorder %s237, %s238
      %p252 = scmp.eq.s32.totalorder %s31, 1
      %p253 = por %p251, %p252
      %p255 = scmp.ne.s32.totalorder %s238, %s254
      %p256 = scmp.eq.s32.totalorder %s31, 0
      %p257 = por %p255, %p256
      %p258 = scmp.le.s32.totalorder 1, %s25
      %p259 = scmp.lt.s32.totalorder %s25, 3
      %p260 = pnand %p258, %p259
      %p261 = pneg %p260
      // Predicated region
      $region9: #{tpu_custom_call.1} parent=5 // pred_check
        _
      $region10: #{tpu_custom_call.1} parent=5 // pred_check_branch
        %263 = sbr.rel (%p260) target = $region12
      $region11: #{tpu_custom_call.1} parent=5 // pred_region
        %s264 = ssub.s32 %s25, 1
        // Predicated region
        $region13: #{tpu_custom_call.1} parent=11 // pred_check
          %p265 = pneg %p72
        $region14: #{tpu_custom_call.1} parent=11 // pred_check_branch
          %267 = sbr.rel (%p265) target = $region16
        $region15: #{tpu_custom_call.1} parent=11 // pred_region
          %s269 = ssub.s32 5760, 5760
          %270 = vsyncadd [#allocation6], %s269
          %s271 = sshll.u32 [#allocation5], 4
          %s272 = int_to_ptr.vmem [resolvable:$true] %s271
          %277 = dma.hbm_to_vmem [thread:$0]  %s1, 5760, %s272, [#allocation6], 128, 128, 8
        $region16: #{tpu_custom_call.1} parent=11 // pred_fallthru
          _
        // Predicated region
        $region17: #{tpu_custom_call.1} parent=11 // pred_check
          %p278 = pneg %p93
        $region18: #{tpu_custom_call.1} parent=11 // pred_check_branch
          %280 = sbr.rel (%p278) target = $region20
        $region19: #{tpu_custom_call.1} parent=11 // pred_region
          %s282 = ssub.s32 16, 16
          %283 = vsyncadd [#allocation6], %s282
          %s285 = sshll.u32 [#allocation7], 4
          %s286 = int_to_ptr.vmem [resolvable:$true] %s285
          %288 = dma.hbm_to_vmem [thread:$0]  %s2, 16, %s286, [#allocation6]
        $region20: #{tpu_custom_call.1} parent=11 // pred_fallthru
          _
        // Predicated region
        $region21: #{tpu_custom_call.1} parent=11 // pred_check
          %p289 = pneg %p114
        $region22: #{tpu_custom_call.1} parent=11 // pred_check_branch
          %291 = sbr.rel (%p289) target = $region24
        $region23: #{tpu_custom_call.1} parent=11 // pred_region
          %s293 = ssub.s32 16, 16
          %294 = vsyncadd [#allocation9], %s293
          %s296 = sshll.u32 [#allocation8], 4
          %s297 = int_to_ptr.vmem [resolvable:$true] %s296
          %299 = dma.hbm_to_vmem [thread:$0]  %s3, 16, %s297, [#allocation9]
        $region24: #{tpu_custom_call.1} parent=11 // pred_fallthru
          _
        // Predicated region
        $region25: #{tpu_custom_call.1} parent=11 // pred_check
          %p300 = pneg %p135
        $region26: #{tpu_custom_call.1} parent=11 // pred_check_branch
          %302 = sbr.rel (%p300) target = $region28
        $region27: #{tpu_custom_call.1} parent=11 // pred_region
          %s304 = ssub.s32 128, 128
          %305 = vsyncadd [#allocation9], %s304
          %s307 = sshll.u32 [#allocation10], 4
          %s308 = int_to_ptr.vmem [resolvable:$true] %s307
          %310 = dma.hbm_to_vmem [thread:$0]  %s4, 128, %s308, [#allocation9]
        $region28: #{tpu_custom_call.1} parent=11 // pred_fallthru
          _
        // Predicated region
        $region29: #{tpu_custom_call.1} parent=11 // pred_check
          %p311 = pneg %p156
        $region30: #{tpu_custom_call.1} parent=11 // pred_check_branch
          %313 = sbr.rel (%p311) target = $region32
        $region31: #{tpu_custom_call.1} parent=11 // pred_region
          %s315 = ssub.s32 64, 64
          %316 = vsyncadd [#allocation12], %s315
          %s318 = sshll.u32 [#allocation11], 4
          %s319 = int_to_ptr.vmem [resolvable:$true] %s318
          %321 = dma.hbm_to_vmem [thread:$0]  %s5, 64, %s319, [#allocation12]
        $region32: #{tpu_custom_call.1} parent=11 // pred_fallthru
          _
        // Predicated region
        $region33: #{tpu_custom_call.1} parent=11 // pred_check
          %p322 = pneg %p177
        $region34: #{tpu_custom_call.1} parent=11 // pred_check_branch
          %324 = sbr.rel (%p322) target = $region36
        $region35: #{tpu_custom_call.1} parent=11 // pred_region
          %s326 = ssub.s32 1152, 1152
          %327 = vsyncadd [#allocation12], %s326
          %s328 = sshll.u32 [#allocation13], 4
          %s329 = int_to_ptr.vmem [resolvable:$true] %s328
          %334 = dma.hbm_to_vmem [thread:$0]  %s6, 1152, %s329, [#allocation12], 128, 128, 8
        $region36: #{tpu_custom_call.1} parent=11 // pred_fallthru
          _
        // Predicated region
        $region37: #{tpu_custom_call.1} parent=11 // pred_check
          %p335 = pneg %p198
        $region38: #{tpu_custom_call.1} parent=11 // pred_check_branch
          %337 = sbr.rel (%p335) target = $region40
        $region39: #{tpu_custom_call.1} parent=11 // pred_region
          %s339 = ssub.s32 16, 16
          %340 = vsyncadd [#allocation15], %s339
          %s342 = sshll.u32 [#allocation14], 4
          %s343 = int_to_ptr.vmem [resolvable:$true] %s342
          %345 = dma.hbm_to_vmem [thread:$0]  %s7, 16, %s343, [#allocation15]
        $region40: #{tpu_custom_call.1} parent=11 // pred_fallthru
          _
      $region12: #{tpu_custom_call.1} parent=5 // pred_fallthru
        _
      %p346 = scmp.lt.s32.totalorder %s25, 2
      // Predicated region
      $region41: #{tpu_custom_call.1} parent=5 // pred_check
        %p347 = pneg %p346
      $region42: #{tpu_custom_call.1} parent=5 // pred_check_branch
        %349 = sbr.rel (%p347) target = $region44
      $region43: #{tpu_custom_call.1} parent=5 // pred_region
        // Predicated region
        $region45: #{tpu_custom_call.1} parent=43 // pred_check
          %p350 = pneg %p45
        $region46: #{tpu_custom_call.1} parent=43 // pred_check_branch
          %352 = sbr.rel (%p350) target = $region48
        $region47: #{tpu_custom_call.1} parent=43 // pred_region
          %s353 = sand.u32 %s25, 1
          %s354 = scalar_lea.sflag [#allocation3], %s353
          %s355 = sand.u32 %s35, 1
          %s356 = smul.addr %s355, 360
          %s357 = scalar_lea.vmem [#allocation2], %s356
          %s359 = ssub.s32 5760, 5760
          %360 = vsyncadd %s354, %s359
          %s361 = smul.addr %s25, 45
          %s362 = smul.addr %s361, 128
          %s363 = scalar_lea.hbm %s0, %s362
          %s364 = sshll.u32 %s357, 4
          %s365 = int_to_ptr.vmem [resolvable:$true] %s364
          %370 = dma.hbm_to_vmem [thread:$0]  %s363, 5760, %s365, %s354, 128, 128, 8
        $region48: #{tpu_custom_call.1} parent=43 // pred_fallthru
          _
        // Predicated region
        $region49: #{tpu_custom_call.1} parent=43 // pred_check
          %p371 = pneg %p218
        $region50: #{tpu_custom_call.1} parent=43 // pred_check_branch
          %373 = sbr.rel (%p371) target = $region52
        $region51: #{tpu_custom_call.1} parent=43 // pred_region
          %s374 = sand.u32 %s25, 1
          %s375 = scalar_lea.sflag [#allocation3], %s374
          %s376 = sand.u32 %s208, 1
          %s377 = scalar_lea.vmem [#allocation16], %s376
          %s379 = ssub.s32 16, 16
          %380 = vsyncadd %s375, %s379
          %s381 = smul.addr %s25, 16
          %s382 = scalar_lea.hbm %s8, %s381
          %s384 = sshll.u32 %s377, 4
          %s385 = int_to_ptr.vmem [resolvable:$true] %s384
          %387 = dma.hbm_to_vmem [thread:$0]  %s382, 16, %s385, %s375
        $region52: #{tpu_custom_call.1} parent=43 // pred_fallthru
          _
      $region44: #{tpu_custom_call.1} parent=5 // pred_fallthru
        _
      %p388 = scmp.le.s32.totalorder 1, %s25
      %p389 = scmp.lt.s32.totalorder %s25, 3
      %p390 = pnand %p388, %p389
      %p391 = pneg %p390
      // Predicated region
      $region53: #{tpu_custom_call.1} parent=5 // pred_check
        _
      $region54: #{tpu_custom_call.1} parent=5 // pred_check_branch
        %393 = sbr.rel (%p390) target = $region56
      $region55: #{tpu_custom_call.1} parent=5 // pred_region
        %s394 = ssub.s32 %s25, 1
        %s395 = sand.u32 %s30, 1
        %s396 = scalar_lea.sflag [#allocation3], %s395
        %s397 = sand.u32 %s38, 1
        %s398 = smul.addr %s397, 360
        %s399 = scalar_lea.vmem [#allocation2], %s398
        // Predicated region
        $region57: #{tpu_custom_call.1} parent=55 // pred_check
          %p400 = pneg %p51
        $region58: #{tpu_custom_call.1} parent=55 // pred_check_branch
          %402 = sbr.rel (%p400) target = $region60
        $region59: #{tpu_custom_call.1} parent=55 // pred_region
          %403 = dma.done %s396, 5760
        $region60: #{tpu_custom_call.1} parent=55 // pred_fallthru
          _
        // Predicated region
        $region61: #{tpu_custom_call.1} parent=55 // pred_check
          %p404 = pneg %p72
        $region62: #{tpu_custom_call.1} parent=55 // pred_check_branch
          %406 = sbr.rel (%p404) target = $region64
        $region63: #{tpu_custom_call.1} parent=55 // pred_region
          %407 = dma.done [#allocation6], 5760
        $region64: #{tpu_custom_call.1} parent=55 // pred_fallthru
          _
        // Predicated region
        $region65: #{tpu_custom_call.1} parent=55 // pred_check
          %p408 = pneg %p93
        $region66: #{tpu_custom_call.1} parent=55 // pred_check_branch
          %410 = sbr.rel (%p408) target = $region68
        $region67: #{tpu_custom_call.1} parent=55 // pred_region
          %411 = dma.done [#allocation6], 16
        $region68: #{tpu_custom_call.1} parent=55 // pred_fallthru
          _
        // Predicated region
        $region69: #{tpu_custom_call.1} parent=55 // pred_check
          %p412 = pneg %p114
        $region70: #{tpu_custom_call.1} parent=55 // pred_check_branch
          %414 = sbr.rel (%p412) target = $region72
        $region71: #{tpu_custom_call.1} parent=55 // pred_region
          %415 = dma.done [#allocation9], 16
        $region72: #{tpu_custom_call.1} parent=55 // pred_fallthru
          _
        // Predicated region
        $region73: #{tpu_custom_call.1} parent=55 // pred_check
          %p416 = pneg %p135
        $region74: #{tpu_custom_call.1} parent=55 // pred_check_branch
          %418 = sbr.rel (%p416) target = $region76
        $region75: #{tpu_custom_call.1} parent=55 // pred_region
          %419 = dma.done [#allocation9], 128
        $region76: #{tpu_custom_call.1} parent=55 // pred_fallthru
          _
        // Predicated region
        $region77: #{tpu_custom_call.1} parent=55 // pred_check
          %p420 = pneg %p156
        $region78: #{tpu_custom_call.1} parent=55 // pred_check_branch
          %422 = sbr.rel (%p420) target = $region80
        $region79: #{tpu_custom_call.1} parent=55 // pred_region
          %423 = dma.done [#allocation12], 64
        $region80: #{tpu_custom_call.1} parent=55 // pred_fallthru
          _
        // Predicated region
        $region81: #{tpu_custom_call.1} parent=55 // pred_check
          %p424 = pneg %p177
        $region82: #{tpu_custom_call.1} parent=55 // pred_check_branch
          %426 = sbr.rel (%p424) target = $region84
        $region83: #{tpu_custom_call.1} parent=55 // pred_region
          %427 = dma.done [#allocation12], 1152
        $region84: #{tpu_custom_call.1} parent=55 // pred_fallthru
          _
        // Predicated region
        $region85: #{tpu_custom_call.1} parent=55 // pred_check
          %p428 = pneg %p198
        $region86: #{tpu_custom_call.1} parent=55 // pred_check_branch
          %430 = sbr.rel (%p428) target = $region88
        $region87: #{tpu_custom_call.1} parent=55 // pred_region
          %431 = dma.done [#allocation15], 16
        $region88: #{tpu_custom_call.1} parent=55 // pred_fallthru
          _
        %s432 = sand.u32 %s30, 1
        %s433 = scalar_lea.sflag [#allocation3], %s432
        %s434 = sand.u32 %s211, 1
        %s435 = scalar_lea.vmem [#allocation16], %s434
        // Predicated region
        $region89: #{tpu_custom_call.1} parent=55 // pred_check
          %p436 = pneg %p224
        $region90: #{tpu_custom_call.1} parent=55 // pred_check_branch
          %438 = sbr.rel (%p436) target = $region92
        $region91: #{tpu_custom_call.1} parent=55 // pred_region
          %439 = dma.done %s433, 16
        $region92: #{tpu_custom_call.1} parent=55 // pred_fallthru
          _
        %s440 = sand.u32 %s30, 1
        %s441 = scalar_lea.sflag [#allocation3], %s440
        %s442 = sand.u32 %s38, 1
        %s443 = smul.addr %s442, 360
        %s444 = scalar_lea.vmem [#allocation2], %s443
        %p445 = pneg %p51
        %p446 = pneg %p48
        %p447 = pneg %p72
        %p448 = pneg %p69
        %p449 = pneg %p93
        %p450 = pneg %p90
        %p451 = pneg %p114
        %p452 = pneg %p111
        %p453 = pneg %p135
        %p454 = pneg %p132
        %p455 = pneg %p156
        %p456 = pneg %p153
        %p457 = pneg %p177
        %p458 = pneg %p174
        %p459 = pneg %p198
        %p460 = pneg %p195
        %s461 = sand.u32 %s30, 1
        %s462 = scalar_lea.sflag [#allocation3], %s461
        %s463 = sand.u32 %s211, 1
        %s464 = scalar_lea.vmem [#allocation16], %s463
        %p465 = pneg %p224
        %p466 = pneg %p221
        %p467 = pneg %p250
        %p468 = pneg %p247
        %s469 = sand.u32 %s237, 1
        %s470 = scalar_lea.sflag [#allocation4], %s469
        %s471 = sand.u32 %s237, 1
        %s472 = smul.addr %s471, 360
        %s473 = scalar_lea.vmem [#allocation17], %s472
        %v474 = vld [vmem:[%s399] sm:$0xff]
        %v475 = vld [vmem:[%s399 + $0x8] sm:$0xff]
        %v476 = vld [vmem:[%s399 + $0x10] sm:$0xff]
        %v477 = vld [vmem:[%s399 + $0x18] sm:$0xff]
        %v478 = vld [vmem:[%s399 + $0x20] sm:$0xff]
        %v479 = vld [vmem:[%s399 + $0x28] sm:$0xff]
        %v480 = vld [vmem:[%s399 + $0x30] sm:$0xff]
        %v481 = vld [vmem:[%s399 + $0x38] sm:$0xff]
        %v482 = vld [vmem:[%s399 + $0x40] sm:$0xff]
        %v483 = vld [vmem:[%s399 + $0x48] sm:$0xff]
        %v484 = vld [vmem:[%s399 + $0x50] sm:$0xff]
        %v485 = vld [vmem:[%s399 + $0x58] sm:$0xff]
        %v486 = vld [vmem:[%s399 + $0x60] sm:$0xff]
        %v487 = vld [vmem:[%s399 + $0x68] sm:$0xff]
        %v488 = vld [vmem:[%s399 + $0x70] sm:$0xff]
        %v489 = vld [vmem:[%s399 + $0x78] sm:$0xff]
        %v490 = vld [vmem:[%s399 + $0x80] sm:$0xff]
        %v491 = vld [vmem:[%s399 + $0x88] sm:$0xff]
        %v492 = vld [vmem:[%s399 + $0x90] sm:$0xff]
        %v493 = vld [vmem:[%s399 + $0x98] sm:$0xff]
        %v494 = vld [vmem:[%s399 + $0xa0] sm:$0xff]
        %v495 = vld [vmem:[%s399 + $0xa8] sm:$0xff]
        %v496 = vld [vmem:[%s399 + $0xb0] sm:$0xff]
        %v497 = vld [vmem:[%s399 + $0xb8] sm:$0xff]
        %v498 = vld [vmem:[%s399 + $0xc0] sm:$0xff]
        %v499 = vld [vmem:[%s399 + $0xc8] sm:$0xff]
        %v500 = vld [vmem:[%s399 + $0xd0] sm:$0xff]
        %v501 = vld [vmem:[%s399 + $0xd8] sm:$0xff]
        %v502 = vld [vmem:[%s399 + $0xe0] sm:$0xff]
        %v503 = vld [vmem:[%s399 + $0xe8] sm:$0xff]
        %v504 = vld [vmem:[%s399 + $0xf0] sm:$0xff]
        %v505 = vld [vmem:[%s399 + $0xf8] sm:$0xff]
        %v506 = vld [vmem:[%s399 + $0x100] sm:$0xff]
        %v507 = vld [vmem:[%s399 + $0x108] sm:$0xff]
        %v508 = vld [vmem:[%s399 + $0x110] sm:$0xff]
        %v509 = vld [vmem:[%s399 + $0x118] sm:$0xff]
        %v510 = vld [vmem:[%s399 + $0x120] sm:$0xff]
        %v511 = vld [vmem:[%s399 + $0x128] sm:$0xff]
        %v512 = vld [vmem:[%s399 + $0x130] sm:$0xff]
        %v513 = vld [vmem:[%s399 + $0x138] sm:$0xff]
        %v514 = vld [vmem:[%s399 + $0x140] sm:$0xff]
        %v515 = vld [vmem:[%s399 + $0x148] sm:$0xff]
        %v516 = vld [vmem:[%s399 + $0x150] sm:$0xff]
        %v517 = vld [vmem:[%s399 + $0x158] sm:$0xff]
        %v518 = vld [vmem:[%s399 + $0x160] sm:$0xff]
        %v519 = vld [vmem:[#allocation5] sm:$0xff]
        %v520 = vld [vmem:[#allocation5 + $0x8] sm:$0xff]
        %v521 = vld [vmem:[#allocation5 + $0x10] sm:$0xff]
        %v522 = vld [vmem:[#allocation5 + $0x18] sm:$0xff]
        %v523 = vld [vmem:[#allocation5 + $0x20] sm:$0xff]
        %v524 = vld [vmem:[#allocation5 + $0x28] sm:$0xff]
        %v525 = vld [vmem:[#allocation5 + $0x30] sm:$0xff]
        %v526 = vld [vmem:[#allocation5 + $0x38] sm:$0xff]
        %v527 = vld [vmem:[#allocation5 + $0x40] sm:$0xff]
        %v528 = vld [vmem:[#allocation5 + $0x48] sm:$0xff]
        %v529 = vld [vmem:[#allocation5 + $0x50] sm:$0xff]
        %v530 = vld [vmem:[#allocation5 + $0x58] sm:$0xff]
        %v531 = vld [vmem:[#allocation5 + $0x60] sm:$0xff]
        %v532 = vld [vmem:[#allocation5 + $0x68] sm:$0xff]
        %v533 = vld [vmem:[#allocation5 + $0x70] sm:$0xff]
        %v534 = vld [vmem:[#allocation5 + $0x78] sm:$0xff]
        %v535 = vld [vmem:[#allocation5 + $0x80] sm:$0xff]
        %v536 = vld [vmem:[#allocation5 + $0x88] sm:$0xff]
        %v537 = vld [vmem:[#allocation5 + $0x90] sm:$0xff]
        %v538 = vld [vmem:[#allocation5 + $0x98] sm:$0xff]
        %v539 = vld [vmem:[#allocation5 + $0xa0] sm:$0xff]
        %v540 = vld [vmem:[#allocation5 + $0xa8] sm:$0xff]
        %v541 = vld [vmem:[#allocation5 + $0xb0] sm:$0xff]
        %v542 = vld [vmem:[#allocation5 + $0xb8] sm:$0xff]
        %v543 = vld [vmem:[#allocation5 + $0xc0] sm:$0xff]
        %v544 = vld [vmem:[#allocation5 + $0xc8] sm:$0xff]
        %v545 = vld [vmem:[#allocation5 + $0xd0] sm:$0xff]
        %v546 = vld [vmem:[#allocation5 + $0xd8] sm:$0xff]
        %v547 = vld [vmem:[#allocation5 + $0xe0] sm:$0xff]
        %v548 = vld [vmem:[#allocation5 + $0xe8] sm:$0xff]
        %v549 = vld [vmem:[#allocation5 + $0xf0] sm:$0xff]
        %v550 = vld [vmem:[#allocation5 + $0xf8] sm:$0xff]
        %v551 = vld [vmem:[#allocation5 + $0x100] sm:$0xff]
        %v552 = vld [vmem:[#allocation5 + $0x108] sm:$0xff]
        %v553 = vld [vmem:[#allocation5 + $0x110] sm:$0xff]
        %v554 = vld [vmem:[#allocation5 + $0x118] sm:$0xff]
        %v555 = vld [vmem:[#allocation5 + $0x120] sm:$0xff]
        %v556 = vld [vmem:[#allocation5 + $0x128] sm:$0xff]
        %v557 = vld [vmem:[#allocation5 + $0x130] sm:$0xff]
        %v558 = vld [vmem:[#allocation5 + $0x138] sm:$0xff]
        %v559 = vld [vmem:[#allocation5 + $0x140] sm:$0xff]
        %v560 = vld [vmem:[#allocation5 + $0x148] sm:$0xff]
        %v561 = vld [vmem:[#allocation5 + $0x150] sm:$0xff]
        %v562 = vld [vmem:[#allocation5 + $0x158] sm:$0xff]
        %v563 = vld [vmem:[#allocation5 + $0x160] sm:$0xff]
        %v564 = vld [vmem:[#allocation7] sm:$0x1]
        %v565 = vld [vmem:[#allocation8] sm:$0x1]
        %v566 = vld [vmem:[#allocation10] sm:$0xff]
        %v567 = vld [vmem:[#allocation11] sm:$0xf]
        %569 = vset.pattern.permute.xlu0 0
        %570 = vperm.xlu0 %569, %v519
        %v571 = vpop.permute.xlu0 %570
        %574 = vset.pattern.permute.xlu0 0
        %575 = vperm.xlu0 %574, %v520
        %v576 = vpop.permute.xlu0 %575
        %579 = vset.pattern.permute.xlu0 0
        %580 = vperm.xlu0 %579, %v521
        %v581 = vpop.permute.xlu0 %580
        %584 = vset.pattern.permute.xlu0 0
        %585 = vperm.xlu0 %584, %v522
        %v586 = vpop.permute.xlu0 %585
        %589 = vset.pattern.permute.xlu0 0
        %590 = vperm.xlu0 %589, %v523
        %v591 = vpop.permute.xlu0 %590
        %594 = vset.pattern.permute.xlu0 0
        %595 = vperm.xlu0 %594, %v524
        %v596 = vpop.permute.xlu0 %595
        %599 = vset.pattern.permute.xlu0 0
        %600 = vperm.xlu0 %599, %v525
        %v601 = vpop.permute.xlu0 %600
        %604 = vset.pattern.permute.xlu0 0
        %605 = vperm.xlu0 %604, %v526
        %v606 = vpop.permute.xlu0 %605
        %609 = vset.pattern.permute.xlu0 0
        %610 = vperm.xlu0 %609, %v527
        %v611 = vpop.permute.xlu0 %610
        %614 = vset.pattern.permute.xlu0 0
        %615 = vperm.xlu0 %614, %v528
        %v616 = vpop.permute.xlu0 %615
        %619 = vset.pattern.permute.xlu0 0
        %620 = vperm.xlu0 %619, %v529
        %v621 = vpop.permute.xlu0 %620
        %624 = vset.pattern.permute.xlu0 0
        %625 = vperm.xlu0 %624, %v530
        %v626 = vpop.permute.xlu0 %625
        %629 = vset.pattern.permute.xlu0 0
        %630 = vperm.xlu0 %629, %v531
        %v631 = vpop.permute.xlu0 %630
        %634 = vset.pattern.permute.xlu0 0
        %635 = vperm.xlu0 %634, %v532
        %v636 = vpop.permute.xlu0 %635
        %639 = vset.pattern.permute.xlu0 0
        %640 = vperm.xlu0 %639, %v533
        %v641 = vpop.permute.xlu0 %640
        %644 = vset.pattern.permute.xlu0 0
        %645 = vperm.xlu0 %644, %v534
        %v646 = vpop.permute.xlu0 %645
        %649 = vset.pattern.permute.xlu0 0
        %650 = vperm.xlu0 %649, %v535
        %v651 = vpop.permute.xlu0 %650
        %654 = vset.pattern.permute.xlu0 0
        %655 = vperm.xlu0 %654, %v536
        %v656 = vpop.permute.xlu0 %655
        %659 = vset.pattern.permute.xlu0 0
        %660 = vperm.xlu0 %659, %v537
        %v661 = vpop.permute.xlu0 %660
        %664 = vset.pattern.permute.xlu0 0
        %665 = vperm.xlu0 %664, %v538
        %v666 = vpop.permute.xlu0 %665
        %669 = vset.pattern.permute.xlu0 0
        %670 = vperm.xlu0 %669, %v539
        %v671 = vpop.permute.xlu0 %670
        %674 = vset.pattern.permute.xlu0 0
        %675 = vperm.xlu0 %674, %v540
        %v676 = vpop.permute.xlu0 %675
        %679 = vset.pattern.permute.xlu0 0
        %680 = vperm.xlu0 %679, %v541
        %v681 = vpop.permute.xlu0 %680
        %684 = vset.pattern.permute.xlu0 0
        %685 = vperm.xlu0 %684, %v542
        %v686 = vpop.permute.xlu0 %685
        %689 = vset.pattern.permute.xlu0 0
        %690 = vperm.xlu0 %689, %v543
        %v691 = vpop.permute.xlu0 %690
        %694 = vset.pattern.permute.xlu0 0
        %695 = vperm.xlu0 %694, %v544
        %v696 = vpop.permute.xlu0 %695
        %699 = vset.pattern.permute.xlu0 0
        %700 = vperm.xlu0 %699, %v545
        %v701 = vpop.permute.xlu0 %700
        %704 = vset.pattern.permute.xlu0 0
        %705 = vperm.xlu0 %704, %v546
        %v706 = vpop.permute.xlu0 %705
        %709 = vset.pattern.permute.xlu0 0
        %710 = vperm.xlu0 %709, %v547
        %v711 = vpop.permute.xlu0 %710
        %714 = vset.pattern.permute.xlu0 0
        %715 = vperm.xlu0 %714, %v548
        %v716 = vpop.permute.xlu0 %715
        %719 = vset.pattern.permute.xlu0 0
        %720 = vperm.xlu0 %719, %v549
        %v721 = vpop.permute.xlu0 %720
        %724 = vset.pattern.permute.xlu0 0
        %725 = vperm.xlu0 %724, %v550
        %v726 = vpop.permute.xlu0 %725
        %729 = vset.pattern.permute.xlu0 0
        %730 = vperm.xlu0 %729, %v551
        %v731 = vpop.permute.xlu0 %730
        %734 = vset.pattern.permute.xlu0 0
        %735 = vperm.xlu0 %734, %v552
        %v736 = vpop.permute.xlu0 %735
        %739 = vset.pattern.permute.xlu0 0
        %740 = vperm.xlu0 %739, %v553
        %v741 = vpop.permute.xlu0 %740
        %744 = vset.pattern.permute.xlu0 0
        %745 = vperm.xlu0 %744, %v554
        %v746 = vpop.permute.xlu0 %745
        %749 = vset.pattern.permute.xlu0 0
        %750 = vperm.xlu0 %749, %v555
        %v751 = vpop.permute.xlu0 %750
        %754 = vset.pattern.permute.xlu0 0
        %755 = vperm.xlu0 %754, %v556
        %v756 = vpop.permute.xlu0 %755
        %759 = vset.pattern.permute.xlu0 0
        %760 = vperm.xlu0 %759, %v557
        %v761 = vpop.permute.xlu0 %760
        %764 = vset.pattern.permute.xlu0 0
        %765 = vperm.xlu0 %764, %v558
        %v766 = vpop.permute.xlu0 %765
        %769 = vset.pattern.permute.xlu0 0
        %770 = vperm.xlu0 %769, %v559
        %v771 = vpop.permute.xlu0 %770
        %774 = vset.pattern.permute.xlu0 0
        %775 = vperm.xlu0 %774, %v560
        %v776 = vpop.permute.xlu0 %775
        %779 = vset.pattern.permute.xlu0 0
        %780 = vperm.xlu0 %779, %v561
        %v781 = vpop.permute.xlu0 %780
        %784 = vset.pattern.permute.xlu0 0
        %785 = vperm.xlu0 %784, %v562
        %v786 = vpop.permute.xlu0 %785
        %789 = vset.pattern.permute.xlu0 0
        %790 = vperm.xlu0 %789, %v563
        %v791 = vpop.permute.xlu0 %790
        %v793 = vmul.f32 %v474, %v571
        %v794 = vmul.f32 %v475, %v576
        %v795 = vmul.f32 %v476, %v581
        %v796 = vmul.f32 %v477, %v586
        %v797 = vmul.f32 %v478, %v591
        %v798 = vmul.f32 %v479, %v596
        %v799 = vmul.f32 %v480, %v601
        %v800 = vmul.f32 %v481, %v606
        %v801 = vmul.f32 %v482, %v611
        %v802 = vmul.f32 %v483, %v616
        %v803 = vmul.f32 %v484, %v621
        %v804 = vmul.f32 %v485, %v626
        %v805 = vmul.f32 %v486, %v631
        %v806 = vmul.f32 %v487, %v636
        %v807 = vmul.f32 %v488, %v641
        %v808 = vmul.f32 %v489, %v646
        %v809 = vmul.f32 %v490, %v651
        %v810 = vmul.f32 %v491, %v656
        %v811 = vmul.f32 %v492, %v661
        %v812 = vmul.f32 %v493, %v666
        %v813 = vmul.f32 %v494, %v671
        %v814 = vmul.f32 %v495, %v676
        %v815 = vmul.f32 %v496, %v681
        %v816 = vmul.f32 %v497, %v686
        %v817 = vmul.f32 %v498, %v691
        %v818 = vmul.f32 %v499, %v696
        %v819 = vmul.f32 %v500, %v701
        %v820 = vmul.f32 %v501, %v706
        %v821 = vmul.f32 %v502, %v711
        %v822 = vmul.f32 %v503, %v716
        %v823 = vmul.f32 %v504, %v721
        %v824 = vmul.f32 %v505, %v726
        %v825 = vmul.f32 %v506, %v731
        %v826 = vmul.f32 %v507, %v736
        %v827 = vmul.f32 %v508, %v741
        %v828 = vmul.f32 %v509, %v746
        %v829 = vmul.f32 %v510, %v751
        %v830 = vmul.f32 %v511, %v756
        %v831 = vmul.f32 %v512, %v761
        %v832 = vmul.f32 %v513, %v766
        %v833 = vmul.f32 %v514, %v771
        %v834 = vmul.f32 %v515, %v776
        %v835 = vmul.f32 %v516, %v781
        %v836 = vmul.f32 %v517, %v786
        %v837 = vmul.f32 %v518, %v791
        %vm838 = vcmask 64512
        %v839 = vsel %vm838, %v793, 0.0
        %v840 = vsel %vm838, %v794, 0.0
        %v841 = vadd.f32 %v839, %v840
        %v842 = vsel %vm838, %v795, 0.0
        %v843 = vadd.f32 %v841, %v842
        %v844 = vsel %vm838, %v796, 0.0
        %v845 = vadd.f32 %v843, %v844
        %v846 = vsel %vm838, %v797, 0.0
        %v847 = vadd.f32 %v845, %v846
        %v848 = vsel %vm838, %v798, 0.0
        %v849 = vadd.f32 %v847, %v848
        %v850 = vsel %vm838, %v799, 0.0
        %v851 = vadd.f32 %v849, %v850
        %v852 = vsel %vm838, %v800, 0.0
        %v853 = vadd.f32 %v851, %v852
        %v854 = vsel %vm838, %v801, 0.0
        %v855 = vadd.f32 %v853, %v854
        %v856 = vsel %vm838, %v802, 0.0
        %v857 = vadd.f32 %v855, %v856
        %v858 = vsel %vm838, %v803, 0.0
        %v859 = vadd.f32 %v857, %v858
        %v860 = vsel %vm838, %v804, 0.0
        %v861 = vadd.f32 %v859, %v860
        %v862 = vsel %vm838, %v805, 0.0
        %v863 = vadd.f32 %v861, %v862
        %v864 = vsel %vm838, %v806, 0.0
        %v865 = vadd.f32 %v863, %v864
        %v866 = vsel %vm838, %v807, 0.0
        %v867 = vadd.f32 %v865, %v866
        %v868 = vsel %vm838, %v808, 0.0
        %v869 = vadd.f32 %v867, %v868
        %v870 = vsel %vm838, %v809, 0.0
        %v871 = vadd.f32 %v869, %v870
        %v872 = vsel %vm838, %v810, 0.0
        %v873 = vadd.f32 %v871, %v872
        %v874 = vsel %vm838, %v811, 0.0
        %v875 = vadd.f32 %v873, %v874
        %v876 = vsel %vm838, %v812, 0.0
        %v877 = vadd.f32 %v875, %v876
        %v878 = vsel %vm838, %v813, 0.0
        %v879 = vadd.f32 %v877, %v878
        %v880 = vsel %vm838, %v814, 0.0
        %v881 = vadd.f32 %v879, %v880
        %v882 = vsel %vm838, %v815, 0.0
        %v883 = vadd.f32 %v881, %v882
        %v884 = vsel %vm838, %v816, 0.0
        %v885 = vadd.f32 %v883, %v884
        %v886 = vsel %vm838, %v817, 0.0
        %v887 = vadd.f32 %v885, %v886
        %v888 = vsel %vm838, %v818, 0.0
        %v889 = vadd.f32 %v887, %v888
        %v890 = vsel %vm838, %v819, 0.0
        %v891 = vadd.f32 %v889, %v890
        %v892 = vsel %vm838, %v820, 0.0
        %v893 = vadd.f32 %v891, %v892
        %v894 = vsel %vm838, %v821, 0.0
        %v895 = vadd.f32 %v893, %v894
        %v896 = vsel %vm838, %v822, 0.0
        %v897 = vadd.f32 %v895, %v896
        %v898 = vsel %vm838, %v823, 0.0
        %v899 = vadd.f32 %v897, %v898
        %v900 = vsel %vm838, %v824, 0.0
        %v901 = vadd.f32 %v899, %v900
        %v902 = vsel %vm838, %v825, 0.0
        %v903 = vadd.f32 %v901, %v902
        %v904 = vsel %vm838, %v826, 0.0
        %v905 = vadd.f32 %v903, %v904
        %v906 = vsel %vm838, %v827, 0.0
        %v907 = vadd.f32 %v905, %v906
        %v908 = vsel %vm838, %v828, 0.0
        %v909 = vadd.f32 %v907, %v908
        %v910 = vsel %vm838, %v829, 0.0
        %v911 = vadd.f32 %v909, %v910
        %v912 = vsel %vm838, %v830, 0.0
        %v913 = vadd.f32 %v911, %v912
        %v914 = vsel %vm838, %v831, 0.0
        %v915 = vadd.f32 %v913, %v914
        %v916 = vsel %vm838, %v832, 0.0
        %v917 = vadd.f32 %v915, %v916
        %v918 = vsel %vm838, %v833, 0.0
        %v919 = vadd.f32 %v917, %v918
        %v920 = vsel %vm838, %v834, 0.0
        %v921 = vadd.f32 %v919, %v920
        %v922 = vsel %vm838, %v835, 0.0
        %v923 = vadd.f32 %v921, %v922
        %v924 = vsel %vm838, %v836, 0.0
        %v925 = vadd.f32 %v923, %v924
        %v926 = vsel %vm838, %v837, 0.0
        %v927 = vadd.f32 %v925, %v926
        %v928 = vrot.slane %v927, 4
        %v929 = vadd.f32 %v927, %v928
        %v930 = vrot.slane %v929, 2
        %v931 = vadd.f32 %v929, %v930
        %v932 = vrot.slane %v931, 1
        %v933 = vadd.f32 %v931, %v932
        %v935 = vsel %vm838, %v933, 0
        %937 = vmatprep.subr.mxu0 0.0
        %938 = vmatpush1.msra.mxu0 %v566
        %939 = vmatprep.subr.mxu0 0.0
        %940 = vmatpush1.msra.mxu0 0.0
        %941 = vmatprep.subr.mxu0 0.0
        %942 = vmatpush1.msra.mxu0 0.0
        %943 = vmatprep.subr.mxu0 0.0
        %944 = vmatpush1.msra.mxu0 0.0
        %945 = vmatprep.subr.mxu0 0.0
        %946 = vmatpush1.msra.mxu0 0.0
        %947 = vmatprep.subr.mxu0 0.0
        %948 = vmatpush1.msra.mxu0 0.0
        %949 = vmatprep.subr.mxu0 0.0
        %950 = vmatpush1.msra.mxu0 0.0
        %951 = vmatprep.subr.mxu0 0.0
        %952 = vmatpush1.msra.mxu0 0.0
        %953 = vmatprep.subr.mxu0 0.0
        %954 = vmatpush1.msra.mxu0 0.0
        %955 = vmatprep.subr.mxu0 0.0
        %956 = vmatpush1.msra.mxu0 0.0
        %957 = vmatprep.subr.mxu0 0.0
        %958 = vmatpush1.msra.mxu0 0.0
        %959 = vmatprep.subr.mxu0 0.0
        %960 = vmatpush1.msra.mxu0 0.0
        %961 = vmatprep.subr.mxu0 0.0
        %962 = vmatpush1.msra.mxu0 0.0
        %963 = vmatprep.subr.mxu0 0.0
        %964 = vmatpush1.msra.mxu0 0.0
        %965 = vmatprep.subr.mxu0 0.0
        %966 = vmatpush1.msra.mxu0 0.0
        %967 = vmatprep.subr.mxu0 0.0
        %968 = vmatpush1.msra.mxu0 0.0
        %969 = vmatprep.subr.mxu0 0.0
        %970 = vmatpush1.msra.mxu0 0.0
        %971 = vmatprep.subr.mxu0 0.0
        %972 = vmatpush1.msra.mxu0 0.0
        %973 = vmatprep.subr.mxu0 0.0
        %974 = vmatpush1.msra.mxu0 0.0
        %975 = vmatprep.subr.mxu0 0.0
        %976 = vmatpush1.msra.mxu0 0.0
        %977 = vmatprep.subr.mxu0 0.0
        %978 = vmatpush1.msra.mxu0 0.0
        %979 = vmatprep.subr.mxu0 0.0
        %980 = vmatpush1.msra.mxu0 0.0
        %981 = vmatprep.subr.mxu0 0.0
        %982 = vmatpush1.msra.mxu0 0.0
        %983 = vmatprep.subr.mxu0 0.0
        %984 = vmatpush1.msra.mxu0 0.0
        %985 = vmatprep.subr.mxu0 0.0
        %986 = vmatpush1.msra.mxu0 0.0
        %987 = vmatprep.subr.mxu0 0.0
        %988 = vmatpush1.msra.mxu0 0.0
        %989 = vmatprep.subr.mxu0 0.0
        %990 = vmatpush1.msra.mxu0 0.0
        %991 = vmatprep.subr.mxu0 0.0
        %992 = vmatpush1.msra.mxu0 0.0
        %993 = vmatprep.subr.mxu0 0.0
        %994 = vmatpush1.msra.mxu0 0.0
        %995 = vmatprep.subr.mxu0 0.0
        %996 = vmatpush1.msra.mxu0 0.0
        %997 = vmatprep.subr.mxu0 0.0
        %998 = vmatpush1.msra.mxu0 0.0
        %999 = vmatprep.subr.mxu0 0.0
        %1000 = vmatpush1.msra.mxu0 0.0
        %1001 = vmatprep.mubr.f32.mxu0 0.0
        %1002 = vmatmul.mubr.f32.gmra.mrb[0].mxu0 %v935
        %v1003 = vpop.f32.mrb[0].mxu0
        %v1004 = vadd.f32 0.0, %v1003
        %v1005 = vpop.f32.mrb[0].mxu0
        %1006 = vdwg.mxu0
        %vm1007 = vcmask 31744
        %v1009 = vsel %vm1007, %v1004, 0
        %vm1011 = vcmask 1043456
        %v1013 = vsel %vm1011, %v567, 0
        %1015 = vmatprep.subr.mxu0 0.0
        %1016 = vmatpush1.msra.mxu0 %v1013
        %1017 = vmatprep.subr.mxu0 0.0
        %1018 = vmatpush1.msra.mxu0 0.0
        %1019 = vmatprep.subr.mxu0 0.0
        %1020 = vmatpush1.msra.mxu0 0.0
        %1021 = vmatprep.subr.mxu0 0.0
        %1022 = vmatpush1.msra.mxu0 0.0
        %1023 = vmatprep.subr.mxu0 0.0
        %1024 = vmatpush1.msra.mxu0 0.0
        %1025 = vmatprep.subr.mxu0 0.0
        %1026 = vmatpush1.msra.mxu0 0.0
        %1027 = vmatprep.subr.mxu0 0.0
        %1028 = vmatpush1.msra.mxu0 0.0
        %1029 = vmatprep.subr.mxu0 0.0
        %1030 = vmatpush1.msra.mxu0 0.0
        %1031 = vmatprep.subr.mxu0 0.0
        %1032 = vmatpush1.msra.mxu0 0.0
        %1033 = vmatprep.subr.mxu0 0.0
        %1034 = vmatpush1.msra.mxu0 0.0
        %1035 = vmatprep.subr.mxu0 0.0
        %1036 = vmatpush1.msra.mxu0 0.0
        %1037 = vmatprep.subr.mxu0 0.0
        %1038 = vmatpush1.msra.mxu0 0.0
        %1039 = vmatprep.subr.mxu0 0.0
        %1040 = vmatpush1.msra.mxu0 0.0
        %1041 = vmatprep.subr.mxu0 0.0
        %1042 = vmatpush1.msra.mxu0 0.0
        %1043 = vmatprep.subr.mxu0 0.0
        %1044 = vmatpush1.msra.mxu0 0.0
        %1045 = vmatprep.subr.mxu0 0.0
        %1046 = vmatpush1.msra.mxu0 0.0
        %1047 = vmatprep.subr.mxu0 0.0
        %1048 = vmatpush1.msra.mxu0 0.0
        %1049 = vmatprep.subr.mxu0 0.0
        %1050 = vmatpush1.msra.mxu0 0.0
        %1051 = vmatprep.subr.mxu0 0.0
        %1052 = vmatpush1.msra.mxu0 0.0
        %1053 = vmatprep.subr.mxu0 0.0
        %1054 = vmatpush1.msra.mxu0 0.0
        %1055 = vmatprep.subr.mxu0 0.0
        %1056 = vmatpush1.msra.mxu0 0.0
        %1057 = vmatprep.subr.mxu0 0.0
        %1058 = vmatpush1.msra.mxu0 0.0
        %1059 = vmatprep.subr.mxu0 0.0
        %1060 = vmatpush1.msra.mxu0 0.0
        %1061 = vmatprep.subr.mxu0 0.0
        %1062 = vmatpush1.msra.mxu0 0.0
        %1063 = vmatprep.subr.mxu0 0.0
        %1064 = vmatpush1.msra.mxu0 0.0
        %1065 = vmatprep.subr.mxu0 0.0
        %1066 = vmatpush1.msra.mxu0 0.0
        %1067 = vmatprep.subr.mxu0 0.0
        %1068 = vmatpush1.msra.mxu0 0.0
        %1069 = vmatprep.subr.mxu0 0.0
        %1070 = vmatpush1.msra.mxu0 0.0
        %1071 = vmatprep.subr.mxu0 0.0
        %1072 = vmatpush1.msra.mxu0 0.0
        %1073 = vmatprep.subr.mxu0 0.0
        %1074 = vmatpush1.msra.mxu0 0.0
        %1075 = vmatprep.subr.mxu0 0.0
        %1076 = vmatpush1.msra.mxu0 0.0
        %1077 = vmatprep.subr.mxu0 0.0
        %1078 = vmatpush1.msra.mxu0 0.0
        %1079 = vmatprep.mubr.f32.mxu0 0.0
        %1080 = vmatmul.mubr.f32.gmra.mrb[0].mxu0 %v1009
        %v1081 = vpop.f32.mrb[0].mxu0
        %v1082 = vadd.f32 0.0, %v1081
        %v1083 = vpop.f32.mrb[0].mxu0
        %1084 = vdwg.mxu0
        %v1085 = vrcp.pop 512.0
        %v1086 = vmul.f32 %v1082, %v1085
        %v1087 = vlaneseq
        %v1088 = vshrl.u32 %v1087, 7
        %v1089 = vsub.s32 0, %v1088
        %v1090 = vrot.slane %v1086, %v1089
        %v1091 = vsub.f32 %v474, %v1090
        %v1092 = vsub.f32 %v475, %v1090
        %v1093 = vsub.f32 %v476, %v1090
        %v1094 = vsub.f32 %v477, %v1090
        %v1095 = vsub.f32 %v478, %v1090
        %v1096 = vsub.f32 %v479, %v1090
        %v1097 = vsub.f32 %v480, %v1090
        %v1098 = vsub.f32 %v481, %v1090
        %v1099 = vsub.f32 %v482, %v1090
        %v1100 = vsub.f32 %v483, %v1090
        %v1101 = vsub.f32 %v484, %v1090
        %v1102 = vsub.f32 %v485, %v1090
        %v1103 = vsub.f32 %v486, %v1090
        %v1104 = vsub.f32 %v487, %v1090
        %v1105 = vsub.f32 %v488, %v1090
        %v1106 = vsub.f32 %v489, %v1090
        %v1107 = vsub.f32 %v490, %v1090
        %v1108 = vsub.f32 %v491, %v1090
        %v1109 = vsub.f32 %v492, %v1090
        %v1110 = vsub.f32 %v493, %v1090
        %v1111 = vsub.f32 %v494, %v1090
        %v1112 = vsub.f32 %v495, %v1090
        %v1113 = vsub.f32 %v496, %v1090
        %v1114 = vsub.f32 %v497, %v1090
        %v1115 = vsub.f32 %v498, %v1090
        %v1116 = vsub.f32 %v499, %v1090
        %v1117 = vsub.f32 %v500, %v1090
        %v1118 = vsub.f32 %v501, %v1090
        %v1119 = vsub.f32 %v502, %v1090
        %v1120 = vsub.f32 %v503, %v1090
        %v1121 = vsub.f32 %v504, %v1090
        %v1122 = vsub.f32 %v505, %v1090
        %v1123 = vsub.f32 %v506, %v1090
        %v1124 = vsub.f32 %v507, %v1090
        %v1125 = vsub.f32 %v508, %v1090
        %v1126 = vsub.f32 %v509, %v1090
        %v1127 = vsub.f32 %v510, %v1090
        %v1128 = vsub.f32 %v511, %v1090
        %v1129 = vsub.f32 %v512, %v1090
        %v1130 = vsub.f32 %v513, %v1090
        %v1131 = vsub.f32 %v514, %v1090
        %v1132 = vsub.f32 %v515, %v1090
        %v1133 = vsub.f32 %v516, %v1090
        %v1134 = vsub.f32 %v517, %v1090
        %v1135 = vsub.f32 %v518, %v1090
        %v1136 = vmul.f32 %v1091, %v571
        %v1137 = vmul.f32 %v1092, %v576
        %v1138 = vmul.f32 %v1093, %v581
        %v1139 = vmul.f32 %v1094, %v586
        %v1140 = vmul.f32 %v1095, %v591
        %v1141 = vmul.f32 %v1096, %v596
        %v1142 = vmul.f32 %v1097, %v601
        %v1143 = vmul.f32 %v1098, %v606
        %v1144 = vmul.f32 %v1099, %v611
        %v1145 = vmul.f32 %v1100, %v616
        %v1146 = vmul.f32 %v1101, %v621
        %v1147 = vmul.f32 %v1102, %v626
        %v1148 = vmul.f32 %v1103, %v631
        %v1149 = vmul.f32 %v1104, %v636
        %v1150 = vmul.f32 %v1105, %v641
        %v1151 = vmul.f32 %v1106, %v646
        %v1152 = vmul.f32 %v1107, %v651
        %v1153 = vmul.f32 %v1108, %v656
        %v1154 = vmul.f32 %v1109, %v661
        %v1155 = vmul.f32 %v1110, %v666
        %v1156 = vmul.f32 %v1111, %v671
        %v1157 = vmul.f32 %v1112, %v676
        %v1158 = vmul.f32 %v1113, %v681
        %v1159 = vmul.f32 %v1114, %v686
        %v1160 = vmul.f32 %v1115, %v691
        %v1161 = vmul.f32 %v1116, %v696
        %v1162 = vmul.f32 %v1117, %v701
        %v1163 = vmul.f32 %v1118, %v706
        %v1164 = vmul.f32 %v1119, %v711
        %v1165 = vmul.f32 %v1120, %v716
        %v1166 = vmul.f32 %v1121, %v721
        %v1167 = vmul.f32 %v1122, %v726
        %v1168 = vmul.f32 %v1123, %v731
        %v1169 = vmul.f32 %v1124, %v736
        %v1170 = vmul.f32 %v1125, %v741
        %v1171 = vmul.f32 %v1126, %v746
        %v1172 = vmul.f32 %v1127, %v751
        %v1173 = vmul.f32 %v1128, %v756
        %v1174 = vmul.f32 %v1129, %v761
        %v1175 = vmul.f32 %v1130, %v766
        %v1176 = vmul.f32 %v1131, %v771
        %v1177 = vmul.f32 %v1132, %v776
        %v1178 = vmul.f32 %v1133, %v781
        %v1179 = vmul.f32 %v1134, %v786
        %v1180 = vmul.f32 %v1135, %v791
        %v1181 = vmul.f32 %v1136, %v1136
        %v1182 = vmul.f32 %v1137, %v1137
        %v1183 = vmul.f32 %v1138, %v1138
        %v1184 = vmul.f32 %v1139, %v1139
        %v1185 = vmul.f32 %v1140, %v1140
        %v1186 = vmul.f32 %v1141, %v1141
        %v1187 = vmul.f32 %v1142, %v1142
        %v1188 = vmul.f32 %v1143, %v1143
        %v1189 = vmul.f32 %v1144, %v1144
        %v1190 = vmul.f32 %v1145, %v1145
        %v1191 = vmul.f32 %v1146, %v1146
        %v1192 = vmul.f32 %v1147, %v1147
        %v1193 = vmul.f32 %v1148, %v1148
        %v1194 = vmul.f32 %v1149, %v1149
        %v1195 = vmul.f32 %v1150, %v1150
        %v1196 = vmul.f32 %v1151, %v1151
        %v1197 = vmul.f32 %v1152, %v1152
        %v1198 = vmul.f32 %v1153, %v1153
        %v1199 = vmul.f32 %v1154, %v1154
        %v1200 = vmul.f32 %v1155, %v1155
        %v1201 = vmul.f32 %v1156, %v1156
        %v1202 = vmul.f32 %v1157, %v1157
        %v1203 = vmul.f32 %v1158, %v1158
        %v1204 = vmul.f32 %v1159, %v1159
        %v1205 = vmul.f32 %v1160, %v1160
        %v1206 = vmul.f32 %v1161, %v1161
        %v1207 = vmul.f32 %v1162, %v1162
        %v1208 = vmul.f32 %v1163, %v1163
        %v1209 = vmul.f32 %v1164, %v1164
        %v1210 = vmul.f32 %v1165, %v1165
        %v1211 = vmul.f32 %v1166, %v1166
        %v1212 = vmul.f32 %v1167, %v1167
        %v1213 = vmul.f32 %v1168, %v1168
        %v1214 = vmul.f32 %v1169, %v1169
        %v1215 = vmul.f32 %v1170, %v1170
        %v1216 = vmul.f32 %v1171, %v1171
        %v1217 = vmul.f32 %v1172, %v1172
        %v1218 = vmul.f32 %v1173, %v1173
        %v1219 = vmul.f32 %v1174, %v1174
        %v1220 = vmul.f32 %v1175, %v1175
        %v1221 = vmul.f32 %v1176, %v1176
        %v1222 = vmul.f32 %v1177, %v1177
        %v1223 = vmul.f32 %v1178, %v1178
        %v1224 = vmul.f32 %v1179, %v1179
        %v1225 = vmul.f32 %v1180, %v1180
        %v1226 = vsel %vm838, %v1181, 0.0
        %v1227 = vsel %vm838, %v1182, 0.0
        %v1228 = vadd.f32 %v1226, %v1227
        %v1229 = vsel %vm838, %v1183, 0.0
        %v1230 = vadd.f32 %v1228, %v1229
        %v1231 = vsel %vm838, %v1184, 0.0
        %v1232 = vadd.f32 %v1230, %v1231
        %v1233 = vsel %vm838, %v1185, 0.0
        %v1234 = vadd.f32 %v1232, %v1233
        %v1235 = vsel %vm838, %v1186, 0.0
        %v1236 = vadd.f32 %v1234, %v1235
        %v1237 = vsel %vm838, %v1187, 0.0
        %v1238 = vadd.f32 %v1236, %v1237
        %v1239 = vsel %vm838, %v1188, 0.0
        %v1240 = vadd.f32 %v1238, %v1239
        %v1241 = vsel %vm838, %v1189, 0.0
        %v1242 = vadd.f32 %v1240, %v1241
        %v1243 = vsel %vm838, %v1190, 0.0
        %v1244 = vadd.f32 %v1242, %v1243
        %v1245 = vsel %vm838, %v1191, 0.0
        %v1246 = vadd.f32 %v1244, %v1245
        %v1247 = vsel %vm838, %v1192, 0.0
        %v1248 = vadd.f32 %v1246, %v1247
        %v1249 = vsel %vm838, %v1193, 0.0
        %v1250 = vadd.f32 %v1248, %v1249
        %v1251 = vsel %vm838, %v1194, 0.0
        %v1252 = vadd.f32 %v1250, %v1251
        %v1253 = vsel %vm838, %v1195, 0.0
        %v1254 = vadd.f32 %v1252, %v1253
        %v1255 = vsel %vm838, %v1196, 0.0
        %v1256 = vadd.f32 %v1254, %v1255
        %v1257 = vsel %vm838, %v1197, 0.0
        %v1258 = vadd.f32 %v1256, %v1257
        %v1259 = vsel %vm838, %v1198, 0.0
        %v1260 = vadd.f32 %v1258, %v1259
        %v1261 = vsel %vm838, %v1199, 0.0
        %v1262 = vadd.f32 %v1260, %v1261
        %v1263 = vsel %vm838, %v1200, 0.0
        %v1264 = vadd.f32 %v1262, %v1263
        %v1265 = vsel %vm838, %v1201, 0.0
        %v1266 = vadd.f32 %v1264, %v1265
        %v1267 = vsel %vm838, %v1202, 0.0
        %v1268 = vadd.f32 %v1266, %v1267
        %v1269 = vsel %vm838, %v1203, 0.0
        %v1270 = vadd.f32 %v1268, %v1269
        %v1271 = vsel %vm838, %v1204, 0.0
        %v1272 = vadd.f32 %v1270, %v1271
        %v1273 = vsel %vm838, %v1205, 0.0
        %v1274 = vadd.f32 %v1272, %v1273
        %v1275 = vsel %vm838, %v1206, 0.0
        %v1276 = vadd.f32 %v1274, %v1275
        %v1277 = vsel %vm838, %v1207, 0.0
        %v1278 = vadd.f32 %v1276, %v1277
        %v1279 = vsel %vm838, %v1208, 0.0
        %v1280 = vadd.f32 %v1278, %v1279
        %v1281 = vsel %vm838, %v1209, 0.0
        %v1282 = vadd.f32 %v1280, %v1281
        %v1283 = vsel %vm838, %v1210, 0.0
        %v1284 = vadd.f32 %v1282, %v1283
        %v1285 = vsel %vm838, %v1211, 0.0
        %v1286 = vadd.f32 %v1284, %v1285
        %v1287 = vsel %vm838, %v1212, 0.0
        %v1288 = vadd.f32 %v1286, %v1287
        %v1289 = vsel %vm838, %v1213, 0.0
        %v1290 = vadd.f32 %v1288, %v1289
        %v1291 = vsel %vm838, %v1214, 0.0
        %v1292 = vadd.f32 %v1290, %v1291
        %v1293 = vsel %vm838, %v1215, 0.0
        %v1294 = vadd.f32 %v1292, %v1293
        %v1295 = vsel %vm838, %v1216, 0.0
        %v1296 = vadd.f32 %v1294, %v1295
        %v1297 = vsel %vm838, %v1217, 0.0
        %v1298 = vadd.f32 %v1296, %v1297
        %v1299 = vsel %vm838, %v1218, 0.0
        %v1300 = vadd.f32 %v1298, %v1299
        %v1301 = vsel %vm838, %v1219, 0.0
        %v1302 = vadd.f32 %v1300, %v1301
        %v1303 = vsel %vm838, %v1220, 0.0
        %v1304 = vadd.f32 %v1302, %v1303
        %v1305 = vsel %vm838, %v1221, 0.0
        %v1306 = vadd.f32 %v1304, %v1305
        %v1307 = vsel %vm838, %v1222, 0.0
        %v1308 = vadd.f32 %v1306, %v1307
        %v1309 = vsel %vm838, %v1223, 0.0
        %v1310 = vadd.f32 %v1308, %v1309
        %v1311 = vsel %vm838, %v1224, 0.0
        %v1312 = vadd.f32 %v1310, %v1311
        %v1313 = vsel %vm838, %v1225, 0.0
        %v1314 = vadd.f32 %v1312, %v1313
        %v1315 = vrot.slane %v1314, 4
        %v1316 = vadd.f32 %v1314, %v1315
        %v1317 = vrot.slane %v1316, 2
        %v1318 = vadd.f32 %v1316, %v1317
        %v1319 = vrot.slane %v1318, 1
        %v1320 = vadd.f32 %v1318, %v1319
        %v1322 = vsel %vm838, %v1320, 0
        %1324 = vmatprep.subr.mxu0 0.0
        %1325 = vmatpush1.msra.mxu0 %v566
        %1326 = vmatprep.subr.mxu0 0.0
        %1327 = vmatpush1.msra.mxu0 0.0
        %1328 = vmatprep.subr.mxu0 0.0
        %1329 = vmatpush1.msra.mxu0 0.0
        %1330 = vmatprep.subr.mxu0 0.0
        %1331 = vmatpush1.msra.mxu0 0.0
        %1332 = vmatprep.subr.mxu0 0.0
        %1333 = vmatpush1.msra.mxu0 0.0
        %1334 = vmatprep.subr.mxu0 0.0
        %1335 = vmatpush1.msra.mxu0 0.0
        %1336 = vmatprep.subr.mxu0 0.0
        %1337 = vmatpush1.msra.mxu0 0.0
        %1338 = vmatprep.subr.mxu0 0.0
        %1339 = vmatpush1.msra.mxu0 0.0
        %1340 = vmatprep.subr.mxu0 0.0
        %1341 = vmatpush1.msra.mxu0 0.0
        %1342 = vmatprep.subr.mxu0 0.0
        %1343 = vmatpush1.msra.mxu0 0.0
        %1344 = vmatprep.subr.mxu0 0.0
        %1345 = vmatpush1.msra.mxu0 0.0
        %1346 = vmatprep.subr.mxu0 0.0
        %1347 = vmatpush1.msra.mxu0 0.0
        %1348 = vmatprep.subr.mxu0 0.0
        %1349 = vmatpush1.msra.mxu0 0.0
        %1350 = vmatprep.subr.mxu0 0.0
        %1351 = vmatpush1.msra.mxu0 0.0
        %1352 = vmatprep.subr.mxu0 0.0
        %1353 = vmatpush1.msra.mxu0 0.0
        %1354 = vmatprep.subr.mxu0 0.0
        %1355 = vmatpush1.msra.mxu0 0.0
        %1356 = vmatprep.subr.mxu0 0.0
        %1357 = vmatpush1.msra.mxu0 0.0
        %1358 = vmatprep.subr.mxu0 0.0
        %1359 = vmatpush1.msra.mxu0 0.0
        %1360 = vmatprep.subr.mxu0 0.0
        %1361 = vmatpush1.msra.mxu0 0.0
        %1362 = vmatprep.subr.mxu0 0.0
        %1363 = vmatpush1.msra.mxu0 0.0
        %1364 = vmatprep.subr.mxu0 0.0
        %1365 = vmatpush1.msra.mxu0 0.0
        %1366 = vmatprep.subr.mxu0 0.0
        %1367 = vmatpush1.msra.mxu0 0.0
        %1368 = vmatprep.subr.mxu0 0.0
        %1369 = vmatpush1.msra.mxu0 0.0
        %1370 = vmatprep.subr.mxu0 0.0
        %1371 = vmatpush1.msra.mxu0 0.0
        %1372 = vmatprep.subr.mxu0 0.0
        %1373 = vmatpush1.msra.mxu0 0.0
        %1374 = vmatprep.subr.mxu0 0.0
        %1375 = vmatpush1.msra.mxu0 0.0
        %1376 = vmatprep.subr.mxu0 0.0
        %1377 = vmatpush1.msra.mxu0 0.0
        %1378 = vmatprep.subr.mxu0 0.0
        %1379 = vmatpush1.msra.mxu0 0.0
        %1380 = vmatprep.subr.mxu0 0.0
        %1381 = vmatpush1.msra.mxu0 0.0
        %1382 = vmatprep.subr.mxu0 0.0
        %1383 = vmatpush1.msra.mxu0 0.0
        %1384 = vmatprep.subr.mxu0 0.0
        %1385 = vmatpush1.msra.mxu0 0.0
        %1386 = vmatprep.subr.mxu0 0.0
        %1387 = vmatpush1.msra.mxu0 0.0
        %1388 = vmatprep.mubr.f32.mxu0 0.0
        %1389 = vmatmul.mubr.f32.gmra.mrb[0].mxu0 %v1322
        %v1390 = vpop.f32.mrb[0].mxu0
        %v1391 = vadd.f32 0.0, %v1390
        %v1392 = vpop.f32.mrb[0].mxu0
        %1393 = vdwg.mxu0
        %v1395 = vsel %vm1007, %v1391, 0
        %1397 = vmatprep.subr.mxu0 0.0
        %1398 = vmatpush1.msra.mxu0 %v1013
        %1399 = vmatprep.subr.mxu0 0.0
        %1400 = vmatpush1.msra.mxu0 0.0
        %1401 = vmatprep.subr.mxu0 0.0
        %1402 = vmatpush1.msra.mxu0 0.0
        %1403 = vmatprep.subr.mxu0 0.0
        %1404 = vmatpush1.msra.mxu0 0.0
        %1405 = vmatprep.subr.mxu0 0.0
        %1406 = vmatpush1.msra.mxu0 0.0
        %1407 = vmatprep.subr.mxu0 0.0
        %1408 = vmatpush1.msra.mxu0 0.0
        %1409 = vmatprep.subr.mxu0 0.0
        %1410 = vmatpush1.msra.mxu0 0.0
        %1411 = vmatprep.subr.mxu0 0.0
        %1412 = vmatpush1.msra.mxu0 0.0
        %1413 = vmatprep.subr.mxu0 0.0
        %1414 = vmatpush1.msra.mxu0 0.0
        %1415 = vmatprep.subr.mxu0 0.0
        %1416 = vmatpush1.msra.mxu0 0.0
        %1417 = vmatprep.subr.mxu0 0.0
        %1418 = vmatpush1.msra.mxu0 0.0
        %1419 = vmatprep.subr.mxu0 0.0
        %1420 = vmatpush1.msra.mxu0 0.0
        %1421 = vmatprep.subr.mxu0 0.0
        %1422 = vmatpush1.msra.mxu0 0.0
        %1423 = vmatprep.subr.mxu0 0.0
        %1424 = vmatpush1.msra.mxu0 0.0
        %1425 = vmatprep.subr.mxu0 0.0
        %1426 = vmatpush1.msra.mxu0 0.0
        %1427 = vmatprep.subr.mxu0 0.0
        %1428 = vmatpush1.msra.mxu0 0.0
        %1429 = vmatprep.subr.mxu0 0.0
        %1430 = vmatpush1.msra.mxu0 0.0
        %1431 = vmatprep.subr.mxu0 0.0
        %1432 = vmatpush1.msra.mxu0 0.0
        %1433 = vmatprep.subr.mxu0 0.0
        %1434 = vmatpush1.msra.mxu0 0.0
        %1435 = vmatprep.subr.mxu0 0.0
        %1436 = vmatpush1.msra.mxu0 0.0
        %1437 = vmatprep.subr.mxu0 0.0
        %1438 = vmatpush1.msra.mxu0 0.0
        %1439 = vmatprep.subr.mxu0 0.0
        %1440 = vmatpush1.msra.mxu0 0.0
        %1441 = vmatprep.subr.mxu0 0.0
        %1442 = vmatpush1.msra.mxu0 0.0
        %1443 = vmatprep.subr.mxu0 0.0
        %1444 = vmatpush1.msra.mxu0 0.0
        %1445 = vmatprep.subr.mxu0 0.0
        %1446 = vmatpush1.msra.mxu0 0.0
        %1447 = vmatprep.subr.mxu0 0.0
        %1448 = vmatpush1.msra.mxu0 0.0
        %1449 = vmatprep.subr.mxu0 0.0
        %1450 = vmatpush1.msra.mxu0 0.0
        %1451 = vmatprep.subr.mxu0 0.0
        %1452 = vmatpush1.msra.mxu0 0.0
        %1453 = vmatprep.subr.mxu0 0.0
        %1454 = vmatpush1.msra.mxu0 0.0
        %1455 = vmatprep.subr.mxu0 0.0
        %1456 = vmatpush1.msra.mxu0 0.0
        %1457 = vmatprep.subr.mxu0 0.0
        %1458 = vmatpush1.msra.mxu0 0.0
        %1459 = vmatprep.subr.mxu0 0.0
        %1460 = vmatpush1.msra.mxu0 0.0
        %1461 = vmatprep.mubr.f32.mxu0 0.0
        %1462 = vmatmul.mubr.f32.gmra.mrb[0].mxu0 %v1395
        %v1463 = vpop.f32.mrb[0].mxu0
        %v1464 = vadd.f32 0.0, %v1463
        %v1465 = vpop.f32.mrb[0].mxu0
        %1466 = vdwg.mxu0
        %v1467 = vmul.f32 %v1464, %v1085
        %v1468 = vadd.f32 %v1467, 1e-05
        %v1469 = vrsqrt.pop %v1468
        %v1470 = vlaneseq
        %v1471 = vshrl.u32 %v1470, 7
        %v1472 = vsub.s32 0, %v1471
        %v1473 = vrot.slane %v1469, %v1472
        %v1474 = vmul.f32 %v1093, %v1473
        %v1475 = vmul.f32 %v1094, %v1473
        %v1476 = vmul.f32 %v1095, %v1473
        %v1477 = vmul.f32 %v1096, %v1473
        %v1478 = vmul.f32 %v1097, %v1473
        %v1479 = vmul.f32 %v1098, %v1473
        %v1480 = vmul.f32 %v1099, %v1473
        %v1481 = vmul.f32 %v1100, %v1473
        %v1482 = vmul.f32 %v1101, %v1473
        %v1483 = vmul.f32 %v1102, %v1473
        %v1484 = vmul.f32 %v1103, %v1473
        %v1485 = vmul.f32 %v1104, %v1473
        %v1486 = vmul.f32 %v1105, %v1473
        %v1487 = vmul.f32 %v1106, %v1473
        %v1488 = vmul.f32 %v1107, %v1473
        %v1489 = vmul.f32 %v1108, %v1473
        %v1490 = vmul.f32 %v1109, %v1473
        %v1491 = vmul.f32 %v1110, %v1473
        %v1492 = vmul.f32 %v1111, %v1473
        %v1493 = vmul.f32 %v1112, %v1473
        %v1494 = vmul.f32 %v1113, %v1473
        %v1495 = vmul.f32 %v1114, %v1473
        %v1496 = vmul.f32 %v1115, %v1473
        %v1497 = vmul.f32 %v1116, %v1473
        %v1498 = vmul.f32 %v1117, %v1473
        %v1499 = vmul.f32 %v1118, %v1473
        %v1500 = vmul.f32 %v1119, %v1473
        %v1501 = vmul.f32 %v1120, %v1473
        %v1502 = vmul.f32 %v1121, %v1473
        %v1503 = vmul.f32 %v1122, %v1473
        %v1504 = vmul.f32 %v1123, %v1473
        %v1505 = vmul.f32 %v1124, %v1473
        %v1506 = vmul.f32 %v1125, %v1473
        %v1507 = vmul.f32 %v1126, %v1473
        %v1508 = vmul.f32 %v1127, %v1473
        %v1509 = vmul.f32 %v1128, %v1473
        %v1510 = vmul.f32 %v1129, %v1473
        %v1511 = vmul.f32 %v1130, %v1473
        %v1512 = vmul.f32 %v1131, %v1473
        %v1513 = vmul.f32 %v1132, %v1473
        %v1514 = vmul.f32 %v1133, %v1473
        %v1516 = vlaneseq
        %v1517 = vshrl.u32 %v1516, 7
        %v1518 = vsub.s32 0, %v1517
        %v1519 = vrot.slane %v564, %v1518
        %v1521 = vmul.f32 %v1474, %v1519
        %v1522 = vmul.f32 %v1475, %v1519
        %v1523 = vmul.f32 %v1476, %v1519
        %v1524 = vmul.f32 %v1477, %v1519
        %v1525 = vmul.f32 %v1478, %v1519
        %v1526 = vmul.f32 %v1479, %v1519
        %v1527 = vmul.f32 %v1480, %v1519
        %v1528 = vmul.f32 %v1481, %v1519
        %v1529 = vmul.f32 %v1482, %v1519
        %v1530 = vmul.f32 %v1483, %v1519
        %v1531 = vmul.f32 %v1484, %v1519
        %v1532 = vmul.f32 %v1485, %v1519
        %v1533 = vmul.f32 %v1486, %v1519
        %v1534 = vmul.f32 %v1487, %v1519
        %v1535 = vmul.f32 %v1488, %v1519
        %v1536 = vmul.f32 %v1489, %v1519
        %v1537 = vmul.f32 %v1490, %v1519
        %v1538 = vmul.f32 %v1491, %v1519
        %v1539 = vmul.f32 %v1492, %v1519
        %v1540 = vmul.f32 %v1493, %v1519
        %v1541 = vmul.f32 %v1494, %v1519
        %v1542 = vmul.f32 %v1495, %v1519
        %v1543 = vmul.f32 %v1496, %v1519
        %v1544 = vmul.f32 %v1497, %v1519
        %v1545 = vmul.f32 %v1498, %v1519
        %v1546 = vmul.f32 %v1499, %v1519
        %v1547 = vmul.f32 %v1500, %v1519
        %v1548 = vmul.f32 %v1501, %v1519
        %v1549 = vmul.f32 %v1502, %v1519
        %v1550 = vmul.f32 %v1503, %v1519
        %v1551 = vmul.f32 %v1504, %v1519
        %v1552 = vmul.f32 %v1505, %v1519
        %v1553 = vmul.f32 %v1506, %v1519
        %v1554 = vmul.f32 %v1507, %v1519
        %v1555 = vmul.f32 %v1508, %v1519
        %v1556 = vmul.f32 %v1509, %v1519
        %v1557 = vmul.f32 %v1510, %v1519
        %v1558 = vmul.f32 %v1511, %v1519
        %v1559 = vmul.f32 %v1512, %v1519
        %v1560 = vmul.f32 %v1513, %v1519
        %v1561 = vmul.f32 %v1514, %v1519
        %v1563 = vlaneseq
        %v1564 = vshrl.u32 %v1563, 7
        %v1565 = vsub.s32 0, %v1564
        %v1566 = vrot.slane %v565, %v1565
        %v1568 = vadd.f32 %v1521, %v1566
        %v1569 = vadd.f32 %v1522, %v1566
        %v1570 = vadd.f32 %v1523, %v1566
        %v1571 = vadd.f32 %v1524, %v1566
        %v1572 = vadd.f32 %v1525, %v1566
        %v1573 = vadd.f32 %v1526, %v1566
        %v1574 = vadd.f32 %v1527, %v1566
        %v1575 = vadd.f32 %v1528, %v1566
        %v1576 = vadd.f32 %v1529, %v1566
        %v1577 = vadd.f32 %v1530, %v1566
        %v1578 = vadd.f32 %v1531, %v1566
        %v1579 = vadd.f32 %v1532, %v1566
        %v1580 = vadd.f32 %v1533, %v1566
        %v1581 = vadd.f32 %v1534, %v1566
        %v1582 = vadd.f32 %v1535, %v1566
        %v1583 = vadd.f32 %v1536, %v1566
        %v1584 = vadd.f32 %v1537, %v1566
        %v1585 = vadd.f32 %v1538, %v1566
        %v1586 = vadd.f32 %v1539, %v1566
        %v1587 = vadd.f32 %v1540, %v1566
        %v1588 = vadd.f32 %v1541, %v1566
        %v1589 = vadd.f32 %v1542, %v1566
        %v1590 = vadd.f32 %v1543, %v1566
        %v1591 = vadd.f32 %v1544, %v1566
        %v1592 = vadd.f32 %v1545, %v1566
        %v1593 = vadd.f32 %v1546, %v1566
        %v1594 = vadd.f32 %v1547, %v1566
        %v1595 = vadd.f32 %v1548, %v1566
        %v1596 = vadd.f32 %v1549, %v1566
        %v1597 = vadd.f32 %v1550, %v1566
        %v1598 = vadd.f32 %v1551, %v1566
        %v1599 = vadd.f32 %v1552, %v1566
        %v1600 = vadd.f32 %v1553, %v1566
        %v1601 = vadd.f32 %v1554, %v1566
        %v1602 = vadd.f32 %v1555, %v1566
        %v1603 = vadd.f32 %v1556, %v1566
        %v1604 = vadd.f32 %v1557, %v1566
        %v1605 = vadd.f32 %v1558, %v1566
        %v1606 = vadd.f32 %v1559, %v1566
        %v1607 = vadd.f32 %v1560, %v1566
        %v1608 = vadd.f32 %v1561, %v1566
        %v1609 = vxor.u32 %v1568, 2147483648
        %v1610 = vxor.u32 %v1569, 2147483648
        %v1611 = vxor.u32 %v1570, 2147483648
        %v1612 = vxor.u32 %v1571, 2147483648
        %v1613 = vxor.u32 %v1572, 2147483648
        %v1614 = vxor.u32 %v1573, 2147483648
        %v1615 = vxor.u32 %v1574, 2147483648
        %v1616 = vxor.u32 %v1575, 2147483648
        %v1617 = vxor.u32 %v1576, 2147483648
        %v1618 = vxor.u32 %v1577, 2147483648
        %v1619 = vxor.u32 %v1578, 2147483648
        %v1620 = vxor.u32 %v1579, 2147483648
        %v1621 = vxor.u32 %v1580, 2147483648
        %v1622 = vxor.u32 %v1581, 2147483648
        %v1623 = vxor.u32 %v1582, 2147483648
        %v1624 = vxor.u32 %v1583, 2147483648
        %v1625 = vxor.u32 %v1584, 2147483648
        %v1626 = vxor.u32 %v1585, 2147483648
        %v1627 = vxor.u32 %v1586, 2147483648
        %v1628 = vxor.u32 %v1587, 2147483648
        %v1629 = vxor.u32 %v1588, 2147483648
        %v1630 = vxor.u32 %v1589, 2147483648
        %v1631 = vxor.u32 %v1590, 2147483648
        %v1632 = vxor.u32 %v1591, 2147483648
        %v1633 = vxor.u32 %v1592, 2147483648
        %v1634 = vxor.u32 %v1593, 2147483648
        %v1635 = vxor.u32 %v1594, 2147483648
        %v1636 = vxor.u32 %v1595, 2147483648
        %v1637 = vxor.u32 %v1596, 2147483648
        %v1638 = vxor.u32 %v1597, 2147483648
        %v1639 = vxor.u32 %v1598, 2147483648
        %v1640 = vxor.u32 %v1599, 2147483648
        %v1641 = vxor.u32 %v1600, 2147483648
        %v1642 = vxor.u32 %v1601, 2147483648
        %v1643 = vxor.u32 %v1602, 2147483648
        %v1644 = vxor.u32 %v1603, 2147483648
        %v1645 = vxor.u32 %v1604, 2147483648
        %v1646 = vxor.u32 %v1605, 2147483648
        %v1647 = vxor.u32 %v1606, 2147483648
        %v1648 = vxor.u32 %v1607, 2147483648
        %v1649 = vxor.u32 %v1608, 2147483648
        %v1650 = vmul.f32 %v1609, 1.442695
        %v1651 = vpow.pop %v1650
        %v1652 = vmul.f32 %v1610, 1.442695
        %v1653 = vpow.pop %v1652
        %v1654 = vmul.f32 %v1611, 1.442695
        %v1655 = vpow.pop %v1654
        %v1656 = vmul.f32 %v1612, 1.442695
        %v1657 = vpow.pop %v1656
        %v1658 = vmul.f32 %v1613, 1.442695
        %v1659 = vpow.pop %v1658
        %v1660 = vmul.f32 %v1614, 1.442695
        %v1661 = vpow.pop %v1660
        %v1662 = vmul.f32 %v1615, 1.442695
        %v1663 = vpow.pop %v1662
        %v1664 = vmul.f32 %v1616, 1.442695
        %v1665 = vpow.pop %v1664
        %v1666 = vmul.f32 %v1617, 1.442695
        %v1667 = vpow.pop %v1666
        %v1668 = vmul.f32 %v1618, 1.442695
        %v1669 = vpow.pop %v1668
        %v1670 = vmul.f32 %v1619, 1.442695
        %v1671 = vpow.pop %v1670
        %v1672 = vmul.f32 %v1620, 1.442695
        %v1673 = vpow.pop %v1672
        %v1674 = vmul.f32 %v1621, 1.442695
        %v1675 = vpow.pop %v1674
        %v1676 = vmul.f32 %v1622, 1.442695
        %v1677 = vpow.pop %v1676
        %v1678 = vmul.f32 %v1623, 1.442695
        %v1679 = vpow.pop %v1678
        %v1680 = vmul.f32 %v1624, 1.442695
        %v1681 = vpow.pop %v1680
        %v1682 = vmul.f32 %v1625, 1.442695
        %v1683 = vpow.pop %v1682
        %v1684 = vmul.f32 %v1626, 1.442695
        %v1685 = vpow.pop %v1684
        %v1686 = vmul.f32 %v1627, 1.442695
        %v1687 = vpow.pop %v1686
        %v1688 = vmul.f32 %v1628, 1.442695
        %v1689 = vpow.pop %v1688
        %v1690 = vmul.f32 %v1629, 1.442695
        %v1691 = vpow.pop %v1690
        %v1692 = vmul.f32 %v1630, 1.442695
        %v1693 = vpow.pop %v1692
        %v1694 = vmul.f32 %v1631, 1.442695
        %v1695 = vpow.pop %v1694
        %v1696 = vmul.f32 %v1632, 1.442695
        %v1697 = vpow.pop %v1696
        %v1698 = vmul.f32 %v1633, 1.442695
        %v1699 = vpow.pop %v1698
        %v1700 = vmul.f32 %v1634, 1.442695
        %v1701 = vpow.pop %v1700
        %v1702 = vmul.f32 %v1635, 1.442695
        %v1703 = vpow.pop %v1702
        %v1704 = vmul.f32 %v1636, 1.442695
        %v1705 = vpow.pop %v1704
        %v1706 = vmul.f32 %v1637, 1.442695
        %v1707 = vpow.pop %v1706
        %v1708 = vmul.f32 %v1638, 1.442695
        %v1709 = vpow.pop %v1708
        %v1710 = vmul.f32 %v1639, 1.442695
        %v1711 = vpow.pop %v1710
        %v1712 = vmul.f32 %v1640, 1.442695
        %v1713 = vpow.pop %v1712
        %v1714 = vmul.f32 %v1641, 1.442695
        %v1715 = vpow.pop %v1714
        %v1716 = vmul.f32 %v1642, 1.442695
        %v1717 = vpow.pop %v1716
        %v1718 = vmul.f32 %v1643, 1.442695
        %v1719 = vpow.pop %v1718
        %v1720 = vmul.f32 %v1644, 1.442695
        %v1721 = vpow.pop %v1720
        %v1722 = vmul.f32 %v1645, 1.442695
        %v1723 = vpow.pop %v1722
        %v1724 = vmul.f32 %v1646, 1.442695
        %v1725 = vpow.pop %v1724
        %v1726 = vmul.f32 %v1647, 1.442695
        %v1727 = vpow.pop %v1726
        %v1728 = vmul.f32 %v1648, 1.442695
        %v1729 = vpow.pop %v1728
        %v1730 = vmul.f32 %v1649, 1.442695
        %v1731 = vpow.pop %v1730
        %v1732 = vadd.f32 %v1651, 1.0
        %v1733 = vadd.f32 %v1653, 1.0
        %v1734 = vadd.f32 %v1655, 1.0
        %v1735 = vadd.f32 %v1657, 1.0
        %v1736 = vadd.f32 %v1659, 1.0
        %v1737 = vadd.f32 %v1661, 1.0
        %v1738 = vadd.f32 %v1663, 1.0
        %v1739 = vadd.f32 %v1665, 1.0
        %v1740 = vadd.f32 %v1667, 1.0
        %v1741 = vadd.f32 %v1669, 1.0
        %v1742 = vadd.f32 %v1671, 1.0
        %v1743 = vadd.f32 %v1673, 1.0
        %v1744 = vadd.f32 %v1675, 1.0
        %v1745 = vadd.f32 %v1677, 1.0
        %v1746 = vadd.f32 %v1679, 1.0
        %v1747 = vadd.f32 %v1681, 1.0
        %v1748 = vadd.f32 %v1683, 1.0
        %v1749 = vadd.f32 %v1685, 1.0
        %v1750 = vadd.f32 %v1687, 1.0
        %v1751 = vadd.f32 %v1689, 1.0
        %v1752 = vadd.f32 %v1691, 1.0
        %v1753 = vadd.f32 %v1693, 1.0
        %v1754 = vadd.f32 %v1695, 1.0
        %v1755 = vadd.f32 %v1697, 1.0
        %v1756 = vadd.f32 %v1699, 1.0
        %v1757 = vadd.f32 %v1701, 1.0
        %v1758 = vadd.f32 %v1703, 1.0
        %v1759 = vadd.f32 %v1705, 1.0
        %v1760 = vadd.f32 %v1707, 1.0
        %v1761 = vadd.f32 %v1709, 1.0
        %v1762 = vadd.f32 %v1711, 1.0
        %v1763 = vadd.f32 %v1713, 1.0
        %v1764 = vadd.f32 %v1715, 1.0
        %v1765 = vadd.f32 %v1717, 1.0
        %v1766 = vadd.f32 %v1719, 1.0
        %v1767 = vadd.f32 %v1721, 1.0
        %v1768 = vadd.f32 %v1723, 1.0
        %v1769 = vadd.f32 %v1725, 1.0
        %v1770 = vadd.f32 %v1727, 1.0
        %v1771 = vadd.f32 %v1729, 1.0
        %v1772 = vadd.f32 %v1731, 1.0
        %v1773 = vrcp.pop %v1732
        %v1774 = vmul.f32 1.0, %v1773
        %v1775 = vrcp.pop %v1733
        %v1776 = vmul.f32 1.0, %v1775
        %v1777 = vrcp.pop %v1734
        %v1778 = vmul.f32 1.0, %v1777
        %v1779 = vrcp.pop %v1735
        %v1780 = vmul.f32 1.0, %v1779
        %v1781 = vrcp.pop %v1736
        %v1782 = vmul.f32 1.0, %v1781
        %v1783 = vrcp.pop %v1737
        %v1784 = vmul.f32 1.0, %v1783
        %v1785 = vrcp.pop %v1738
        %v1786 = vmul.f32 1.0, %v1785
        %v1787 = vrcp.pop %v1739
        %v1788 = vmul.f32 1.0, %v1787
        %v1789 = vrcp.pop %v1740
        %v1790 = vmul.f32 1.0, %v1789
        %v1791 = vrcp.pop %v1741
        %v1792 = vmul.f32 1.0, %v1791
        %v1793 = vrcp.pop %v1742
        %v1794 = vmul.f32 1.0, %v1793
        %v1795 = vrcp.pop %v1743
        %v1796 = vmul.f32 1.0, %v1795
        %v1797 = vrcp.pop %v1744
        %v1798 = vmul.f32 1.0, %v1797
        %v1799 = vrcp.pop %v1745
        %v1800 = vmul.f32 1.0, %v1799
        %v1801 = vrcp.pop %v1746
        %v1802 = vmul.f32 1.0, %v1801
        %v1803 = vrcp.pop %v1747
        %v1804 = vmul.f32 1.0, %v1803
        %v1805 = vrcp.pop %v1748
        %v1806 = vmul.f32 1.0, %v1805
        %v1807 = vrcp.pop %v1749
        %v1808 = vmul.f32 1.0, %v1807
        %v1809 = vrcp.pop %v1750
        %v1810 = vmul.f32 1.0, %v1809
        %v1811 = vrcp.pop %v1751
        %v1812 = vmul.f32 1.0, %v1811
        %v1813 = vrcp.pop %v1752
        %v1814 = vmul.f32 1.0, %v1813
        %v1815 = vrcp.pop %v1753
        %v1816 = vmul.f32 1.0, %v1815
        %v1817 = vrcp.pop %v1754
        %v1818 = vmul.f32 1.0, %v1817
        %v1819 = vrcp.pop %v1755
        %v1820 = vmul.f32 1.0, %v1819
        %v1821 = vrcp.pop %v1756
        %v1822 = vmul.f32 1.0, %v1821
        %v1823 = vrcp.pop %v1757
        %v1824 = vmul.f32 1.0, %v1823
        %v1825 = vrcp.pop %v1758
        %v1826 = vmul.f32 1.0, %v1825
        %v1827 = vrcp.pop %v1759
        %v1828 = vmul.f32 1.0, %v1827
        %v1829 = vrcp.pop %v1760
        %v1830 = vmul.f32 1.0, %v1829
        %v1831 = vrcp.pop %v1761
        %v1832 = vmul.f32 1.0, %v1831
        %v1833 = vrcp.pop %v1762
        %v1834 = vmul.f32 1.0, %v1833
        %v1835 = vrcp.pop %v1763
        %v1836 = vmul.f32 1.0, %v1835
        %v1837 = vrcp.pop %v1764
        %v1838 = vmul.f32 1.0, %v1837
        %v1839 = vrcp.pop %v1765
        %v1840 = vmul.f32 1.0, %v1839
        %v1841 = vrcp.pop %v1766
        %v1842 = vmul.f32 1.0, %v1841
        %v1843 = vrcp.pop %v1767
        %v1844 = vmul.f32 1.0, %v1843
        %v1845 = vrcp.pop %v1768
        %v1846 = vmul.f32 1.0, %v1845
        %v1847 = vrcp.pop %v1769
        %v1848 = vmul.f32 1.0, %v1847
        %v1849 = vrcp.pop %v1770
        %v1850 = vmul.f32 1.0, %v1849
        %v1851 = vrcp.pop %v1771
        %v1852 = vmul.f32 1.0, %v1851
        %v1853 = vrcp.pop %v1772
        %v1854 = vmul.f32 1.0, %v1853
        %v1855 = vmul.f32 %v1568, %v1774
        %v1856 = vmul.f32 %v1569, %v1776
        %v1857 = vmul.f32 %v1570, %v1778
        %v1858 = vmul.f32 %v1571, %v1780
        %v1859 = vmul.f32 %v1572, %v1782
        %v1860 = vmul.f32 %v1573, %v1784
        %v1861 = vmul.f32 %v1574, %v1786
        %v1862 = vmul.f32 %v1575, %v1788
        %v1863 = vmul.f32 %v1576, %v1790
        %v1864 = vmul.f32 %v1577, %v1792
        %v1865 = vmul.f32 %v1578, %v1794
        %v1866 = vmul.f32 %v1579, %v1796
        %v1867 = vmul.f32 %v1580, %v1798
        %v1868 = vmul.f32 %v1581, %v1800
        %v1869 = vmul.f32 %v1582, %v1802
        %v1870 = vmul.f32 %v1583, %v1804
        %v1871 = vmul.f32 %v1584, %v1806
        %v1872 = vmul.f32 %v1585, %v1808
        %v1873 = vmul.f32 %v1586, %v1810
        %v1874 = vmul.f32 %v1587, %v1812
        %v1875 = vmul.f32 %v1588, %v1814
        %v1876 = vmul.f32 %v1589, %v1816
        %v1877 = vmul.f32 %v1590, %v1818
        %v1878 = vmul.f32 %v1591, %v1820
        %v1879 = vmul.f32 %v1592, %v1822
        %v1880 = vmul.f32 %v1593, %v1824
        %v1881 = vmul.f32 %v1594, %v1826
        %v1882 = vmul.f32 %v1595, %v1828
        %v1883 = vmul.f32 %v1596, %v1830
        %v1884 = vmul.f32 %v1597, %v1832
        %v1885 = vmul.f32 %v1598, %v1834
        %v1886 = vmul.f32 %v1599, %v1836
        %v1887 = vmul.f32 %v1600, %v1838
        %v1888 = vmul.f32 %v1601, %v1840
        %v1889 = vmul.f32 %v1602, %v1842
        %v1890 = vmul.f32 %v1603, %v1844
        %v1891 = vmul.f32 %v1604, %v1846
        %v1892 = vmul.f32 %v1605, %v1848
        %v1893 = vmul.f32 %v1606, %v1850
        %v1894 = vmul.f32 %v1607, %v1852
        %v1895 = vmul.f32 %v1608, %v1854
        %v1896 = vmul.f32 %v1855, %v581
        %v1897 = vmul.f32 %v1856, %v586
        %v1898 = vmul.f32 %v1857, %v591
        %v1899 = vmul.f32 %v1858, %v596
        %v1900 = vmul.f32 %v1859, %v601
        %v1901 = vmul.f32 %v1860, %v606
        %v1902 = vmul.f32 %v1861, %v611
        %v1903 = vmul.f32 %v1862, %v616
        %v1904 = vmul.f32 %v1863, %v621
        %v1905 = vmul.f32 %v1864, %v626
        %v1906 = vmul.f32 %v1865, %v631
        %v1907 = vmul.f32 %v1866, %v636
        %v1908 = vmul.f32 %v1867, %v641
        %v1909 = vmul.f32 %v1868, %v646
        %v1910 = vmul.f32 %v1869, %v651
        %v1911 = vmul.f32 %v1870, %v656
        %v1912 = vmul.f32 %v1871, %v661
        %v1913 = vmul.f32 %v1872, %v666
        %v1914 = vmul.f32 %v1873, %v671
        %v1915 = vmul.f32 %v1874, %v676
        %v1916 = vmul.f32 %v1875, %v681
        %v1917 = vmul.f32 %v1876, %v686
        %v1918 = vmul.f32 %v1877, %v691
        %v1919 = vmul.f32 %v1878, %v696
        %v1920 = vmul.f32 %v1879, %v701
        %v1921 = vmul.f32 %v1880, %v706
        %v1922 = vmul.f32 %v1881, %v711
        %v1923 = vmul.f32 %v1882, %v716
        %v1924 = vmul.f32 %v1883, %v721
        %v1925 = vmul.f32 %v1884, %v726
        %v1926 = vmul.f32 %v1885, %v731
        %v1927 = vmul.f32 %v1886, %v736
        %v1928 = vmul.f32 %v1887, %v741
        %v1929 = vmul.f32 %v1888, %v746
        %v1930 = vmul.f32 %v1889, %v751
        %v1931 = vmul.f32 %v1890, %v756
        %v1932 = vmul.f32 %v1891, %v761
        %v1933 = vmul.f32 %v1892, %v766
        %v1934 = vmul.f32 %v1893, %v771
        %v1935 = vmul.f32 %v1894, %v776
        %v1936 = vmul.f32 %v1895, %v781
        %v1937 = vld [vmem:[#allocation13] sm:$0xff]
        %s1938 = scalar_lea.vmem [#allocation13], 8
        %v1939 = vld [vmem:[%s1938] sm:$0xff]
        %vm1977 = vcmask 1045504
        %v1978 = vrot.slane %v1896, 2
        %v1979 = vrot.slane %v1897, 2
        %v1980 = vsel %vm1977, %v1978, %v1979
        %v1981 = vrot.slane %v1898, 2
        %v1982 = vsel %vm1977, %v1979, %v1981
        %v1983 = vrot.slane %v1899, 2
        %v1984 = vsel %vm1977, %v1981, %v1983
        %v1985 = vrot.slane %v1900, 2
        %v1986 = vsel %vm1977, %v1983, %v1985
        %v1987 = vrot.slane %v1901, 2
        %v1988 = vsel %vm1977, %v1985, %v1987
        %v1989 = vrot.slane %v1902, 2
        %v1990 = vsel %vm1977, %v1987, %v1989
        %v1991 = vrot.slane %v1903, 2
        %v1992 = vsel %vm1977, %v1989, %v1991
        %v1993 = vrot.slane %v1904, 2
        %v1994 = vsel %vm1977, %v1991, %v1993
        %v1995 = vrot.slane %v1905, 2
        %v1996 = vsel %vm1977, %v1993, %v1995
        %v1997 = vrot.slane %v1906, 2
        %v1998 = vsel %vm1977, %v1995, %v1997
        %v1999 = vrot.slane %v1907, 2
        %v2000 = vsel %vm1977, %v1997, %v1999
        %v2001 = vrot.slane %v1908, 2
        %v2002 = vsel %vm1977, %v1999, %v2001
        %v2003 = vrot.slane %v1909, 2
        %v2004 = vsel %vm1977, %v2001, %v2003
        %v2005 = vrot.slane %v1910, 2
        %v2006 = vsel %vm1977, %v2003, %v2005
        %v2007 = vrot.slane %v1911, 2
        %v2008 = vsel %vm1977, %v2005, %v2007
        %v2009 = vrot.slane %v1912, 2
        %v2010 = vsel %vm1977, %v2007, %v2009
        %v2011 = vrot.slane %v1913, 2
        %v2012 = vsel %vm1977, %v2009, %v2011
        %v2013 = vrot.slane %v1914, 2
        %v2014 = vsel %vm1977, %v2011, %v2013
        %v2015 = vrot.slane %v1915, 2
        %v2016 = vsel %vm1977, %v2013, %v2015
        %v2017 = vrot.slane %v1916, 2
        %v2018 = vsel %vm1977, %v2015, %v2017
        %v2019 = vrot.slane %v1917, 2
        %v2020 = vsel %vm1977, %v2017, %v2019
        %v2021 = vrot.slane %v1918, 2
        %v2022 = vsel %vm1977, %v2019, %v2021
        %v2023 = vrot.slane %v1919, 2
        %v2024 = vsel %vm1977, %v2021, %v2023
        %v2025 = vrot.slane %v1920, 2
        %v2026 = vsel %vm1977, %v2023, %v2025
        %v2027 = vrot.slane %v1921, 2
        %v2028 = vsel %vm1977, %v2025, %v2027
        %v2029 = vrot.slane %v1922, 2
        %v2030 = vsel %vm1977, %v2027, %v2029
        %v2031 = vrot.slane %v1923, 2
        %v2032 = vsel %vm1977, %v2029, %v2031
        %v2033 = vrot.slane %v1924, 2
        %v2034 = vsel %vm1977, %v2031, %v2033
        %v2035 = vrot.slane %v1925, 2
        %v2036 = vsel %vm1977, %v2033, %v2035
        %v2037 = vrot.slane %v1926, 2
        %v2038 = vsel %vm1977, %v2035, %v2037
        %v2039 = vrot.slane %v1927, 2
        %v2040 = vsel %vm1977, %v2037, %v2039
        %v2041 = vrot.slane %v1928, 2
        %v2042 = vsel %vm1977, %v2039, %v2041
        %v2043 = vrot.slane %v1929, 2
        %v2044 = vsel %vm1977, %v2041, %v2043
        %v2045 = vrot.slane %v1930, 2
        %v2046 = vsel %vm1977, %v2043, %v2045
        %v2047 = vrot.slane %v1931, 2
        %v2048 = vsel %vm1977, %v2045, %v2047
        %v2049 = vrot.slane %v1932, 2
        %v2050 = vsel %vm1977, %v2047, %v2049
        %v2051 = vsel %vm838, %v1980, 0
        %v2053 = vsel %vm838, %v1982, 0
        %v2055 = vsel %vm838, %v1984, 0
        %v2057 = vsel %vm838, %v1986, 0
        %v2059 = vsel %vm838, %v1988, 0
        %v2061 = vsel %vm838, %v1990, 0
        %v2063 = vsel %vm838, %v1992, 0
        %v2065 = vsel %vm838, %v1994, 0
        %v2067 = vsel %vm838, %v1996, 0
        %v2069 = vsel %vm838, %v1998, 0
        %v2071 = vsel %vm838, %v2000, 0
        %v2073 = vsel %vm838, %v2002, 0
        %v2075 = vsel %vm838, %v2004, 0
        %v2077 = vsel %vm838, %v2006, 0
        %v2079 = vsel %vm838, %v2008, 0
        %v2081 = vsel %vm838, %v2010, 0
        %v2083 = vsel %vm838, %v2012, 0
        %v2085 = vsel %vm838, %v2014, 0
        %v2087 = vsel %vm838, %v2016, 0
        %v2089 = vsel %vm838, %v2018, 0
        %v2091 = vsel %vm838, %v2020, 0
        %v2093 = vsel %vm838, %v2022, 0
        %v2095 = vsel %vm838, %v2024, 0
        %v2097 = vsel %vm838, %v2026, 0
        %v2099 = vsel %vm838, %v2028, 0
        %v2101 = vsel %vm838, %v2030, 0
        %v2103 = vsel %vm838, %v2032, 0
        %v2105 = vsel %vm838, %v2034, 0
        %v2107 = vsel %vm838, %v2036, 0
        %v2109 = vsel %vm838, %v2038, 0
        %v2111 = vsel %vm838, %v2040, 0
        %v2113 = vsel %vm838, %v2042, 0
        %v2115 = vsel %vm838, %v2044, 0
        %v2117 = vsel %vm838, %v2046, 0
        %v2119 = vsel %vm838, %v2048, 0
        %v2121 = vsel %vm838, %v2050, 0
        %2123 = vmatprep.subr.mxu0 0.0
        %2124 = vmatpush1.msra.mxu0 %v1939
        %2125 = vmatprep.subr.mxu0 0.0
        %2126 = vmatpush1.msra.mxu0 0.0
        %2127 = vmatprep.subr.mxu0 0.0
        %2128 = vmatpush1.msra.mxu0 0.0
        %2129 = vmatprep.subr.mxu0 0.0
        %2130 = vmatpush1.msra.mxu0 0.0
        %2131 = vmatprep.subr.mxu0 0.0
        %2132 = vmatpush1.msra.mxu0 0.0
        %2133 = vmatprep.subr.mxu0 0.0
        %2134 = vmatpush1.msra.mxu0 0.0
        %2135 = vmatprep.subr.mxu0 0.0
        %2136 = vmatpush1.msra.mxu0 0.0
        %2137 = vmatprep.subr.mxu0 0.0
        %2138 = vmatpush1.msra.mxu0 0.0
        %2139 = vmatprep.subr.mxu0 0.0
        %2140 = vmatpush1.msra.mxu0 0.0
        %2141 = vmatprep.subr.mxu0 0.0
        %2142 = vmatpush1.msra.mxu0 0.0
        %2143 = vmatprep.subr.mxu0 0.0
        %2144 = vmatpush1.msra.mxu0 0.0
        %2145 = vmatprep.subr.mxu0 0.0
        %2146 = vmatpush1.msra.mxu0 0.0
        %2147 = vmatprep.subr.mxu0 0.0
        %2148 = vmatpush1.msra.mxu0 0.0
        %2149 = vmatprep.subr.mxu0 0.0
        %2150 = vmatpush1.msra.mxu0 0.0
        %2151 = vmatprep.subr.mxu0 0.0
        %2152 = vmatpush1.msra.mxu0 0.0
        %2153 = vmatprep.subr.mxu0 0.0
        %2154 = vmatpush1.msra.mxu0 0.0
        %2155 = vmatprep.subr.mxu0 0.0
        %2156 = vmatpush1.msra.mxu0 0.0
        %2157 = vmatprep.subr.mxu0 0.0
        %2158 = vmatpush1.msra.mxu0 0.0
        %2159 = vmatprep.subr.mxu0 0.0
        %2160 = vmatpush1.msra.mxu0 0.0
        %2161 = vmatprep.subr.mxu0 0.0
        %2162 = vmatpush1.msra.mxu0 0.0
        %2163 = vmatprep.subr.mxu0 0.0
        %2164 = vmatpush1.msra.mxu0 0.0
        %2165 = vmatprep.subr.mxu0 0.0
        %2166 = vmatpush1.msra.mxu0 0.0
        %2167 = vmatprep.subr.mxu0 0.0
        %2168 = vmatpush1.msra.mxu0 0.0
        %2169 = vmatprep.subr.mxu0 0.0
        %2170 = vmatpush1.msra.mxu0 0.0
        %2171 = vmatprep.subr.mxu0 0.0
        %2172 = vmatpush1.msra.mxu0 0.0
        %2173 = vmatprep.subr.mxu0 0.0
        %2174 = vmatpush1.msra.mxu0 0.0
        %2175 = vmatprep.subr.mxu0 0.0
        %2176 = vmatpush1.msra.mxu0 0.0
        %2177 = vmatprep.subr.mxu0 0.0
        %2178 = vmatpush1.msra.mxu0 0.0
        %2179 = vmatprep.subr.mxu0 0.0
        %2180 = vmatpush1.msra.mxu0 0.0
        %2181 = vmatprep.subr.mxu0 0.0
        %2182 = vmatpush1.msra.mxu0 0.0
        %2183 = vmatprep.subr.mxu0 0.0
        %2184 = vmatpush1.msra.mxu0 0.0
        %2185 = vmatprep.subr.mxu0 0.0
        %2186 = vmatpush1.msra.mxu0 0.0
        %2187 = vmatprep.mubr.f32.mxu0 0.0
        %2188 = vmatmul.mubr.f32.gmra.mrb[0].mxu0 %v2051
        %v2189 = vpop.f32.mrb[0].mxu0
        %v2190 = vadd.f32 0.0, %v2189
        %v2191 = vpop.f32.mrb[0].mxu0
        %2192 = vmatprep.mubr.f32.mxu0 0.0
        %2193 = vmatmul.mubr.f32.gmra.mrb[0].mxu0 %v2053
        %v2194 = vpop.f32.mrb[0].mxu0
        %v2195 = vadd.f32 0.0, %v2194
        %v2196 = vpop.f32.mrb[0].mxu0
        %2197 = vmatprep.mubr.f32.mxu0 0.0
        %2198 = vmatmul.mubr.f32.gmra.mrb[0].mxu0 %v2055
        %v2199 = vpop.f32.mrb[0].mxu0
        %v2200 = vadd.f32 0.0, %v2199
        %v2201 = vpop.f32.mrb[0].mxu0
        %2202 = vmatprep.mubr.f32.mxu0 0.0
        %2203 = vmatmul.mubr.f32.gmra.mrb[0].mxu0 %v2057
        %v2204 = vpop.f32.mrb[0].mxu0
        %v2205 = vadd.f32 0.0, %v2204
        %v2206 = vpop.f32.mrb[0].mxu0
        %2207 = vmatprep.mubr.f32.mxu0 0.0
        %2208 = vmatmul.mubr.f32.gmra.mrb[0].mxu0 %v2059
        %v2209 = vpop.f32.mrb[0].mxu0
        %v2210 = vadd.f32 0.0, %v2209
        %v2211 = vpop.f32.mrb[0].mxu0
        %2212 = vmatprep.mubr.f32.mxu0 0.0
        %2213 = vmatmul.mubr.f32.gmra.mrb[0].mxu0 %v2061
        %v2214 = vpop.f32.mrb[0].mxu0
        %v2215 = vadd.f32 0.0, %v2214
        %v2216 = vpop.f32.mrb[0].mxu0
        %2217 = vmatprep.mubr.f32.mxu0 0.0
        %2218 = vmatmul.mubr.f32.gmra.mrb[0].mxu0 %v2063
        %v2219 = vpop.f32.mrb[0].mxu0
        %v2220 = vadd.f32 0.0, %v2219
        %v2221 = vpop.f32.mrb[0].mxu0
        %2222 = vmatprep.mubr.f32.mxu0 0.0
        %2223 = vmatmul.mubr.f32.gmra.mrb[0].mxu0 %v2065
        %v2224 = vpop.f32.mrb[0].mxu0
        %v2225 = vadd.f32 0.0, %v2224
        %v2226 = vpop.f32.mrb[0].mxu0
        %2227 = vmatprep.mubr.f32.mxu0 0.0
        %2228 = vmatmul.mubr.f32.gmra.mrb[0].mxu0 %v2067
        %v2229 = vpop.f32.mrb[0].mxu0
        %v2230 = vadd.f32 0.0, %v2229
        %v2231 = vpop.f32.mrb[0].mxu0
        %2232 = vmatprep.mubr.f32.mxu0 0.0
        %2233 = vmatmul.mubr.f32.gmra.mrb[0].mxu0 %v2069
        %v2234 = vpop.f32.mrb[0].mxu0
        %v2235 = vadd.f32 0.0, %v2234
        %v2236 = vpop.f32.mrb[0].mxu0
        %2237 = vmatprep.mubr.f32.mxu0 0.0
        %2238 = vmatmul.mubr.f32.gmra.mrb[0].mxu0 %v2071
        %v2239 = vpop.f32.mrb[0].mxu0
        %v2240 = vadd.f32 0.0, %v2239
        %v2241 = vpop.f32.mrb[0].mxu0
        %2242 = vmatprep.mubr.f32.mxu0 0.0
        %2243 = vmatmul.mubr.f32.gmra.mrb[0].mxu0 %v2073
        %v2244 = vpop.f32.mrb[0].mxu0
        %v2245 = vadd.f32 0.0, %v2244
        %v2246 = vpop.f32.mrb[0].mxu0
        %2247 = vmatprep.mubr.f32.mxu0 0.0
        %2248 = vmatmul.mubr.f32.gmra.mrb[0].mxu0 %v2075
        %v2249 = vpop.f32.mrb[0].mxu0
        %v2250 = vadd.f32 0.0, %v2249
        %v2251 = vpop.f32.mrb[0].mxu0
        %2252 = vmatprep.mubr.f32.mxu0 0.0
        %2253 = vmatmul.mubr.f32.gmra.mrb[0].mxu0 %v2077
        %v2254 = vpop.f32.mrb[0].mxu0
        %v2255 = vadd.f32 0.0, %v2254
        %v2256 = vpop.f32.mrb[0].mxu0
        %2257 = vmatprep.mubr.f32.mxu0 0.0
        %2258 = vmatmul.mubr.f32.gmra.mrb[0].mxu0 %v2079
        %v2259 = vpop.f32.mrb[0].mxu0
        %v2260 = vadd.f32 0.0, %v2259
        %v2261 = vpop.f32.mrb[0].mxu0
        %2262 = vmatprep.mubr.f32.mxu0 0.0
        %2263 = vmatmul.mubr.f32.gmra.mrb[0].mxu0 %v2081
        %v2264 = vpop.f32.mrb[0].mxu0
        %v2265 = vadd.f32 0.0, %v2264
        %v2266 = vpop.f32.mrb[0].mxu0
        %2267 = vmatprep.mubr.f32.mxu0 0.0
        %2268 = vmatmul.mubr.f32.gmra.mrb[0].mxu0 %v2083
        %v2269 = vpop.f32.mrb[0].mxu0
        %v2270 = vadd.f32 0.0, %v2269
        %v2271 = vpop.f32.mrb[0].mxu0
        %2272 = vmatprep.mubr.f32.mxu0 0.0
        %2273 = vmatmul.mubr.f32.gmra.mrb[0].mxu0 %v2085
        %v2274 = vpop.f32.mrb[0].mxu0
        %v2275 = vadd.f32 0.0, %v2274
        %v2276 = vpop.f32.mrb[0].mxu0
        %2277 = vmatprep.mubr.f32.mxu0 0.0
        %2278 = vmatmul.mubr.f32.gmra.mrb[0].mxu0 %v2087
        %v2279 = vpop.f32.mrb[0].mxu0
        %v2280 = vadd.f32 0.0, %v2279
        %v2281 = vpop.f32.mrb[0].mxu0
        %2282 = vmatprep.mubr.f32.mxu0 0.0
        %2283 = vmatmul.mubr.f32.gmra.mrb[0].mxu0 %v2089
        %v2284 = vpop.f32.mrb[0].mxu0
        %v2285 = vadd.f32 0.0, %v2284
        %v2286 = vpop.f32.mrb[0].mxu0
        %2287 = vmatprep.mubr.f32.mxu0 0.0
        %2288 = vmatmul.mubr.f32.gmra.mrb[0].mxu0 %v2091
        %v2289 = vpop.f32.mrb[0].mxu0
        %v2290 = vadd.f32 0.0, %v2289
        %v2291 = vpop.f32.mrb[0].mxu0
        %2292 = vmatprep.mubr.f32.mxu0 0.0
        %2293 = vmatmul.mubr.f32.gmra.mrb[0].mxu0 %v2093
        %v2294 = vpop.f32.mrb[0].mxu0
        %v2295 = vadd.f32 0.0, %v2294
        %v2296 = vpop.f32.mrb[0].mxu0
        %2297 = vmatprep.mubr.f32.mxu0 0.0
        %2298 = vmatmul.mubr.f32.gmra.mrb[0].mxu0 %v2095
        %v2299 = vpop.f32.mrb[0].mxu0
        %v2300 = vadd.f32 0.0, %v2299
        %v2301 = vpop.f32.mrb[0].mxu0
        %2302 = vmatprep.mubr.f32.mxu0 0.0
        %2303 = vmatmul.mubr.f32.gmra.mrb[0].mxu0 %v2097
        %v2304 = vpop.f32.mrb[0].mxu0
        %v2305 = vadd.f32 0.0, %v2304
        %v2306 = vpop.f32.mrb[0].mxu0
        %2307 = vmatprep.mubr.f32.mxu0 0.0
        %2308 = vmatmul.mubr.f32.gmra.mrb[0].mxu0 %v2099
        %v2309 = vpop.f32.mrb[0].mxu0
        %v2310 = vadd.f32 0.0, %v2309
        %v2311 = vpop.f32.mrb[0].mxu0
        %2312 = vmatprep.mubr.f32.mxu0 0.0
        %2313 = vmatmul.mubr.f32.gmra.mrb[0].mxu0 %v2101
        %v2314 = vpop.f32.mrb[0].mxu0
        %v2315 = vadd.f32 0.0, %v2314
        %v2316 = vpop.f32.mrb[0].mxu0
        %2317 = vmatprep.mubr.f32.mxu0 0.0
        %2318 = vmatmul.mubr.f32.gmra.mrb[0].mxu0 %v2103
        %v2319 = vpop.f32.mrb[0].mxu0
        %v2320 = vadd.f32 0.0, %v2319
        %v2321 = vpop.f32.mrb[0].mxu0
        %2322 = vmatprep.mubr.f32.mxu0 0.0
        %2323 = vmatmul.mubr.f32.gmra.mrb[0].mxu0 %v2105
        %v2324 = vpop.f32.mrb[0].mxu0
        %v2325 = vadd.f32 0.0, %v2324
        %v2326 = vpop.f32.mrb[0].mxu0
        %2327 = vmatprep.mubr.f32.mxu0 0.0
        %2328 = vmatmul.mubr.f32.gmra.mrb[0].mxu0 %v2107
        %v2329 = vpop.f32.mrb[0].mxu0
        %v2330 = vadd.f32 0.0, %v2329
        %v2331 = vpop.f32.mrb[0].mxu0
        %2332 = vmatprep.mubr.f32.mxu0 0.0
        %2333 = vmatmul.mubr.f32.gmra.mrb[0].mxu0 %v2109
        %v2334 = vpop.f32.mrb[0].mxu0
        %v2335 = vadd.f32 0.0, %v2334
        %v2336 = vpop.f32.mrb[0].mxu0
        %2337 = vmatprep.mubr.f32.mxu0 0.0
        %2338 = vmatmul.mubr.f32.gmra.mrb[0].mxu0 %v2111
        %v2339 = vpop.f32.mrb[0].mxu0
        %v2340 = vadd.f32 0.0, %v2339
        %v2341 = vpop.f32.mrb[0].mxu0
        %2342 = vmatprep.mubr.f32.mxu0 0.0
        %2343 = vmatmul.mubr.f32.gmra.mrb[0].mxu0 %v2113
        %v2344 = vpop.f32.mrb[0].mxu0
        %v2345 = vadd.f32 0.0, %v2344
        %v2346 = vpop.f32.mrb[0].mxu0
        %2347 = vmatprep.mubr.f32.mxu0 0.0
        %2348 = vmatmul.mubr.f32.gmra.mrb[0].mxu0 %v2115
        %v2349 = vpop.f32.mrb[0].mxu0
        %v2350 = vadd.f32 0.0, %v2349
        %v2351 = vpop.f32.mrb[0].mxu0
        %2352 = vmatprep.mubr.f32.mxu0 0.0
        %2353 = vmatmul.mubr.f32.gmra.mrb[0].mxu0 %v2117
        %v2354 = vpop.f32.mrb[0].mxu0
        %v2355 = vadd.f32 0.0, %v2354
        %v2356 = vpop.f32.mrb[0].mxu0
        %2357 = vmatprep.mubr.f32.mxu0 0.0
        %2358 = vmatmul.mubr.f32.gmra.mrb[0].mxu0 %v2119
        %v2359 = vpop.f32.mrb[0].mxu0
        %v2360 = vadd.f32 0.0, %v2359
        %v2361 = vpop.f32.mrb[0].mxu0
        %2362 = vmatprep.mubr.f32.mxu0 0.0
        %2363 = vmatmul.mubr.f32.gmra.mrb[0].mxu0 %v2121
        %v2364 = vpop.f32.mrb[0].mxu0
        %v2365 = vadd.f32 0.0, %v2364
        %v2366 = vpop.f32.mrb[0].mxu0
        %2367 = vdwg.mxu0
        %vm2368 = vcmask 1046528
        %v2369 = vrot.slane %v1896, 1
        %v2370 = vrot.slane %v1897, 1
        %v2371 = vsel %vm2368, %v2369, %v2370
        %v2372 = vrot.slane %v1898, 1
        %v2373 = vsel %vm2368, %v2370, %v2372
        %v2374 = vrot.slane %v1899, 1
        %v2375 = vsel %vm2368, %v2372, %v2374
        %v2376 = vrot.slane %v1900, 1
        %v2377 = vsel %vm2368, %v2374, %v2376
        %v2378 = vrot.slane %v1901, 1
        %v2379 = vsel %vm2368, %v2376, %v2378
        %v2380 = vrot.slane %v1902, 1
        %v2381 = vsel %vm2368, %v2378, %v2380
        %v2382 = vrot.slane %v1903, 1
        %v2383 = vsel %vm2368, %v2380, %v2382
        %v2384 = vrot.slane %v1904, 1
        %v2385 = vsel %vm2368, %v2382, %v2384
        %v2386 = vrot.slane %v1905, 1
        %v2387 = vsel %vm2368, %v2384, %v2386
        %v2388 = vrot.slane %v1906, 1
        %v2389 = vsel %vm2368, %v2386, %v2388
        %v2390 = vrot.slane %v1907, 1
        %v2391 = vsel %vm2368, %v2388, %v2390
        %v2392 = vrot.slane %v1908, 1
        %v2393 = vsel %vm2368, %v2390, %v2392
        %v2394 = vrot.slane %v1909, 1
        %v2395 = vsel %vm2368, %v2392, %v2394
        %v2396 = vrot.slane %v1910, 1
        %v2397 = vsel %vm2368, %v2394, %v2396
        %v2398 = vrot.slane %v1911, 1
        %v2399 = vsel %vm2368, %v2396, %v2398
        %v2400 = vrot.slane %v1912, 1
        %v2401 = vsel %vm2368, %v2398, %v2400
        %v2402 = vrot.slane %v1913, 1
        %v2403 = vsel %vm2368, %v2400, %v2402
        %v2404 = vrot.slane %v1914, 1
        %v2405 = vsel %vm2368, %v2402, %v2404
        %v2406 = vrot.slane %v1915, 1
        %v2407 = vsel %vm2368, %v2404, %v2406
        %v2408 = vrot.slane %v1916, 1
        %v2409 = vsel %vm2368, %v2406, %v2408
        %v2410 = vrot.slane %v1917, 1
        %v2411 = vsel %vm2368, %v2408, %v2410
        %v2412 = vrot.slane %v1918, 1
        %v2413 = vsel %vm2368, %v2410, %v2412
        %v2414 = vrot.slane %v1919, 1
        %v2415 = vsel %vm2368, %v2412, %v2414
        %v2416 = vrot.slane %v1920, 1
        %v2417 = vsel %vm2368, %v2414, %v2416
        %v2418 = vrot.slane %v1921, 1
        %v2419 = vsel %vm2368, %v2416, %v2418
        %v2420 = vrot.slane %v1922, 1
        %v2421 = vsel %vm2368, %v2418, %v2420
        %v2422 = vrot.slane %v1923, 1
        %v2423 = vsel %vm2368, %v2420, %v2422
        %v2424 = vrot.slane %v1924, 1
        %v2425 = vsel %vm2368, %v2422, %v2424
        %v2426 = vrot.slane %v1925, 1
        %v2427 = vsel %vm2368, %v2424, %v2426
        %v2428 = vrot.slane %v1926, 1
        %v2429 = vsel %vm2368, %v2426, %v2428
        %v2430 = vrot.slane %v1927, 1
        %v2431 = vsel %vm2368, %v2428, %v2430
        %v2432 = vrot.slane %v1928, 1
        %v2433 = vsel %vm2368, %v2430, %v2432
        %v2434 = vrot.slane %v1929, 1
        %v2435 = vsel %vm2368, %v2432, %v2434
        %v2436 = vrot.slane %v1930, 1
        %v2437 = vsel %vm2368, %v2434, %v2436
        %v2438 = vrot.slane %v1931, 1
        %v2439 = vsel %vm2368, %v2436, %v2438
        %v2440 = vrot.slane %v1932, 1
        %v2441 = vsel %vm2368, %v2438, %v2440
        %v2442 = vsel %vm838, %v2371, 0
        %v2444 = vsel %vm838, %v2373, 0
        %v2446 = vsel %vm838, %v2375, 0
        %v2448 = vsel %vm838, %v2377, 0
        %v2450 = vsel %vm838, %v2379, 0
        %v2452 = vsel %vm838, %v2381, 0
        %v2454 = vsel %vm838, %v2383, 0
        %v2456 = vsel %vm838, %v2385, 0
        %v2458 = vsel %vm838, %v2387, 0
        %v2460 = vsel %vm838, %v2389, 0
        %v2462 = vsel %vm838, %v2391, 0
        %v2464 = vsel %vm838, %v2393, 0
        %v2466 = vsel %vm838, %v2395, 0
        %v2468 = vsel %vm838, %v2397, 0
        %v2470 = vsel %vm838, %v2399, 0
        %v2472 = vsel %vm838, %v2401, 0
        %v2474 = vsel %vm838, %v2403, 0
        %v2476 = vsel %vm838, %v2405, 0
        %v2478 = vsel %vm838, %v2407, 0
        %v2480 = vsel %vm838, %v2409, 0
        %v2482 = vsel %vm838, %v2411, 0
        %v2484 = vsel %vm838, %v2413, 0
        %v2486 = vsel %vm838, %v2415, 0
        %v2488 = vsel %vm838, %v2417, 0
        %v2490 = vsel %vm838, %v2419, 0
        %v2492 = vsel %vm838, %v2421, 0
        %v2494 = vsel %vm838, %v2423, 0
        %v2496 = vsel %vm838, %v2425, 0
        %v2498 = vsel %vm838, %v2427, 0
        %v2500 = vsel %vm838, %v2429, 0
        %v2502 = vsel %vm838, %v2431, 0
        %v2504 = vsel %vm838, %v2433, 0
        %v2506 = vsel %vm838, %v2435, 0
        %v2508 = vsel %vm838, %v2437, 0
        %v2510 = vsel %vm838, %v2439, 0
        %v2512 = vsel %vm838, %v2441, 0
        %2514 = vmatprep.subr.mxu0 0.0
        %2515 = vmatpush1.msra.mxu0 %v1937
        %2516 = vmatprep.subr.mxu0 0.0
        %2517 = vmatpush1.msra.mxu0 0.0
        %2518 = vmatprep.subr.mxu0 0.0
        %2519 = vmatpush1.msra.mxu0 0.0
        %2520 = vmatprep.subr.mxu0 0.0
        %2521 = vmatpush1.msra.mxu0 0.0
        %2522 = vmatprep.subr.mxu0 0.0
        %2523 = vmatpush1.msra.mxu0 0.0
        %2524 = vmatprep.subr.mxu0 0.0
        %2525 = vmatpush1.msra.mxu0 0.0
        %2526 = vmatprep.subr.mxu0 0.0
        %2527 = vmatpush1.msra.mxu0 0.0
        %2528 = vmatprep.subr.mxu0 0.0
        %2529 = vmatpush1.msra.mxu0 0.0
        %2530 = vmatprep.subr.mxu0 0.0
        %2531 = vmatpush1.msra.mxu0 0.0
        %2532 = vmatprep.subr.mxu0 0.0
        %2533 = vmatpush1.msra.mxu0 0.0
        %2534 = vmatprep.subr.mxu0 0.0
        %2535 = vmatpush1.msra.mxu0 0.0
        %2536 = vmatprep.subr.mxu0 0.0
        %2537 = vmatpush1.msra.mxu0 0.0
        %2538 = vmatprep.subr.mxu0 0.0
        %2539 = vmatpush1.msra.mxu0 0.0
        %2540 = vmatprep.subr.mxu0 0.0
        %2541 = vmatpush1.msra.mxu0 0.0
        %2542 = vmatprep.subr.mxu0 0.0
        %2543 = vmatpush1.msra.mxu0 0.0
        %2544 = vmatprep.subr.mxu0 0.0
        %2545 = vmatpush1.msra.mxu0 0.0
        %2546 = vmatprep.subr.mxu0 0.0
        %2547 = vmatpush1.msra.mxu0 0.0
        %2548 = vmatprep.subr.mxu0 0.0
        %2549 = vmatpush1.msra.mxu0 0.0
        %2550 = vmatprep.subr.mxu0 0.0
        %2551 = vmatpush1.msra.mxu0 0.0
        %2552 = vmatprep.subr.mxu0 0.0
        %2553 = vmatpush1.msra.mxu0 0.0
        %2554 = vmatprep.subr.mxu0 0.0
        %2555 = vmatpush1.msra.mxu0 0.0
        %2556 = vmatprep.subr.mxu0 0.0
        %2557 = vmatpush1.msra.mxu0 0.0
        %2558 = vmatprep.subr.mxu0 0.0
        %2559 = vmatpush1.msra.mxu0 0.0
        %2560 = vmatprep.subr.mxu0 0.0
        %2561 = vmatpush1.msra.mxu0 0.0
        %2562 = vmatprep.subr.mxu0 0.0
        %2563 = vmatpush1.msra.mxu0 0.0
        %2564 = vmatprep.subr.mxu0 0.0
        %2565 = vmatpush1.msra.mxu0 0.0
        %2566 = vmatprep.subr.mxu0 0.0
        %2567 = vmatpush1.msra.mxu0 0.0
        %2568 = vmatprep.subr.mxu0 0.0
        %2569 = vmatpush1.msra.mxu0 0.0
        %2570 = vmatprep.subr.mxu0 0.0
        %2571 = vmatpush1.msra.mxu0 0.0
        %2572 = vmatprep.subr.mxu0 0.0
        %2573 = vmatpush1.msra.mxu0 0.0
        %2574 = vmatprep.subr.mxu0 0.0
        %2575 = vmatpush1.msra.mxu0 0.0
        %2576 = vmatprep.subr.mxu0 0.0
        %2577 = vmatpush1.msra.mxu0 0.0
        %2578 = vmatprep.mubr.f32.mxu0 0.0
        %2579 = vmatmul.mubr.f32.gmra.mrb[0].mxu0 %v2442
        %v2580 = vpop.f32.mrb[0].mxu0
        %v2581 = vadd.f32 %v2190, %v2580
        %v2582 = vpop.f32.mrb[0].mxu0
        %2583 = vmatprep.mubr.f32.mxu0 0.0
        %2584 = vmatmul.mubr.f32.gmra.mrb[0].mxu0 %v2444
        %v2585 = vpop.f32.mrb[0].mxu0
        %v2586 = vadd.f32 %v2195, %v2585
        %v2587 = vpop.f32.mrb[0].mxu0
        %2588 = vmatprep.mubr.f32.mxu0 0.0
        %2589 = vmatmul.mubr.f32.gmra.mrb[0].mxu0 %v2446
        %v2590 = vpop.f32.mrb[0].mxu0
        %v2591 = vadd.f32 %v2200, %v2590
        %v2592 = vpop.f32.mrb[0].mxu0
        %2593 = vmatprep.mubr.f32.mxu0 0.0
        %2594 = vmatmul.mubr.f32.gmra.mrb[0].mxu0 %v2448
        %v2595 = vpop.f32.mrb[0].mxu0
        %v2596 = vadd.f32 %v2205, %v2595
        %v2597 = vpop.f32.mrb[0].mxu0
        %2598 = vmatprep.mubr.f32.mxu0 0.0
        %2599 = vmatmul.mubr.f32.gmra.mrb[0].mxu0 %v2450
        %v2600 = vpop.f32.mrb[0].mxu0
        %v2601 = vadd.f32 %v2210, %v2600
        %v2602 = vpop.f32.mrb[0].mxu0
        %2603 = vmatprep.mubr.f32.mxu0 0.0
        %2604 = vmatmul.mubr.f32.gmra.mrb[0].mxu0 %v2452
        %v2605 = vpop.f32.mrb[0].mxu0
        %v2606 = vadd.f32 %v2215, %v2605
        %v2607 = vpop.f32.mrb[0].mxu0
        %2608 = vmatprep.mubr.f32.mxu0 0.0
        %2609 = vmatmul.mubr.f32.gmra.mrb[0].mxu0 %v2454
        %v2610 = vpop.f32.mrb[0].mxu0
        %v2611 = vadd.f32 %v2220, %v2610
        %v2612 = vpop.f32.mrb[0].mxu0
        %2613 = vmatprep.mubr.f32.mxu0 0.0
        %2614 = vmatmul.mubr.f32.gmra.mrb[0].mxu0 %v2456
        %v2615 = vpop.f32.mrb[0].mxu0
        %v2616 = vadd.f32 %v2225, %v2615
        %v2617 = vpop.f32.mrb[0].mxu0
        %2618 = vmatprep.mubr.f32.mxu0 0.0
        %2619 = vmatmul.mubr.f32.gmra.mrb[0].mxu0 %v2458
        %v2620 = vpop.f32.mrb[0].mxu0
        %v2621 = vadd.f32 %v2230, %v2620
        %v2622 = vpop.f32.mrb[0].mxu0
        %2623 = vmatprep.mubr.f32.mxu0 0.0
        %2624 = vmatmul.mubr.f32.gmra.mrb[0].mxu0 %v2460
        %v2625 = vpop.f32.mrb[0].mxu0
        %v2626 = vadd.f32 %v2235, %v2625
        %v2627 = vpop.f32.mrb[0].mxu0
        %2628 = vmatprep.mubr.f32.mxu0 0.0
        %2629 = vmatmul.mubr.f32.gmra.mrb[0].mxu0 %v2462
        %v2630 = vpop.f32.mrb[0].mxu0
        %v2631 = vadd.f32 %v2240, %v2630
        %v2632 = vpop.f32.mrb[0].mxu0
        %2633 = vmatprep.mubr.f32.mxu0 0.0
        %2634 = vmatmul.mubr.f32.gmra.mrb[0].mxu0 %v2464
        %v2635 = vpop.f32.mrb[0].mxu0
        %v2636 = vadd.f32 %v2245, %v2635
        %v2637 = vpop.f32.mrb[0].mxu0
        %2638 = vmatprep.mubr.f32.mxu0 0.0
        %2639 = vmatmul.mubr.f32.gmra.mrb[0].mxu0 %v2466
        %v2640 = vpop.f32.mrb[0].mxu0
        %v2641 = vadd.f32 %v2250, %v2640
        %v2642 = vpop.f32.mrb[0].mxu0
        %2643 = vmatprep.mubr.f32.mxu0 0.0
        %2644 = vmatmul.mubr.f32.gmra.mrb[0].mxu0 %v2468
        %v2645 = vpop.f32.mrb[0].mxu0
        %v2646 = vadd.f32 %v2255, %v2645
        %v2647 = vpop.f32.mrb[0].mxu0
        %2648 = vmatprep.mubr.f32.mxu0 0.0
        %2649 = vmatmul.mubr.f32.gmra.mrb[0].mxu0 %v2470
        %v2650 = vpop.f32.mrb[0].mxu0
        %v2651 = vadd.f32 %v2260, %v2650
        %v2652 = vpop.f32.mrb[0].mxu0
        %2653 = vmatprep.mubr.f32.mxu0 0.0
        %2654 = vmatmul.mubr.f32.gmra.mrb[0].mxu0 %v2472
        %v2655 = vpop.f32.mrb[0].mxu0
        %v2656 = vadd.f32 %v2265, %v2655
        %v2657 = vpop.f32.mrb[0].mxu0
        %2658 = vmatprep.mubr.f32.mxu0 0.0
        %2659 = vmatmul.mubr.f32.gmra.mrb[0].mxu0 %v2474
        %v2660 = vpop.f32.mrb[0].mxu0
        %v2661 = vadd.f32 %v2270, %v2660
        %v2662 = vpop.f32.mrb[0].mxu0
        %2663 = vmatprep.mubr.f32.mxu0 0.0
        %2664 = vmatmul.mubr.f32.gmra.mrb[0].mxu0 %v2476
        %v2665 = vpop.f32.mrb[0].mxu0
        %v2666 = vadd.f32 %v2275, %v2665
        %v2667 = vpop.f32.mrb[0].mxu0
        %2668 = vmatprep.mubr.f32.mxu0 0.0
        %2669 = vmatmul.mubr.f32.gmra.mrb[0].mxu0 %v2478
        %v2670 = vpop.f32.mrb[0].mxu0
        %v2671 = vadd.f32 %v2280, %v2670
        %v2672 = vpop.f32.mrb[0].mxu0
        %2673 = vmatprep.mubr.f32.mxu0 0.0
        %2674 = vmatmul.mubr.f32.gmra.mrb[0].mxu0 %v2480
        %v2675 = vpop.f32.mrb[0].mxu0
        %v2676 = vadd.f32 %v2285, %v2675
        %v2677 = vpop.f32.mrb[0].mxu0
        %2678 = vmatprep.mubr.f32.mxu0 0.0
        %2679 = vmatmul.mubr.f32.gmra.mrb[0].mxu0 %v2482
        %v2680 = vpop.f32.mrb[0].mxu0
        %v2681 = vadd.f32 %v2290, %v2680
        %v2682 = vpop.f32.mrb[0].mxu0
        %2683 = vmatprep.mubr.f32.mxu0 0.0
        %2684 = vmatmul.mubr.f32.gmra.mrb[0].mxu0 %v2484
        %v2685 = vpop.f32.mrb[0].mxu0
        %v2686 = vadd.f32 %v2295, %v2685
        %v2687 = vpop.f32.mrb[0].mxu0
        %2688 = vmatprep.mubr.f32.mxu0 0.0
        %2689 = vmatmul.mubr.f32.gmra.mrb[0].mxu0 %v2486
        %v2690 = vpop.f32.mrb[0].mxu0
        %v2691 = vadd.f32 %v2300, %v2690
        %v2692 = vpop.f32.mrb[0].mxu0
        %2693 = vmatprep.mubr.f32.mxu0 0.0
        %2694 = vmatmul.mubr.f32.gmra.mrb[0].mxu0 %v2488
        %v2695 = vpop.f32.mrb[0].mxu0
        %v2696 = vadd.f32 %v2305, %v2695
        %v2697 = vpop.f32.mrb[0].mxu0
        %2698 = vmatprep.mubr.f32.mxu0 0.0
        %2699 = vmatmul.mubr.f32.gmra.mrb[0].mxu0 %v2490
        %v2700 = vpop.f32.mrb[0].mxu0
        %v2701 = vadd.f32 %v2310, %v2700
        %v2702 = vpop.f32.mrb[0].mxu0
        %2703 = vmatprep.mubr.f32.mxu0 0.0
        %2704 = vmatmul.mubr.f32.gmra.mrb[0].mxu0 %v2492
        %v2705 = vpop.f32.mrb[0].mxu0
        %v2706 = vadd.f32 %v2315, %v2705
        %v2707 = vpop.f32.mrb[0].mxu0
        %2708 = vmatprep.mubr.f32.mxu0 0.0
        %2709 = vmatmul.mubr.f32.gmra.mrb[0].mxu0 %v2494
        %v2710 = vpop.f32.mrb[0].mxu0
        %v2711 = vadd.f32 %v2320, %v2710
        %v2712 = vpop.f32.mrb[0].mxu0
        %2713 = vmatprep.mubr.f32.mxu0 0.0
        %2714 = vmatmul.mubr.f32.gmra.mrb[0].mxu0 %v2496
        %v2715 = vpop.f32.mrb[0].mxu0
        %v2716 = vadd.f32 %v2325, %v2715
        %v2717 = vpop.f32.mrb[0].mxu0
        %2718 = vmatprep.mubr.f32.mxu0 0.0
        %2719 = vmatmul.mubr.f32.gmra.mrb[0].mxu0 %v2498
        %v2720 = vpop.f32.mrb[0].mxu0
        %v2721 = vadd.f32 %v2330, %v2720
        %v2722 = vpop.f32.mrb[0].mxu0
        %2723 = vmatprep.mubr.f32.mxu0 0.0
        %2724 = vmatmul.mubr.f32.gmra.mrb[0].mxu0 %v2500
        %v2725 = vpop.f32.mrb[0].mxu0
        %v2726 = vadd.f32 %v2335, %v2725
        %v2727 = vpop.f32.mrb[0].mxu0
        %2728 = vmatprep.mubr.f32.mxu0 0.0
        %2729 = vmatmul.mubr.f32.gmra.mrb[0].mxu0 %v2502
        %v2730 = vpop.f32.mrb[0].mxu0
        %v2731 = vadd.f32 %v2340, %v2730
        %v2732 = vpop.f32.mrb[0].mxu0
        %2733 = vmatprep.mubr.f32.mxu0 0.0
        %2734 = vmatmul.mubr.f32.gmra.mrb[0].mxu0 %v2504
        %v2735 = vpop.f32.mrb[0].mxu0
        %v2736 = vadd.f32 %v2345, %v2735
        %v2737 = vpop.f32.mrb[0].mxu0
        %2738 = vmatprep.mubr.f32.mxu0 0.0
        %2739 = vmatmul.mubr.f32.gmra.mrb[0].mxu0 %v2506
        %v2740 = vpop.f32.mrb[0].mxu0
        %v2741 = vadd.f32 %v2350, %v2740
        %v2742 = vpop.f32.mrb[0].mxu0
        %2743 = vmatprep.mubr.f32.mxu0 0.0
        %2744 = vmatmul.mubr.f32.gmra.mrb[0].mxu0 %v2508
        %v2745 = vpop.f32.mrb[0].mxu0
        %v2746 = vadd.f32 %v2355, %v2745
        %v2747 = vpop.f32.mrb[0].mxu0
        %2748 = vmatprep.mubr.f32.mxu0 0.0
        %2749 = vmatmul.mubr.f32.gmra.mrb[0].mxu0 %v2510
        %v2750 = vpop.f32.mrb[0].mxu0
        %v2751 = vadd.f32 %v2360, %v2750
        %v2752 = vpop.f32.mrb[0].mxu0
        %2753 = vmatprep.mubr.f32.mxu0 0.0
        %2754 = vmatmul.mubr.f32.gmra.mrb[0].mxu0 %v2512
        %v2755 = vpop.f32.mrb[0].mxu0
        %v2756 = vadd.f32 %v2365, %v2755
        %v2757 = vpop.f32.mrb[0].mxu0
        %2758 = vdwg.mxu0
        %s2759 = scalar_lea.vmem [#allocation13], 16
        %v2760 = vld [vmem:[%s2759] sm:$0xff]
        %vm2761 = vcmask 1044480
        %v2762 = vrot.slane %v1896, 3
        %v2763 = vrot.slane %v1897, 3
        %v2764 = vsel %vm2761, %v2762, %v2763
        %v2765 = vrot.slane %v1898, 3
        %v2766 = vsel %vm2761, %v2763, %v2765
        %v2767 = vrot.slane %v1899, 3
        %v2768 = vsel %vm2761, %v2765, %v2767
        %v2769 = vrot.slane %v1900, 3
        %v2770 = vsel %vm2761, %v2767, %v2769
        %v2771 = vrot.slane %v1901, 3
        %v2772 = vsel %vm2761, %v2769, %v2771
        %v2773 = vrot.slane %v1902, 3
        %v2774 = vsel %vm2761, %v2771, %v2773
        %v2775 = vrot.slane %v1903, 3
        %v2776 = vsel %vm2761, %v2773, %v2775
        %v2777 = vrot.slane %v1904, 3
        %v2778 = vsel %vm2761, %v2775, %v2777
        %v2779 = vrot.slane %v1905, 3
        %v2780 = vsel %vm2761, %v2777, %v2779
        %v2781 = vrot.slane %v1906, 3
        %v2782 = vsel %vm2761, %v2779, %v2781
        %v2783 = vrot.slane %v1907, 3
        %v2784 = vsel %vm2761, %v2781, %v2783
        %v2785 = vrot.slane %v1908, 3
        %v2786 = vsel %vm2761, %v2783, %v2785
        %v2787 = vrot.slane %v1909, 3
        %v2788 = vsel %vm2761, %v2785, %v2787
        %v2789 = vrot.slane %v1910, 3
        %v2790 = vsel %vm2761, %v2787, %v2789
        %v2791 = vrot.slane %v1911, 3
        %v2792 = vsel %vm2761, %v2789, %v2791
        %v2793 = vrot.slane %v1912, 3
        %v2794 = vsel %vm2761, %v2791, %v2793
        %v2795 = vrot.slane %v1913, 3
        %v2796 = vsel %vm2761, %v2793, %v2795
        %v2797 = vrot.slane %v1914, 3
        %v2798 = vsel %vm2761, %v2795, %v2797
        %v2799 = vrot.slane %v1915, 3
        %v2800 = vsel %vm2761, %v2797, %v2799
        %v2801 = vrot.slane %v1916, 3
        %v2802 = vsel %vm2761, %v2799, %v2801
        %v2803 = vrot.slane %v1917, 3
        %v2804 = vsel %vm2761, %v2801, %v2803
        %v2805 = vrot.slane %v1918, 3
        %v2806 = vsel %vm2761, %v2803, %v2805
        %v2807 = vrot.slane %v1919, 3
        %v2808 = vsel %vm2761, %v2805, %v2807
        %v2809 = vrot.slane %v1920, 3
        %v2810 = vsel %vm2761, %v2807, %v2809
        %v2811 = vrot.slane %v1921, 3
        %v2812 = vsel %vm2761, %v2809, %v2811
        %v2813 = vrot.slane %v1922, 3
        %v2814 = vsel %vm2761, %v2811, %v2813
        %v2815 = vrot.slane %v1923, 3
        %v2816 = vsel %vm2761, %v2813, %v2815
        %v2817 = vrot.slane %v1924, 3
        %v2818 = vsel %vm2761, %v2815, %v2817
        %v2819 = vrot.slane %v1925, 3
        %v2820 = vsel %vm2761, %v2817, %v2819
        %v2821 = vrot.slane %v1926, 3
        %v2822 = vsel %vm2761, %v2819, %v2821
        %v2823 = vrot.slane %v1927, 3
        %v2824 = vsel %vm2761, %v2821, %v2823
        %v2825 = vrot.slane %v1928, 3
        %v2826 = vsel %vm2761, %v2823, %v2825
        %v2827 = vrot.slane %v1929, 3
        %v2828 = vsel %vm2761, %v2825, %v2827
        %v2829 = vrot.slane %v1930, 3
        %v2830 = vsel %vm2761, %v2827, %v2829
        %v2831 = vrot.slane %v1931, 3
        %v2832 = vsel %vm2761, %v2829, %v2831
        %v2833 = vrot.slane %v1932, 3
        %v2834 = vsel %vm2761, %v2831, %v2833
        %v2835 = vsel %vm838, %v2764, 0
        %v2837 = vsel %vm838, %v2766, 0
        %v2839 = vsel %vm838, %v2768, 0
        %v2841 = vsel %vm838, %v2770, 0
        %v2843 = vsel %vm838, %v2772, 0
        %v2845 = vsel %vm838, %v2774, 0
        %v2847 = vsel %vm838, %v2776, 0
        %v2849 = vsel %vm838, %v2778, 0
        %v2851 = vsel %vm838, %v2780, 0
        %v2853 = vsel %vm838, %v2782, 0
        %v2855 = vsel %vm838, %v2784, 0
        %v2857 = vsel %vm838, %v2786, 0
        %v2859 = vsel %vm838, %v2788, 0
        %v2861 = vsel %vm838, %v2790, 0
        %v2863 = vsel %vm838, %v2792, 0
        %v2865 = vsel %vm838, %v2794, 0
        %v2867 = vsel %vm838, %v2796, 0
        %v2869 = vsel %vm838, %v2798, 0
        %v2871 = vsel %vm838, %v2800, 0
        %v2873 = vsel %vm838, %v2802, 0
        %v2875 = vsel %vm838, %v2804, 0
        %v2877 = vsel %vm838, %v2806, 0
        %v2879 = vsel %vm838, %v2808, 0
        %v2881 = vsel %vm838, %v2810, 0
        %v2883 = vsel %vm838, %v2812, 0
        %v2885 = vsel %vm838, %v2814, 0
        %v2887 = vsel %vm838, %v2816, 0
        %v2889 = vsel %vm838, %v2818, 0
        %v2891 = vsel %vm838, %v2820, 0
        %v2893 = vsel %vm838, %v2822, 0
        %v2895 = vsel %vm838, %v2824, 0
        %v2897 = vsel %vm838, %v2826, 0
        %v2899 = vsel %vm838, %v2828, 0
        %v2901 = vsel %vm838, %v2830, 0
        %v2903 = vsel %vm838, %v2832, 0
        %v2905 = vsel %vm838, %v2834, 0
        %2907 = vmatprep.subr.mxu0 0.0
        %2908 = vmatpush1.msra.mxu0 %v2760
        %2909 = vmatprep.subr.mxu0 0.0
        %2910 = vmatpush1.msra.mxu0 0.0
        %2911 = vmatprep.subr.mxu0 0.0
        %2912 = vmatpush1.msra.mxu0 0.0
        %2913 = vmatprep.subr.mxu0 0.0
        %2914 = vmatpush1.msra.mxu0 0.0
        %2915 = vmatprep.subr.mxu0 0.0
        %2916 = vmatpush1.msra.mxu0 0.0
        %2917 = vmatprep.subr.mxu0 0.0
        %2918 = vmatpush1.msra.mxu0 0.0
        %2919 = vmatprep.subr.mxu0 0.0
        %2920 = vmatpush1.msra.mxu0 0.0
        %2921 = vmatprep.subr.mxu0 0.0
        %2922 = vmatpush1.msra.mxu0 0.0
        %2923 = vmatprep.subr.mxu0 0.0
        %2924 = vmatpush1.msra.mxu0 0.0
        %2925 = vmatprep.subr.mxu0 0.0
        %2926 = vmatpush1.msra.mxu0 0.0
        %2927 = vmatprep.subr.mxu0 0.0
        %2928 = vmatpush1.msra.mxu0 0.0
        %2929 = vmatprep.subr.mxu0 0.0
        %2930 = vmatpush1.msra.mxu0 0.0
        %2931 = vmatprep.subr.mxu0 0.0
        %2932 = vmatpush1.msra.mxu0 0.0
        %2933 = vmatprep.subr.mxu0 0.0
        %2934 = vmatpush1.msra.mxu0 0.0
        %2935 = vmatprep.subr.mxu0 0.0
        %2936 = vmatpush1.msra.mxu0 0.0
        %2937 = vmatprep.subr.mxu0 0.0
        %2938 = vmatpush1.msra.mxu0 0.0
        %2939 = vmatprep.subr.mxu0 0.0
        %2940 = vmatpush1.msra.mxu0 0.0
        %2941 = vmatprep.subr.mxu0 0.0
        %2942 = vmatpush1.msra.mxu0 0.0
        %2943 = vmatprep.subr.mxu0 0.0
        %2944 = vmatpush1.msra.mxu0 0.0
        %2945 = vmatprep.subr.mxu0 0.0
        %2946 = vmatpush1.msra.mxu0 0.0
        %2947 = vmatprep.subr.mxu0 0.0
        %2948 = vmatpush1.msra.mxu0 0.0
        %2949 = vmatprep.subr.mxu0 0.0
        %2950 = vmatpush1.msra.mxu0 0.0
        %2951 = vmatprep.subr.mxu0 0.0
        %2952 = vmatpush1.msra.mxu0 0.0
        %2953 = vmatprep.subr.mxu0 0.0
        %2954 = vmatpush1.msra.mxu0 0.0
        %2955 = vmatprep.subr.mxu0 0.0
        %2956 = vmatpush1.msra.mxu0 0.0
        %2957 = vmatprep.subr.mxu0 0.0
        %2958 = vmatpush1.msra.mxu0 0.0
        %2959 = vmatprep.subr.mxu0 0.0
        %2960 = vmatpush1.msra.mxu0 0.0
        %2961 = vmatprep.subr.mxu0 0.0
        %2962 = vmatpush1.msra.mxu0 0.0
        %2963 = vmatprep.subr.mxu0 0.0
        %2964 = vmatpush1.msra.mxu0 0.0
        %2965 = vmatprep.subr.mxu0 0.0
        %2966 = vmatpush1.msra.mxu0 0.0
        %2967 = vmatprep.subr.mxu0 0.0
        %2968 = vmatpush1.msra.mxu0 0.0
        %2969 = vmatprep.subr.mxu0 0.0
        %2970 = vmatpush1.msra.mxu0 0.0
        %2971 = vmatprep.mubr.f32.mxu0 0.0
        %2972 = vmatmul.mubr.f32.gmra.mrb[0].mxu0 %v2835
        %v2973 = vpop.f32.mrb[0].mxu0
        %v2974 = vadd.f32 0.0, %v2973
        %v2975 = vpop.f32.mrb[0].mxu0
        %2976 = vmatprep.mubr.f32.mxu0 0.0
        %2977 = vmatmul.mubr.f32.gmra.mrb[0].mxu0 %v2837
        %v2978 = vpop.f32.mrb[0].mxu0
        %v2979 = vadd.f32 0.0, %v2978
        %v2980 = vpop.f32.mrb[0].mxu0
        %2981 = vmatprep.mubr.f32.mxu0 0.0
        %2982 = vmatmul.mubr.f32.gmra.mrb[0].mxu0 %v2839
        %v2983 = vpop.f32.mrb[0].mxu0
        %v2984 = vadd.f32 0.0, %v2983
        %v2985 = vpop.f32.mrb[0].mxu0
        %2986 = vmatprep.mubr.f32.mxu0 0.0
        %2987 = vmatmul.mubr.f32.gmra.mrb[0].mxu0 %v2841
        %v2988 = vpop.f32.mrb[0].mxu0
        %v2989 = vadd.f32 0.0, %v2988
        %v2990 = vpop.f32.mrb[0].mxu0
        %2991 = vmatprep.mubr.f32.mxu0 0.0
        %2992 = vmatmul.mubr.f32.gmra.mrb[0].mxu0 %v2843
        %v2993 = vpop.f32.mrb[0].mxu0
        %v2994 = vadd.f32 0.0, %v2993
        %v2995 = vpop.f32.mrb[0].mxu0
        %2996 = vmatprep.mubr.f32.mxu0 0.0
        %2997 = vmatmul.mubr.f32.gmra.mrb[0].mxu0 %v2845
        %v2998 = vpop.f32.mrb[0].mxu0
        %v2999 = vadd.f32 0.0, %v2998
        %v3000 = vpop.f32.mrb[0].mxu0
        %3001 = vmatprep.mubr.f32.mxu0 0.0
        %3002 = vmatmul.mubr.f32.gmra.mrb[0].mxu0 %v2847
        %v3003 = vpop.f32.mrb[0].mxu0
        %v3004 = vadd.f32 0.0, %v3003
        %v3005 = vpop.f32.mrb[0].mxu0
        %3006 = vmatprep.mubr.f32.mxu0 0.0
        %3007 = vmatmul.mubr.f32.gmra.mrb[0].mxu0 %v2849
        %v3008 = vpop.f32.mrb[0].mxu0
        %v3009 = vadd.f32 0.0, %v3008
        %v3010 = vpop.f32.mrb[0].mxu0
        %3011 = vmatprep.mubr.f32.mxu0 0.0
        %3012 = vmatmul.mubr.f32.gmra.mrb[0].mxu0 %v2851
        %v3013 = vpop.f32.mrb[0].mxu0
        %v3014 = vadd.f32 0.0, %v3013
        %v3015 = vpop.f32.mrb[0].mxu0
        %3016 = vmatprep.mubr.f32.mxu0 0.0
        %3017 = vmatmul.mubr.f32.gmra.mrb[0].mxu0 %v2853
        %v3018 = vpop.f32.mrb[0].mxu0
        %v3019 = vadd.f32 0.0, %v3018
        %v3020 = vpop.f32.mrb[0].mxu0
        %3021 = vmatprep.mubr.f32.mxu0 0.0
        %3022 = vmatmul.mubr.f32.gmra.mrb[0].mxu0 %v2855
        %v3023 = vpop.f32.mrb[0].mxu0
        %v3024 = vadd.f32 0.0, %v3023
        %v3025 = vpop.f32.mrb[0].mxu0
        %3026 = vmatprep.mubr.f32.mxu0 0.0
        %3027 = vmatmul.mubr.f32.gmra.mrb[0].mxu0 %v2857
        %v3028 = vpop.f32.mrb[0].mxu0
        %v3029 = vadd.f32 0.0, %v3028
        %v3030 = vpop.f32.mrb[0].mxu0
        %3031 = vmatprep.mubr.f32.mxu0 0.0
        %3032 = vmatmul.mubr.f32.gmra.mrb[0].mxu0 %v2859
        %v3033 = vpop.f32.mrb[0].mxu0
        %v3034 = vadd.f32 0.0, %v3033
        %v3035 = vpop.f32.mrb[0].mxu0
        %3036 = vmatprep.mubr.f32.mxu0 0.0
        %3037 = vmatmul.mubr.f32.gmra.mrb[0].mxu0 %v2861
        %v3038 = vpop.f32.mrb[0].mxu0
        %v3039 = vadd.f32 0.0, %v3038
        %v3040 = vpop.f32.mrb[0].mxu0
        %3041 = vmatprep.mubr.f32.mxu0 0.0
        %3042 = vmatmul.mubr.f32.gmra.mrb[0].mxu0 %v2863
        %v3043 = vpop.f32.mrb[0].mxu0
        %v3044 = vadd.f32 0.0, %v3043
        %v3045 = vpop.f32.mrb[0].mxu0
        %3046 = vmatprep.mubr.f32.mxu0 0.0
        %3047 = vmatmul.mubr.f32.gmra.mrb[0].mxu0 %v2865
        %v3048 = vpop.f32.mrb[0].mxu0
        %v3049 = vadd.f32 0.0, %v3048
        %v3050 = vpop.f32.mrb[0].mxu0
        %3051 = vmatprep.mubr.f32.mxu0 0.0
        %3052 = vmatmul.mubr.f32.gmra.mrb[0].mxu0 %v2867
        %v3053 = vpop.f32.mrb[0].mxu0
        %v3054 = vadd.f32 0.0, %v3053
        %v3055 = vpop.f32.mrb[0].mxu0
        %3056 = vmatprep.mubr.f32.mxu0 0.0
        %3057 = vmatmul.mubr.f32.gmra.mrb[0].mxu0 %v2869
        %v3058 = vpop.f32.mrb[0].mxu0
        %v3059 = vadd.f32 0.0, %v3058
        %v3060 = vpop.f32.mrb[0].mxu0
        %3061 = vmatprep.mubr.f32.mxu0 0.0
        %3062 = vmatmul.mubr.f32.gmra.mrb[0].mxu0 %v2871
        %v3063 = vpop.f32.mrb[0].mxu0
        %v3064 = vadd.f32 0.0, %v3063
        %v3065 = vpop.f32.mrb[0].mxu0
        %3066 = vmatprep.mubr.f32.mxu0 0.0
        %3067 = vmatmul.mubr.f32.gmra.mrb[0].mxu0 %v2873
        %v3068 = vpop.f32.mrb[0].mxu0
        %v3069 = vadd.f32 0.0, %v3068
        %v3070 = vpop.f32.mrb[0].mxu0
        %3071 = vmatprep.mubr.f32.mxu0 0.0
        %3072 = vmatmul.mubr.f32.gmra.mrb[0].mxu0 %v2875
        %v3073 = vpop.f32.mrb[0].mxu0
        %v3074 = vadd.f32 0.0, %v3073
        %v3075 = vpop.f32.mrb[0].mxu0
        %3076 = vmatprep.mubr.f32.mxu0 0.0
        %3077 = vmatmul.mubr.f32.gmra.mrb[0].mxu0 %v2877
        %v3078 = vpop.f32.mrb[0].mxu0
        %v3079 = vadd.f32 0.0, %v3078
        %v3080 = vpop.f32.mrb[0].mxu0
        %3081 = vmatprep.mubr.f32.mxu0 0.0
        %3082 = vmatmul.mubr.f32.gmra.mrb[0].mxu0 %v2879
        %v3083 = vpop.f32.mrb[0].mxu0
        %v3084 = vadd.f32 0.0, %v3083
        %v3085 = vpop.f32.mrb[0].mxu0
        %3086 = vmatprep.mubr.f32.mxu0 0.0
        %3087 = vmatmul.mubr.f32.gmra.mrb[0].mxu0 %v2881
        %v3088 = vpop.f32.mrb[0].mxu0
        %v3089 = vadd.f32 0.0, %v3088
        %v3090 = vpop.f32.mrb[0].mxu0
        %3091 = vmatprep.mubr.f32.mxu0 0.0
        %3092 = vmatmul.mubr.f32.gmra.mrb[0].mxu0 %v2883
        %v3093 = vpop.f32.mrb[0].mxu0
        %v3094 = vadd.f32 0.0, %v3093
        %v3095 = vpop.f32.mrb[0].mxu0
        %3096 = vmatprep.mubr.f32.mxu0 0.0
        %3097 = vmatmul.mubr.f32.gmra.mrb[0].mxu0 %v2885
        %v3098 = vpop.f32.mrb[0].mxu0
        %v3099 = vadd.f32 0.0, %v3098
        %v3100 = vpop.f32.mrb[0].mxu0
        %3101 = vmatprep.mubr.f32.mxu0 0.0
        %3102 = vmatmul.mubr.f32.gmra.mrb[0].mxu0 %v2887
        %v3103 = vpop.f32.mrb[0].mxu0
        %v3104 = vadd.f32 0.0, %v3103
        %v3105 = vpop.f32.mrb[0].mxu0
        %3106 = vmatprep.mubr.f32.mxu0 0.0
        %3107 = vmatmul.mubr.f32.gmra.mrb[0].mxu0 %v2889
        %v3108 = vpop.f32.mrb[0].mxu0
        %v3109 = vadd.f32 0.0, %v3108
        %v3110 = vpop.f32.mrb[0].mxu0
        %3111 = vmatprep.mubr.f32.mxu0 0.0
        %3112 = vmatmul.mubr.f32.gmra.mrb[0].mxu0 %v2891
        %v3113 = vpop.f32.mrb[0].mxu0
        %v3114 = vadd.f32 0.0, %v3113
        %v3115 = vpop.f32.mrb[0].mxu0
        %3116 = vmatprep.mubr.f32.mxu0 0.0
        %3117 = vmatmul.mubr.f32.gmra.mrb[0].mxu0 %v2893
        %v3118 = vpop.f32.mrb[0].mxu0
        %v3119 = vadd.f32 0.0, %v3118
        %v3120 = vpop.f32.mrb[0].mxu0
        %3121 = vmatprep.mubr.f32.mxu0 0.0
        %3122 = vmatmul.mubr.f32.gmra.mrb[0].mxu0 %v2895
        %v3123 = vpop.f32.mrb[0].mxu0
        %v3124 = vadd.f32 0.0, %v3123
        %v3125 = vpop.f32.mrb[0].mxu0
        %3126 = vmatprep.mubr.f32.mxu0 0.0
        %3127 = vmatmul.mubr.f32.gmra.mrb[0].mxu0 %v2897
        %v3128 = vpop.f32.mrb[0].mxu0
        %v3129 = vadd.f32 0.0, %v3128
        %v3130 = vpop.f32.mrb[0].mxu0
        %3131 = vmatprep.mubr.f32.mxu0 0.0
        %3132 = vmatmul.mubr.f32.gmra.mrb[0].mxu0 %v2899
        %v3133 = vpop.f32.mrb[0].mxu0
        %v3134 = vadd.f32 0.0, %v3133
        %v3135 = vpop.f32.mrb[0].mxu0
        %3136 = vmatprep.mubr.f32.mxu0 0.0
        %3137 = vmatmul.mubr.f32.gmra.mrb[0].mxu0 %v2901
        %v3138 = vpop.f32.mrb[0].mxu0
        %v3139 = vadd.f32 0.0, %v3138
        %v3140 = vpop.f32.mrb[0].mxu0
        %3141 = vmatprep.mubr.f32.mxu0 0.0
        %3142 = vmatmul.mubr.f32.gmra.mrb[0].mxu0 %v2903
        %v3143 = vpop.f32.mrb[0].mxu0
        %v3144 = vadd.f32 0.0, %v3143
        %v3145 = vpop.f32.mrb[0].mxu0
        %3146 = vmatprep.mubr.f32.mxu0 0.0
        %3147 = vmatmul.mubr.f32.gmra.mrb[0].mxu0 %v2905
        %v3148 = vpop.f32.mrb[0].mxu0
        %v3149 = vadd.f32 0.0, %v3148
        %v3150 = vpop.f32.mrb[0].mxu0
        %3151 = vdwg.mxu0
        %v3152 = vadd.f32 %v2581, %v2974
        %v3153 = vadd.f32 %v2586, %v2979
        %v3154 = vadd.f32 %v2591, %v2984
        %v3155 = vadd.f32 %v2596, %v2989
        %v3156 = vadd.f32 %v2601, %v2994
        %v3157 = vadd.f32 %v2606, %v2999
        %v3158 = vadd.f32 %v2611, %v3004
        %v3159 = vadd.f32 %v2616, %v3009
        %v3160 = vadd.f32 %v2621, %v3014
        %v3161 = vadd.f32 %v2626, %v3019
        %v3162 = vadd.f32 %v2631, %v3024
        %v3163 = vadd.f32 %v2636, %v3029
        %v3164 = vadd.f32 %v2641, %v3034
        %v3165 = vadd.f32 %v2646, %v3039
        %v3166 = vadd.f32 %v2651, %v3044
        %v3167 = vadd.f32 %v2656, %v3049
        %v3168 = vadd.f32 %v2661, %v3054
        %v3169 = vadd.f32 %v2666, %v3059
        %v3170 = vadd.f32 %v2671, %v3064
        %v3171 = vadd.f32 %v2676, %v3069
        %v3172 = vadd.f32 %v2681, %v3074
        %v3173 = vadd.f32 %v2686, %v3079
        %v3174 = vadd.f32 %v2691, %v3084
        %v3175 = vadd.f32 %v2696, %v3089
        %v3176 = vadd.f32 %v2701, %v3094
        %v3177 = vadd.f32 %v2706, %v3099
        %v3178 = vadd.f32 %v2711, %v3104
        %v3179 = vadd.f32 %v2716, %v3109
        %v3180 = vadd.f32 %v2721, %v3114
        %v3181 = vadd.f32 %v2726, %v3119
        %v3182 = vadd.f32 %v2731, %v3124
        %v3183 = vadd.f32 %v2736, %v3129
        %v3184 = vadd.f32 %v2741, %v3134
        %v3185 = vadd.f32 %v2746, %v3139
        %v3186 = vadd.f32 %v2751, %v3144
        %v3187 = vadd.f32 %v2756, %v3149
        %s3188 = scalar_lea.vmem [#allocation13], 24
        %v3189 = vld [vmem:[%s3188] sm:$0xff]
        %v3192 = vrot.slane %v1933, 3
        %v3193 = vsel %vm2761, %v2833, %v3192
        %v3194 = vrot.slane %v1934, 3
        %v3195 = vsel %vm2761, %v3192, %v3194
        %v3196 = vsel %vm838, %v3193, 0
        %v3198 = vsel %vm838, %v3195, 0
        %3200 = vmatprep.subr.mxu0 0.0
        %3201 = vmatpush1.msra.mxu0 %v3189
        %3202 = vmatprep.subr.mxu0 0.0
        %3203 = vmatpush1.msra.mxu0 0.0
        %3204 = vmatprep.subr.mxu0 0.0
        %3205 = vmatpush1.msra.mxu0 0.0
        %3206 = vmatprep.subr.mxu0 0.0
        %3207 = vmatpush1.msra.mxu0 0.0
        %3208 = vmatprep.subr.mxu0 0.0
        %3209 = vmatpush1.msra.mxu0 0.0
        %3210 = vmatprep.subr.mxu0 0.0
        %3211 = vmatpush1.msra.mxu0 0.0
        %3212 = vmatprep.subr.mxu0 0.0
        %3213 = vmatpush1.msra.mxu0 0.0
        %3214 = vmatprep.subr.mxu0 0.0
        %3215 = vmatpush1.msra.mxu0 0.0
        %3216 = vmatprep.subr.mxu0 0.0
        %3217 = vmatpush1.msra.mxu0 0.0
        %3218 = vmatprep.subr.mxu0 0.0
        %3219 = vmatpush1.msra.mxu0 0.0
        %3220 = vmatprep.subr.mxu0 0.0
        %3221 = vmatpush1.msra.mxu0 0.0
        %3222 = vmatprep.subr.mxu0 0.0
        %3223 = vmatpush1.msra.mxu0 0.0
        %3224 = vmatprep.subr.mxu0 0.0
        %3225 = vmatpush1.msra.mxu0 0.0
        %3226 = vmatprep.subr.mxu0 0.0
        %3227 = vmatpush1.msra.mxu0 0.0
        %3228 = vmatprep.subr.mxu0 0.0
        %3229 = vmatpush1.msra.mxu0 0.0
        %3230 = vmatprep.subr.mxu0 0.0
        %3231 = vmatpush1.msra.mxu0 0.0
        %3232 = vmatprep.subr.mxu0 0.0
        %3233 = vmatpush1.msra.mxu0 0.0
        %3234 = vmatprep.subr.mxu0 0.0
        %3235 = vmatpush1.msra.mxu0 0.0
        %3236 = vmatprep.subr.mxu0 0.0
        %3237 = vmatpush1.msra.mxu0 0.0
        %3238 = vmatprep.subr.mxu0 0.0
        %3239 = vmatpush1.msra.mxu0 0.0
        %3240 = vmatprep.subr.mxu0 0.0
        %3241 = vmatpush1.msra.mxu0 0.0
        %3242 = vmatprep.subr.mxu0 0.0
        %3243 = vmatpush1.msra.mxu0 0.0
        %3244 = vmatprep.subr.mxu0 0.0
        %3245 = vmatpush1.msra.mxu0 0.0
        %3246 = vmatprep.subr.mxu0 0.0
        %3247 = vmatpush1.msra.mxu0 0.0
        %3248 = vmatprep.subr.mxu0 0.0
        %3249 = vmatpush1.msra.mxu0 0.0
        %3250 = vmatprep.subr.mxu0 0.0
        %3251 = vmatpush1.msra.mxu0 0.0
        %3252 = vmatprep.subr.mxu0 0.0
        %3253 = vmatpush1.msra.mxu0 0.0
        %3254 = vmatprep.subr.mxu0 0.0
        %3255 = vmatpush1.msra.mxu0 0.0
        %3256 = vmatprep.subr.mxu0 0.0
        %3257 = vmatpush1.msra.mxu0 0.0
        %3258 = vmatprep.subr.mxu0 0.0
        %3259 = vmatpush1.msra.mxu0 0.0
        %3260 = vmatprep.subr.mxu0 0.0
        %3261 = vmatpush1.msra.mxu0 0.0
        %3262 = vmatprep.subr.mxu0 0.0
        %3263 = vmatpush1.msra.mxu0 0.0
        %3264 = vmatprep.mubr.f32.mxu0 0.0
        %3265 = vmatmul.mubr.f32.gmra.mrb[0].mxu0 %v2839
        %v3266 = vpop.f32.mrb[0].mxu0
        %v3267 = vadd.f32 0.0, %v3266
        %v3268 = vpop.f32.mrb[0].mxu0
        %3269 = vmatprep.mubr.f32.mxu0 0.0
        %3270 = vmatmul.mubr.f32.gmra.mrb[0].mxu0 %v2841
        %v3271 = vpop.f32.mrb[0].mxu0
        %v3272 = vadd.f32 0.0, %v3271
        %v3273 = vpop.f32.mrb[0].mxu0
        %3274 = vmatprep.mubr.f32.mxu0 0.0
        %3275 = vmatmul.mubr.f32.gmra.mrb[0].mxu0 %v2843
        %v3276 = vpop.f32.mrb[0].mxu0
        %v3277 = vadd.f32 0.0, %v3276
        %v3278 = vpop.f32.mrb[0].mxu0
        %3279 = vmatprep.mubr.f32.mxu0 0.0
        %3280 = vmatmul.mubr.f32.gmra.mrb[0].mxu0 %v2845
        %v3281 = vpop.f32.mrb[0].mxu0
        %v3282 = vadd.f32 0.0, %v3281
        %v3283 = vpop.f32.mrb[0].mxu0
        %3284 = vmatprep.mubr.f32.mxu0 0.0
        %3285 = vmatmul.mubr.f32.gmra.mrb[0].mxu0 %v2847
        %v3286 = vpop.f32.mrb[0].mxu0
        %v3287 = vadd.f32 0.0, %v3286
        %v3288 = vpop.f32.mrb[0].mxu0
        %3289 = vmatprep.mubr.f32.mxu0 0.0
        %3290 = vmatmul.mubr.f32.gmra.mrb[0].mxu0 %v2849
        %v3291 = vpop.f32.mrb[0].mxu0
        %v3292 = vadd.f32 0.0, %v3291
        %v3293 = vpop.f32.mrb[0].mxu0
        %3294 = vmatprep.mubr.f32.mxu0 0.0
        %3295 = vmatmul.mubr.f32.gmra.mrb[0].mxu0 %v2851
        %v3296 = vpop.f32.mrb[0].mxu0
        %v3297 = vadd.f32 0.0, %v3296
        %v3298 = vpop.f32.mrb[0].mxu0
        %3299 = vmatprep.mubr.f32.mxu0 0.0
        %3300 = vmatmul.mubr.f32.gmra.mrb[0].mxu0 %v2853
        %v3301 = vpop.f32.mrb[0].mxu0
        %v3302 = vadd.f32 0.0, %v3301
        %v3303 = vpop.f32.mrb[0].mxu0
        %3304 = vmatprep.mubr.f32.mxu0 0.0
        %3305 = vmatmul.mubr.f32.gmra.mrb[0].mxu0 %v2855
        %v3306 = vpop.f32.mrb[0].mxu0
        %v3307 = vadd.f32 0.0, %v3306
        %v3308 = vpop.f32.mrb[0].mxu0
        %3309 = vmatprep.mubr.f32.mxu0 0.0
        %3310 = vmatmul.mubr.f32.gmra.mrb[0].mxu0 %v2857
        %v3311 = vpop.f32.mrb[0].mxu0
        %v3312 = vadd.f32 0.0, %v3311
        %v3313 = vpop.f32.mrb[0].mxu0
        %3314 = vmatprep.mubr.f32.mxu0 0.0
        %3315 = vmatmul.mubr.f32.gmra.mrb[0].mxu0 %v2859
        %v3316 = vpop.f32.mrb[0].mxu0
        %v3317 = vadd.f32 0.0, %v3316
        %v3318 = vpop.f32.mrb[0].mxu0
        %3319 = vmatprep.mubr.f32.mxu0 0.0
        %3320 = vmatmul.mubr.f32.gmra.mrb[0].mxu0 %v2861
        %v3321 = vpop.f32.mrb[0].mxu0
        %v3322 = vadd.f32 0.0, %v3321
        %v3323 = vpop.f32.mrb[0].mxu0
        %3324 = vmatprep.mubr.f32.mxu0 0.0
        %3325 = vmatmul.mubr.f32.gmra.mrb[0].mxu0 %v2863
        %v3326 = vpop.f32.mrb[0].mxu0
        %v3327 = vadd.f32 0.0, %v3326
        %v3328 = vpop.f32.mrb[0].mxu0
        %3329 = vmatprep.mubr.f32.mxu0 0.0
        %3330 = vmatmul.mubr.f32.gmra.mrb[0].mxu0 %v2865
        %v3331 = vpop.f32.mrb[0].mxu0
        %v3332 = vadd.f32 0.0, %v3331
        %v3333 = vpop.f32.mrb[0].mxu0
        %3334 = vmatprep.mubr.f32.mxu0 0.0
        %3335 = vmatmul.mubr.f32.gmra.mrb[0].mxu0 %v2867
        %v3336 = vpop.f32.mrb[0].mxu0
        %v3337 = vadd.f32 0.0, %v3336
        %v3338 = vpop.f32.mrb[0].mxu0
        %3339 = vmatprep.mubr.f32.mxu0 0.0
        %3340 = vmatmul.mubr.f32.gmra.mrb[0].mxu0 %v2869
        %v3341 = vpop.f32.mrb[0].mxu0
        %v3342 = vadd.f32 0.0, %v3341
        %v3343 = vpop.f32.mrb[0].mxu0
        %3344 = vmatprep.mubr.f32.mxu0 0.0
        %3345 = vmatmul.mubr.f32.gmra.mrb[0].mxu0 %v2871
        %v3346 = vpop.f32.mrb[0].mxu0
        %v3347 = vadd.f32 0.0, %v3346
        %v3348 = vpop.f32.mrb[0].mxu0
        %3349 = vmatprep.mubr.f32.mxu0 0.0
        %3350 = vmatmul.mubr.f32.gmra.mrb[0].mxu0 %v2873
        %v3351 = vpop.f32.mrb[0].mxu0
        %v3352 = vadd.f32 0.0, %v3351
        %v3353 = vpop.f32.mrb[0].mxu0
        %3354 = vmatprep.mubr.f32.mxu0 0.0
        %3355 = vmatmul.mubr.f32.gmra.mrb[0].mxu0 %v2875
        %v3356 = vpop.f32.mrb[0].mxu0
        %v3357 = vadd.f32 0.0, %v3356
        %v3358 = vpop.f32.mrb[0].mxu0
        %3359 = vmatprep.mubr.f32.mxu0 0.0
        %3360 = vmatmul.mubr.f32.gmra.mrb[0].mxu0 %v2877
        %v3361 = vpop.f32.mrb[0].mxu0
        %v3362 = vadd.f32 0.0, %v3361
        %v3363 = vpop.f32.mrb[0].mxu0
        %3364 = vmatprep.mubr.f32.mxu0 0.0
        %3365 = vmatmul.mubr.f32.gmra.mrb[0].mxu0 %v2879
        %v3366 = vpop.f32.mrb[0].mxu0
        %v3367 = vadd.f32 0.0, %v3366
        %v3368 = vpop.f32.mrb[0].mxu0
        %3369 = vmatprep.mubr.f32.mxu0 0.0
        %3370 = vmatmul.mubr.f32.gmra.mrb[0].mxu0 %v2881
        %v3371 = vpop.f32.mrb[0].mxu0
        %v3372 = vadd.f32 0.0, %v3371
        %v3373 = vpop.f32.mrb[0].mxu0
        %3374 = vmatprep.mubr.f32.mxu0 0.0
        %3375 = vmatmul.mubr.f32.gmra.mrb[0].mxu0 %v2883
        %v3376 = vpop.f32.mrb[0].mxu0
        %v3377 = vadd.f32 0.0, %v3376
        %v3378 = vpop.f32.mrb[0].mxu0
        %3379 = vmatprep.mubr.f32.mxu0 0.0
        %3380 = vmatmul.mubr.f32.gmra.mrb[0].mxu0 %v2885
        %v3381 = vpop.f32.mrb[0].mxu0
        %v3382 = vadd.f32 0.0, %v3381
        %v3383 = vpop.f32.mrb[0].mxu0
        %3384 = vmatprep.mubr.f32.mxu0 0.0
        %3385 = vmatmul.mubr.f32.gmra.mrb[0].mxu0 %v2887
        %v3386 = vpop.f32.mrb[0].mxu0
        %v3387 = vadd.f32 0.0, %v3386
        %v3388 = vpop.f32.mrb[0].mxu0
        %3389 = vmatprep.mubr.f32.mxu0 0.0
        %3390 = vmatmul.mubr.f32.gmra.mrb[0].mxu0 %v2889
        %v3391 = vpop.f32.mrb[0].mxu0
        %v3392 = vadd.f32 0.0, %v3391
        %v3393 = vpop.f32.mrb[0].mxu0
        %3394 = vmatprep.mubr.f32.mxu0 0.0
        %3395 = vmatmul.mubr.f32.gmra.mrb[0].mxu0 %v2891
        %v3396 = vpop.f32.mrb[0].mxu0
        %v3397 = vadd.f32 0.0, %v3396
        %v3398 = vpop.f32.mrb[0].mxu0
        %3399 = vmatprep.mubr.f32.mxu0 0.0
        %3400 = vmatmul.mubr.f32.gmra.mrb[0].mxu0 %v2893
        %v3401 = vpop.f32.mrb[0].mxu0
        %v3402 = vadd.f32 0.0, %v3401
        %v3403 = vpop.f32.mrb[0].mxu0
        %3404 = vmatprep.mubr.f32.mxu0 0.0
        %3405 = vmatmul.mubr.f32.gmra.mrb[0].mxu0 %v2895
        %v3406 = vpop.f32.mrb[0].mxu0
        %v3407 = vadd.f32 0.0, %v3406
        %v3408 = vpop.f32.mrb[0].mxu0
        %3409 = vmatprep.mubr.f32.mxu0 0.0
        %3410 = vmatmul.mubr.f32.gmra.mrb[0].mxu0 %v2897
        %v3411 = vpop.f32.mrb[0].mxu0
        %v3412 = vadd.f32 0.0, %v3411
        %v3413 = vpop.f32.mrb[0].mxu0
        %3414 = vmatprep.mubr.f32.mxu0 0.0
        %3415 = vmatmul.mubr.f32.gmra.mrb[0].mxu0 %v2899
        %v3416 = vpop.f32.mrb[0].mxu0
        %v3417 = vadd.f32 0.0, %v3416
        %v3418 = vpop.f32.mrb[0].mxu0
        %3419 = vmatprep.mubr.f32.mxu0 0.0
        %3420 = vmatmul.mubr.f32.gmra.mrb[0].mxu0 %v2901
        %v3421 = vpop.f32.mrb[0].mxu0
        %v3422 = vadd.f32 0.0, %v3421
        %v3423 = vpop.f32.mrb[0].mxu0
        %3424 = vmatprep.mubr.f32.mxu0 0.0
        %3425 = vmatmul.mubr.f32.gmra.mrb[0].mxu0 %v2903
        %v3426 = vpop.f32.mrb[0].mxu0
        %v3427 = vadd.f32 0.0, %v3426
        %v3428 = vpop.f32.mrb[0].mxu0
        %3429 = vmatprep.mubr.f32.mxu0 0.0
        %3430 = vmatmul.mubr.f32.gmra.mrb[0].mxu0 %v2905
        %v3431 = vpop.f32.mrb[0].mxu0
        %v3432 = vadd.f32 0.0, %v3431
        %v3433 = vpop.f32.mrb[0].mxu0
        %3434 = vmatprep.mubr.f32.mxu0 0.0
        %3435 = vmatmul.mubr.f32.gmra.mrb[0].mxu0 %v3196
        %v3436 = vpop.f32.mrb[0].mxu0
        %v3437 = vadd.f32 0.0, %v3436
        %v3438 = vpop.f32.mrb[0].mxu0
        %3439 = vmatprep.mubr.f32.mxu0 0.0
        %3440 = vmatmul.mubr.f32.gmra.mrb[0].mxu0 %v3198
        %v3441 = vpop.f32.mrb[0].mxu0
        %v3442 = vadd.f32 0.0, %v3441
        %v3443 = vpop.f32.mrb[0].mxu0
        %3444 = vdwg.mxu0
        %v3445 = vadd.f32 %v3152, %v3267
        %v3446 = vadd.f32 %v3153, %v3272
        %v3447 = vadd.f32 %v3154, %v3277
        %v3448 = vadd.f32 %v3155, %v3282
        %v3449 = vadd.f32 %v3156, %v3287
        %v3450 = vadd.f32 %v3157, %v3292
        %v3451 = vadd.f32 %v3158, %v3297
        %v3452 = vadd.f32 %v3159, %v3302
        %v3453 = vadd.f32 %v3160, %v3307
        %v3454 = vadd.f32 %v3161, %v3312
        %v3455 = vadd.f32 %v3162, %v3317
        %v3456 = vadd.f32 %v3163, %v3322
        %v3457 = vadd.f32 %v3164, %v3327
        %v3458 = vadd.f32 %v3165, %v3332
        %v3459 = vadd.f32 %v3166, %v3337
        %v3460 = vadd.f32 %v3167, %v3342
        %v3461 = vadd.f32 %v3168, %v3347
        %v3462 = vadd.f32 %v3169, %v3352
        %v3463 = vadd.f32 %v3170, %v3357
        %v3464 = vadd.f32 %v3171, %v3362
        %v3465 = vadd.f32 %v3172, %v3367
        %v3466 = vadd.f32 %v3173, %v3372
        %v3467 = vadd.f32 %v3174, %v3377
        %v3468 = vadd.f32 %v3175, %v3382
        %v3469 = vadd.f32 %v3176, %v3387
        %v3470 = vadd.f32 %v3177, %v3392
        %v3471 = vadd.f32 %v3178, %v3397
        %v3472 = vadd.f32 %v3179, %v3402
        %v3473 = vadd.f32 %v3180, %v3407
        %v3474 = vadd.f32 %v3181, %v3412
        %v3475 = vadd.f32 %v3182, %v3417
        %v3476 = vadd.f32 %v3183, %v3422
        %v3477 = vadd.f32 %v3184, %v3427
        %v3478 = vadd.f32 %v3185, %v3432
        %v3479 = vadd.f32 %v3186, %v3437
        %v3480 = vadd.f32 %v3187, %v3442
        %s3481 = scalar_lea.vmem [#allocation13], 32
        %v3482 = vld [vmem:[%s3481] sm:$0xff]
        %v3483 = vrot.slane %v1898, 4
        %v3484 = vrot.slane %v1899, 4
        %v3485 = vsel %vm1011, %v3483, %v3484
        %v3486 = vrot.slane %v1900, 4
        %v3487 = vsel %vm1011, %v3484, %v3486
        %v3488 = vrot.slane %v1901, 4
        %v3489 = vsel %vm1011, %v3486, %v3488
        %v3490 = vrot.slane %v1902, 4
        %v3491 = vsel %vm1011, %v3488, %v3490
        %v3492 = vrot.slane %v1903, 4
        %v3493 = vsel %vm1011, %v3490, %v3492
        %v3494 = vrot.slane %v1904, 4
        %v3495 = vsel %vm1011, %v3492, %v3494
        %v3496 = vrot.slane %v1905, 4
        %v3497 = vsel %vm1011, %v3494, %v3496
        %v3498 = vrot.slane %v1906, 4
        %v3499 = vsel %vm1011, %v3496, %v3498
        %v3500 = vrot.slane %v1907, 4
        %v3501 = vsel %vm1011, %v3498, %v3500
        %v3502 = vrot.slane %v1908, 4
        %v3503 = vsel %vm1011, %v3500, %v3502
        %v3504 = vrot.slane %v1909, 4
        %v3505 = vsel %vm1011, %v3502, %v3504
        %v3506 = vrot.slane %v1910, 4
        %v3507 = vsel %vm1011, %v3504, %v3506
        %v3508 = vrot.slane %v1911, 4
        %v3509 = vsel %vm1011, %v3506, %v3508
        %v3510 = vrot.slane %v1912, 4
        %v3511 = vsel %vm1011, %v3508, %v3510
        %v3512 = vrot.slane %v1913, 4
        %v3513 = vsel %vm1011, %v3510, %v3512
        %v3514 = vrot.slane %v1914, 4
        %v3515 = vsel %vm1011, %v3512, %v3514
        %v3516 = vrot.slane %v1915, 4
        %v3517 = vsel %vm1011, %v3514, %v3516
        %v3518 = vrot.slane %v1916, 4
        %v3519 = vsel %vm1011, %v3516, %v3518
        %v3520 = vrot.slane %v1917, 4
        %v3521 = vsel %vm1011, %v3518, %v3520
        %v3522 = vrot.slane %v1918, 4
        %v3523 = vsel %vm1011, %v3520, %v3522
        %v3524 = vrot.slane %v1919, 4
        %v3525 = vsel %vm1011, %v3522, %v3524
        %v3526 = vrot.slane %v1920, 4
        %v3527 = vsel %vm1011, %v3524, %v3526
        %v3528 = vrot.slane %v1921, 4
        %v3529 = vsel %vm1011, %v3526, %v3528
        %v3530 = vrot.slane %v1922, 4
        %v3531 = vsel %vm1011, %v3528, %v3530
        %v3532 = vrot.slane %v1923, 4
        %v3533 = vsel %vm1011, %v3530, %v3532
        %v3534 = vrot.slane %v1924, 4
        %v3535 = vsel %vm1011, %v3532, %v3534
        %v3536 = vrot.slane %v1925, 4
        %v3537 = vsel %vm1011, %v3534, %v3536
        %v3538 = vrot.slane %v1926, 4
        %v3539 = vsel %vm1011, %v3536, %v3538
        %v3540 = vrot.slane %v1927, 4
        %v3541 = vsel %vm1011, %v3538, %v3540
        %v3542 = vrot.slane %v1928, 4
        %v3543 = vsel %vm1011, %v3540, %v3542
        %v3544 = vrot.slane %v1929, 4
        %v3545 = vsel %vm1011, %v3542, %v3544
        %v3546 = vrot.slane %v1930, 4
        %v3547 = vsel %vm1011, %v3544, %v3546
        %v3548 = vrot.slane %v1931, 4
        %v3549 = vsel %vm1011, %v3546, %v3548
        %v3550 = vrot.slane %v1932, 4
        %v3551 = vsel %vm1011, %v3548, %v3550
        %v3552 = vrot.slane %v1933, 4
        %v3553 = vsel %vm1011, %v3550, %v3552
        %v3554 = vrot.slane %v1934, 4
        %v3555 = vsel %vm1011, %v3552, %v3554
        %v3556 = vsel %vm838, %v3485, 0
        %v3558 = vsel %vm838, %v3487, 0
        %v3560 = vsel %vm838, %v3489, 0
        %v3562 = vsel %vm838, %v3491, 0
        %v3564 = vsel %vm838, %v3493, 0
        %v3566 = vsel %vm838, %v3495, 0
        %v3568 = vsel %vm838, %v3497, 0
        %v3570 = vsel %vm838, %v3499, 0
        %v3572 = vsel %vm838, %v3501, 0
        %v3574 = vsel %vm838, %v3503, 0
        %v3576 = vsel %vm838, %v3505, 0
        %v3578 = vsel %vm838, %v3507, 0
        %v3580 = vsel %vm838, %v3509, 0
        %v3582 = vsel %vm838, %v3511, 0
        %v3584 = vsel %vm838, %v3513, 0
        %v3586 = vsel %vm838, %v3515, 0
        %v3588 = vsel %vm838, %v3517, 0
        %v3590 = vsel %vm838, %v3519, 0
        %v3592 = vsel %vm838, %v3521, 0
        %v3594 = vsel %vm838, %v3523, 0
        %v3596 = vsel %vm838, %v3525, 0
        %v3598 = vsel %vm838, %v3527, 0
        %v3600 = vsel %vm838, %v3529, 0
        %v3602 = vsel %vm838, %v3531, 0
        %v3604 = vsel %vm838, %v3533, 0
        %v3606 = vsel %vm838, %v3535, 0
        %v3608 = vsel %vm838, %v3537, 0
        %v3610 = vsel %vm838, %v3539, 0
        %v3612 = vsel %vm838, %v3541, 0
        %v3614 = vsel %vm838, %v3543, 0
        %v3616 = vsel %vm838, %v3545, 0
        %v3618 = vsel %vm838, %v3547, 0
        %v3620 = vsel %vm838, %v3549, 0
        %v3622 = vsel %vm838, %v3551, 0
        %v3624 = vsel %vm838, %v3553, 0
        %v3626 = vsel %vm838, %v3555, 0
        %3628 = vmatprep.subr.mxu0 0.0
        %3629 = vmatpush1.msra.mxu0 %v3482
        %3630 = vmatprep.subr.mxu0 0.0
        %3631 = vmatpush1.msra.mxu0 0.0
        %3632 = vmatprep.subr.mxu0 0.0
        %3633 = vmatpush1.msra.mxu0 0.0
        %3634 = vmatprep.subr.mxu0 0.0
        %3635 = vmatpush1.msra.mxu0 0.0
        %3636 = vmatprep.subr.mxu0 0.0
        %3637 = vmatpush1.msra.mxu0 0.0
        %3638 = vmatprep.subr.mxu0 0.0
        %3639 = vmatpush1.msra.mxu0 0.0
        %3640 = vmatprep.subr.mxu0 0.0
        %3641 = vmatpush1.msra.mxu0 0.0
        %3642 = vmatprep.subr.mxu0 0.0
        %3643 = vmatpush1.msra.mxu0 0.0
        %3644 = vmatprep.subr.mxu0 0.0
        %3645 = vmatpush1.msra.mxu0 0.0
        %3646 = vmatprep.subr.mxu0 0.0
        %3647 = vmatpush1.msra.mxu0 0.0
        %3648 = vmatprep.subr.mxu0 0.0
        %3649 = vmatpush1.msra.mxu0 0.0
        %3650 = vmatprep.subr.mxu0 0.0
        %3651 = vmatpush1.msra.mxu0 0.0
        %3652 = vmatprep.subr.mxu0 0.0
        %3653 = vmatpush1.msra.mxu0 0.0
        %3654 = vmatprep.subr.mxu0 0.0
        %3655 = vmatpush1.msra.mxu0 0.0
        %3656 = vmatprep.subr.mxu0 0.0
        %3657 = vmatpush1.msra.mxu0 0.0
        %3658 = vmatprep.subr.mxu0 0.0
        %3659 = vmatpush1.msra.mxu0 0.0
        %3660 = vmatprep.subr.mxu0 0.0
        %3661 = vmatpush1.msra.mxu0 0.0
        %3662 = vmatprep.subr.mxu0 0.0
        %3663 = vmatpush1.msra.mxu0 0.0
        %3664 = vmatprep.subr.mxu0 0.0
        %3665 = vmatpush1.msra.mxu0 0.0
        %3666 = vmatprep.subr.mxu0 0.0
        %3667 = vmatpush1.msra.mxu0 0.0
        %3668 = vmatprep.subr.mxu0 0.0
        %3669 = vmatpush1.msra.mxu0 0.0
        %3670 = vmatprep.subr.mxu0 0.0
        %3671 = vmatpush1.msra.mxu0 0.0
        %3672 = vmatprep.subr.mxu0 0.0
        %3673 = vmatpush1.msra.mxu0 0.0
        %3674 = vmatprep.subr.mxu0 0.0
        %3675 = vmatpush1.msra.mxu0 0.0
        %3676 = vmatprep.subr.mxu0 0.0
        %3677 = vmatpush1.msra.mxu0 0.0
        %3678 = vmatprep.subr.mxu0 0.0
        %3679 = vmatpush1.msra.mxu0 0.0
        %3680 = vmatprep.subr.mxu0 0.0
        %3681 = vmatpush1.msra.mxu0 0.0
        %3682 = vmatprep.subr.mxu0 0.0
        %3683 = vmatpush1.msra.mxu0 0.0
        %3684 = vmatprep.subr.mxu0 0.0
        %3685 = vmatpush1.msra.mxu0 0.0
        %3686 = vmatprep.subr.mxu0 0.0
        %3687 = vmatpush1.msra.mxu0 0.0
        %3688 = vmatprep.subr.mxu0 0.0
        %3689 = vmatpush1.msra.mxu0 0.0
        %3690 = vmatprep.subr.mxu0 0.0
        %3691 = vmatpush1.msra.mxu0 0.0
        %3692 = vmatprep.mubr.f32.mxu0 0.0
        %3693 = vmatmul.mubr.f32.gmra.mrb[0].mxu0 %v3556
        %v3694 = vpop.f32.mrb[0].mxu0
        %v3695 = vadd.f32 0.0, %v3694
        %v3696 = vpop.f32.mrb[0].mxu0
        %3697 = vmatprep.mubr.f32.mxu0 0.0
        %3698 = vmatmul.mubr.f32.gmra.mrb[0].mxu0 %v3558
        %v3699 = vpop.f32.mrb[0].mxu0
        %v3700 = vadd.f32 0.0, %v3699
        %v3701 = vpop.f32.mrb[0].mxu0
        %3702 = vmatprep.mubr.f32.mxu0 0.0
        %3703 = vmatmul.mubr.f32.gmra.mrb[0].mxu0 %v3560
        %v3704 = vpop.f32.mrb[0].mxu0
        %v3705 = vadd.f32 0.0, %v3704
        %v3706 = vpop.f32.mrb[0].mxu0
        %3707 = vmatprep.mubr.f32.mxu0 0.0
        %3708 = vmatmul.mubr.f32.gmra.mrb[0].mxu0 %v3562
        %v3709 = vpop.f32.mrb[0].mxu0
        %v3710 = vadd.f32 0.0, %v3709
        %v3711 = vpop.f32.mrb[0].mxu0
        %3712 = vmatprep.mubr.f32.mxu0 0.0
        %3713 = vmatmul.mubr.f32.gmra.mrb[0].mxu0 %v3564
        %v3714 = vpop.f32.mrb[0].mxu0
        %v3715 = vadd.f32 0.0, %v3714
        %v3716 = vpop.f32.mrb[0].mxu0
        %3717 = vmatprep.mubr.f32.mxu0 0.0
        %3718 = vmatmul.mubr.f32.gmra.mrb[0].mxu0 %v3566
        %v3719 = vpop.f32.mrb[0].mxu0
        %v3720 = vadd.f32 0.0, %v3719
        %v3721 = vpop.f32.mrb[0].mxu0
        %3722 = vmatprep.mubr.f32.mxu0 0.0
        %3723 = vmatmul.mubr.f32.gmra.mrb[0].mxu0 %v3568
        %v3724 = vpop.f32.mrb[0].mxu0
        %v3725 = vadd.f32 0.0, %v3724
        %v3726 = vpop.f32.mrb[0].mxu0
        %3727 = vmatprep.mubr.f32.mxu0 0.0
        %3728 = vmatmul.mubr.f32.gmra.mrb[0].mxu0 %v3570
        %v3729 = vpop.f32.mrb[0].mxu0
        %v3730 = vadd.f32 0.0, %v3729
        %v3731 = vpop.f32.mrb[0].mxu0
        %3732 = vmatprep.mubr.f32.mxu0 0.0
        %3733 = vmatmul.mubr.f32.gmra.mrb[0].mxu0 %v3572
        %v3734 = vpop.f32.mrb[0].mxu0
        %v3735 = vadd.f32 0.0, %v3734
        %v3736 = vpop.f32.mrb[0].mxu0
        %3737 = vmatprep.mubr.f32.mxu0 0.0
        %3738 = vmatmul.mubr.f32.gmra.mrb[0].mxu0 %v3574
        %v3739 = vpop.f32.mrb[0].mxu0
        %v3740 = vadd.f32 0.0, %v3739
        %v3741 = vpop.f32.mrb[0].mxu0
        %3742 = vmatprep.mubr.f32.mxu0 0.0
        %3743 = vmatmul.mubr.f32.gmra.mrb[0].mxu0 %v3576
        %v3744 = vpop.f32.mrb[0].mxu0
        %v3745 = vadd.f32 0.0, %v3744
        %v3746 = vpop.f32.mrb[0].mxu0
        %3747 = vmatprep.mubr.f32.mxu0 0.0
        %3748 = vmatmul.mubr.f32.gmra.mrb[0].mxu0 %v3578
        %v3749 = vpop.f32.mrb[0].mxu0
        %v3750 = vadd.f32 0.0, %v3749
        %v3751 = vpop.f32.mrb[0].mxu0
        %3752 = vmatprep.mubr.f32.mxu0 0.0
        %3753 = vmatmul.mubr.f32.gmra.mrb[0].mxu0 %v3580
        %v3754 = vpop.f32.mrb[0].mxu0
        %v3755 = vadd.f32 0.0, %v3754
        %v3756 = vpop.f32.mrb[0].mxu0
        %3757 = vmatprep.mubr.f32.mxu0 0.0
        %3758 = vmatmul.mubr.f32.gmra.mrb[0].mxu0 %v3582
        %v3759 = vpop.f32.mrb[0].mxu0
        %v3760 = vadd.f32 0.0, %v3759
        %v3761 = vpop.f32.mrb[0].mxu0
        %3762 = vmatprep.mubr.f32.mxu0 0.0
        %3763 = vmatmul.mubr.f32.gmra.mrb[0].mxu0 %v3584
        %v3764 = vpop.f32.mrb[0].mxu0
        %v3765 = vadd.f32 0.0, %v3764
        %v3766 = vpop.f32.mrb[0].mxu0
        %3767 = vmatprep.mubr.f32.mxu0 0.0
        %3768 = vmatmul.mubr.f32.gmra.mrb[0].mxu0 %v3586
        %v3769 = vpop.f32.mrb[0].mxu0
        %v3770 = vadd.f32 0.0, %v3769
        %v3771 = vpop.f32.mrb[0].mxu0
        %3772 = vmatprep.mubr.f32.mxu0 0.0
        %3773 = vmatmul.mubr.f32.gmra.mrb[0].mxu0 %v3588
        %v3774 = vpop.f32.mrb[0].mxu0
        %v3775 = vadd.f32 0.0, %v3774
        %v3776 = vpop.f32.mrb[0].mxu0
        %3777 = vmatprep.mubr.f32.mxu0 0.0
        %3778 = vmatmul.mubr.f32.gmra.mrb[0].mxu0 %v3590
        %v3779 = vpop.f32.mrb[0].mxu0
        %v3780 = vadd.f32 0.0, %v3779
        %v3781 = vpop.f32.mrb[0].mxu0
        %3782 = vmatprep.mubr.f32.mxu0 0.0
        %3783 = vmatmul.mubr.f32.gmra.mrb[0].mxu0 %v3592
        %v3784 = vpop.f32.mrb[0].mxu0
        %v3785 = vadd.f32 0.0, %v3784
        %v3786 = vpop.f32.mrb[0].mxu0
        %3787 = vmatprep.mubr.f32.mxu0 0.0
        %3788 = vmatmul.mubr.f32.gmra.mrb[0].mxu0 %v3594
        %v3789 = vpop.f32.mrb[0].mxu0
        %v3790 = vadd.f32 0.0, %v3789
        %v3791 = vpop.f32.mrb[0].mxu0
        %3792 = vmatprep.mubr.f32.mxu0 0.0
        %3793 = vmatmul.mubr.f32.gmra.mrb[0].mxu0 %v3596
        %v3794 = vpop.f32.mrb[0].mxu0
        %v3795 = vadd.f32 0.0, %v3794
        %v3796 = vpop.f32.mrb[0].mxu0
        %3797 = vmatprep.mubr.f32.mxu0 0.0
        %3798 = vmatmul.mubr.f32.gmra.mrb[0].mxu0 %v3598
        %v3799 = vpop.f32.mrb[0].mxu0
        %v3800 = vadd.f32 0.0, %v3799
        %v3801 = vpop.f32.mrb[0].mxu0
        %3802 = vmatprep.mubr.f32.mxu0 0.0
        %3803 = vmatmul.mubr.f32.gmra.mrb[0].mxu0 %v3600
        %v3804 = vpop.f32.mrb[0].mxu0
        %v3805 = vadd.f32 0.0, %v3804
        %v3806 = vpop.f32.mrb[0].mxu0
        %3807 = vmatprep.mubr.f32.mxu0 0.0
        %3808 = vmatmul.mubr.f32.gmra.mrb[0].mxu0 %v3602
        %v3809 = vpop.f32.mrb[0].mxu0
        %v3810 = vadd.f32 0.0, %v3809
        %v3811 = vpop.f32.mrb[0].mxu0
        %3812 = vmatprep.mubr.f32.mxu0 0.0
        %3813 = vmatmul.mubr.f32.gmra.mrb[0].mxu0 %v3604
        %v3814 = vpop.f32.mrb[0].mxu0
        %v3815 = vadd.f32 0.0, %v3814
        %v3816 = vpop.f32.mrb[0].mxu0
        %3817 = vmatprep.mubr.f32.mxu0 0.0
        %3818 = vmatmul.mubr.f32.gmra.mrb[0].mxu0 %v3606
        %v3819 = vpop.f32.mrb[0].mxu0
        %v3820 = vadd.f32 0.0, %v3819
        %v3821 = vpop.f32.mrb[0].mxu0
        %3822 = vmatprep.mubr.f32.mxu0 0.0
        %3823 = vmatmul.mubr.f32.gmra.mrb[0].mxu0 %v3608
        %v3824 = vpop.f32.mrb[0].mxu0
        %v3825 = vadd.f32 0.0, %v3824
        %v3826 = vpop.f32.mrb[0].mxu0
        %3827 = vmatprep.mubr.f32.mxu0 0.0
        %3828 = vmatmul.mubr.f32.gmra.mrb[0].mxu0 %v3610
        %v3829 = vpop.f32.mrb[0].mxu0
        %v3830 = vadd.f32 0.0, %v3829
        %v3831 = vpop.f32.mrb[0].mxu0
        %3832 = vmatprep.mubr.f32.mxu0 0.0
        %3833 = vmatmul.mubr.f32.gmra.mrb[0].mxu0 %v3612
        %v3834 = vpop.f32.mrb[0].mxu0
        %v3835 = vadd.f32 0.0, %v3834
        %v3836 = vpop.f32.mrb[0].mxu0
        %3837 = vmatprep.mubr.f32.mxu0 0.0
        %3838 = vmatmul.mubr.f32.gmra.mrb[0].mxu0 %v3614
        %v3839 = vpop.f32.mrb[0].mxu0
        %v3840 = vadd.f32 0.0, %v3839
        %v3841 = vpop.f32.mrb[0].mxu0
        %3842 = vmatprep.mubr.f32.mxu0 0.0
        %3843 = vmatmul.mubr.f32.gmra.mrb[0].mxu0 %v3616
        %v3844 = vpop.f32.mrb[0].mxu0
        %v3845 = vadd.f32 0.0, %v3844
        %v3846 = vpop.f32.mrb[0].mxu0
        %3847 = vmatprep.mubr.f32.mxu0 0.0
        %3848 = vmatmul.mubr.f32.gmra.mrb[0].mxu0 %v3618
        %v3849 = vpop.f32.mrb[0].mxu0
        %v3850 = vadd.f32 0.0, %v3849
        %v3851 = vpop.f32.mrb[0].mxu0
        %3852 = vmatprep.mubr.f32.mxu0 0.0
        %3853 = vmatmul.mubr.f32.gmra.mrb[0].mxu0 %v3620
        %v3854 = vpop.f32.mrb[0].mxu0
        %v3855 = vadd.f32 0.0, %v3854
        %v3856 = vpop.f32.mrb[0].mxu0
        %3857 = vmatprep.mubr.f32.mxu0 0.0
        %3858 = vmatmul.mubr.f32.gmra.mrb[0].mxu0 %v3622
        %v3859 = vpop.f32.mrb[0].mxu0
        %v3860 = vadd.f32 0.0, %v3859
        %v3861 = vpop.f32.mrb[0].mxu0
        %3862 = vmatprep.mubr.f32.mxu0 0.0
        %3863 = vmatmul.mubr.f32.gmra.mrb[0].mxu0 %v3624
        %v3864 = vpop.f32.mrb[0].mxu0
        %v3865 = vadd.f32 0.0, %v3864
        %v3866 = vpop.f32.mrb[0].mxu0
        %3867 = vmatprep.mubr.f32.mxu0 0.0
        %3868 = vmatmul.mubr.f32.gmra.mrb[0].mxu0 %v3626
        %v3869 = vpop.f32.mrb[0].mxu0
        %v3870 = vadd.f32 0.0, %v3869
        %v3871 = vpop.f32.mrb[0].mxu0
        %3872 = vdwg.mxu0
        %v3873 = vadd.f32 %v3445, %v3695
        %v3874 = vadd.f32 %v3446, %v3700
        %v3875 = vadd.f32 %v3447, %v3705
        %v3876 = vadd.f32 %v3448, %v3710
        %v3877 = vadd.f32 %v3449, %v3715
        %v3878 = vadd.f32 %v3450, %v3720
        %v3879 = vadd.f32 %v3451, %v3725
        %v3880 = vadd.f32 %v3452, %v3730
        %v3881 = vadd.f32 %v3453, %v3735
        %v3882 = vadd.f32 %v3454, %v3740
        %v3883 = vadd.f32 %v3455, %v3745
        %v3884 = vadd.f32 %v3456, %v3750
        %v3885 = vadd.f32 %v3457, %v3755
        %v3886 = vadd.f32 %v3458, %v3760
        %v3887 = vadd.f32 %v3459, %v3765
        %v3888 = vadd.f32 %v3460, %v3770
        %v3889 = vadd.f32 %v3461, %v3775
        %v3890 = vadd.f32 %v3462, %v3780
        %v3891 = vadd.f32 %v3463, %v3785
        %v3892 = vadd.f32 %v3464, %v3790
        %v3893 = vadd.f32 %v3465, %v3795
        %v3894 = vadd.f32 %v3466, %v3800
        %v3895 = vadd.f32 %v3467, %v3805
        %v3896 = vadd.f32 %v3468, %v3810
        %v3897 = vadd.f32 %v3469, %v3815
        %v3898 = vadd.f32 %v3470, %v3820
        %v3899 = vadd.f32 %v3471, %v3825
        %v3900 = vadd.f32 %v3472, %v3830
        %v3901 = vadd.f32 %v3473, %v3835
        %v3902 = vadd.f32 %v3474, %v3840
        %v3903 = vadd.f32 %v3475, %v3845
        %v3904 = vadd.f32 %v3476, %v3850
        %v3905 = vadd.f32 %v3477, %v3855
        %v3906 = vadd.f32 %v3478, %v3860
        %v3907 = vadd.f32 %v3479, %v3865
        %v3908 = vadd.f32 %v3480, %v3870
        %s3909 = scalar_lea.vmem [#allocation13], 40
        %v3910 = vld [vmem:[%s3909] sm:$0xff]
        %vm3911 = vcmask 1042432
        %v3912 = vrot.slane %v1898, 5
        %v3913 = vrot.slane %v1899, 5
        %v3914 = vsel %vm3911, %v3912, %v3913
        %v3915 = vrot.slane %v1900, 5
        %v3916 = vsel %vm3911, %v3913, %v3915
        %v3917 = vrot.slane %v1901, 5
        %v3918 = vsel %vm3911, %v3915, %v3917
        %v3919 = vrot.slane %v1902, 5
        %v3920 = vsel %vm3911, %v3917, %v3919
        %v3921 = vrot.slane %v1903, 5
        %v3922 = vsel %vm3911, %v3919, %v3921
        %v3923 = vrot.slane %v1904, 5
        %v3924 = vsel %vm3911, %v3921, %v3923
        %v3925 = vrot.slane %v1905, 5
        %v3926 = vsel %vm3911, %v3923, %v3925
        %v3927 = vrot.slane %v1906, 5
        %v3928 = vsel %vm3911, %v3925, %v3927
        %v3929 = vrot.slane %v1907, 5
        %v3930 = vsel %vm3911, %v3927, %v3929
        %v3931 = vrot.slane %v1908, 5
        %v3932 = vsel %vm3911, %v3929, %v3931
        %v3933 = vrot.slane %v1909, 5
        %v3934 = vsel %vm3911, %v3931, %v3933
        %v3935 = vrot.slane %v1910, 5
        %v3936 = vsel %vm3911, %v3933, %v3935
        %v3937 = vrot.slane %v1911, 5
        %v3938 = vsel %vm3911, %v3935, %v3937
        %v3939 = vrot.slane %v1912, 5
        %v3940 = vsel %vm3911, %v3937, %v3939
        %v3941 = vrot.slane %v1913, 5
        %v3942 = vsel %vm3911, %v3939, %v3941
        %v3943 = vrot.slane %v1914, 5
        %v3944 = vsel %vm3911, %v3941, %v3943
        %v3945 = vrot.slane %v1915, 5
        %v3946 = vsel %vm3911, %v3943, %v3945
        %v3947 = vrot.slane %v1916, 5
        %v3948 = vsel %vm3911, %v3945, %v3947
        %v3949 = vrot.slane %v1917, 5
        %v3950 = vsel %vm3911, %v3947, %v3949
        %v3951 = vrot.slane %v1918, 5
        %v3952 = vsel %vm3911, %v3949, %v3951
        %v3953 = vrot.slane %v1919, 5
        %v3954 = vsel %vm3911, %v3951, %v3953
        %v3955 = vrot.slane %v1920, 5
        %v3956 = vsel %vm3911, %v3953, %v3955
        %v3957 = vrot.slane %v1921, 5
        %v3958 = vsel %vm3911, %v3955, %v3957
        %v3959 = vrot.slane %v1922, 5
        %v3960 = vsel %vm3911, %v3957, %v3959
        %v3961 = vrot.slane %v1923, 5
        %v3962 = vsel %vm3911, %v3959, %v3961
        %v3963 = vrot.slane %v1924, 5
        %v3964 = vsel %vm3911, %v3961, %v3963
        %v3965 = vrot.slane %v1925, 5
        %v3966 = vsel %vm3911, %v3963, %v3965
        %v3967 = vrot.slane %v1926, 5
        %v3968 = vsel %vm3911, %v3965, %v3967
        %v3969 = vrot.slane %v1927, 5
        %v3970 = vsel %vm3911, %v3967, %v3969
        %v3971 = vrot.slane %v1928, 5
        %v3972 = vsel %vm3911, %v3969, %v3971
        %v3973 = vrot.slane %v1929, 5
        %v3974 = vsel %vm3911, %v3971, %v3973
        %v3975 = vrot.slane %v1930, 5
        %v3976 = vsel %vm3911, %v3973, %v3975
        %v3977 = vrot.slane %v1931, 5
        %v3978 = vsel %vm3911, %v3975, %v3977
        %v3979 = vrot.slane %v1932, 5
        %v3980 = vsel %vm3911, %v3977, %v3979
        %v3981 = vrot.slane %v1933, 5
        %v3982 = vsel %vm3911, %v3979, %v3981
        %v3983 = vrot.slane %v1934, 5
        %v3984 = vsel %vm3911, %v3981, %v3983
        %v3985 = vsel %vm838, %v3914, 0
        %v3987 = vsel %vm838, %v3916, 0
        %v3989 = vsel %vm838, %v3918, 0
        %v3991 = vsel %vm838, %v3920, 0
        %v3993 = vsel %vm838, %v3922, 0
        %v3995 = vsel %vm838, %v3924, 0
        %v3997 = vsel %vm838, %v3926, 0
        %v3999 = vsel %vm838, %v3928, 0
        %v4001 = vsel %vm838, %v3930, 0
        %v4003 = vsel %vm838, %v3932, 0
        %v4005 = vsel %vm838, %v3934, 0
        %v4007 = vsel %vm838, %v3936, 0
        %v4009 = vsel %vm838, %v3938, 0
        %v4011 = vsel %vm838, %v3940, 0
        %v4013 = vsel %vm838, %v3942, 0
        %v4015 = vsel %vm838, %v3944, 0
        %v4017 = vsel %vm838, %v3946, 0
        %v4019 = vsel %vm838, %v3948, 0
        %v4021 = vsel %vm838, %v3950, 0
        %v4023 = vsel %vm838, %v3952, 0
        %v4025 = vsel %vm838, %v3954, 0
        %v4027 = vsel %vm838, %v3956, 0
        %v4029 = vsel %vm838, %v3958, 0
        %v4031 = vsel %vm838, %v3960, 0
        %v4033 = vsel %vm838, %v3962, 0
        %v4035 = vsel %vm838, %v3964, 0
        %v4037 = vsel %vm838, %v3966, 0
        %v4039 = vsel %vm838, %v3968, 0
        %v4041 = vsel %vm838, %v3970, 0
        %v4043 = vsel %vm838, %v3972, 0
        %v4045 = vsel %vm838, %v3974, 0
        %v4047 = vsel %vm838, %v3976, 0
        %v4049 = vsel %vm838, %v3978, 0
        %v4051 = vsel %vm838, %v3980, 0
        %v4053 = vsel %vm838, %v3982, 0
        %v4055 = vsel %vm838, %v3984, 0
        %4057 = vmatprep.subr.mxu0 0.0
        %4058 = vmatpush1.msra.mxu0 %v3910
        %4059 = vmatprep.subr.mxu0 0.0
        %4060 = vmatpush1.msra.mxu0 0.0
        %4061 = vmatprep.subr.mxu0 0.0
        %4062 = vmatpush1.msra.mxu0 0.0
        %4063 = vmatprep.subr.mxu0 0.0
        %4064 = vmatpush1.msra.mxu0 0.0
        %4065 = vmatprep.subr.mxu0 0.0
        %4066 = vmatpush1.msra.mxu0 0.0
        %4067 = vmatprep.subr.mxu0 0.0
        %4068 = vmatpush1.msra.mxu0 0.0
        %4069 = vmatprep.subr.mxu0 0.0
        %4070 = vmatpush1.msra.mxu0 0.0
        %4071 = vmatprep.subr.mxu0 0.0
        %4072 = vmatpush1.msra.mxu0 0.0
        %4073 = vmatprep.subr.mxu0 0.0
        %4074 = vmatpush1.msra.mxu0 0.0
        %4075 = vmatprep.subr.mxu0 0.0
        %4076 = vmatpush1.msra.mxu0 0.0
        %4077 = vmatprep.subr.mxu0 0.0
        %4078 = vmatpush1.msra.mxu0 0.0
        %4079 = vmatprep.subr.mxu0 0.0
        %4080 = vmatpush1.msra.mxu0 0.0
        %4081 = vmatprep.subr.mxu0 0.0
        %4082 = vmatpush1.msra.mxu0 0.0
        %4083 = vmatprep.subr.mxu0 0.0
        %4084 = vmatpush1.msra.mxu0 0.0
        %4085 = vmatprep.subr.mxu0 0.0
        %4086 = vmatpush1.msra.mxu0 0.0
        %4087 = vmatprep.subr.mxu0 0.0
        %4088 = vmatpush1.msra.mxu0 0.0
        %4089 = vmatprep.subr.mxu0 0.0
        %4090 = vmatpush1.msra.mxu0 0.0
        %4091 = vmatprep.subr.mxu0 0.0
        %4092 = vmatpush1.msra.mxu0 0.0
        %4093 = vmatprep.subr.mxu0 0.0
        %4094 = vmatpush1.msra.mxu0 0.0
        %4095 = vmatprep.subr.mxu0 0.0
        %4096 = vmatpush1.msra.mxu0 0.0
        %4097 = vmatprep.subr.mxu0 0.0
        %4098 = vmatpush1.msra.mxu0 0.0
        %4099 = vmatprep.subr.mxu0 0.0
        %4100 = vmatpush1.msra.mxu0 0.0
        %4101 = vmatprep.subr.mxu0 0.0
        %4102 = vmatpush1.msra.mxu0 0.0
        %4103 = vmatprep.subr.mxu0 0.0
        %4104 = vmatpush1.msra.mxu0 0.0
        %4105 = vmatprep.subr.mxu0 0.0
        %4106 = vmatpush1.msra.mxu0 0.0
        %4107 = vmatprep.subr.mxu0 0.0
        %4108 = vmatpush1.msra.mxu0 0.0
        %4109 = vmatprep.subr.mxu0 0.0
        %4110 = vmatpush1.msra.mxu0 0.0
        %4111 = vmatprep.subr.mxu0 0.0
        %4112 = vmatpush1.msra.mxu0 0.0
        %4113 = vmatprep.subr.mxu0 0.0
        %4114 = vmatpush1.msra.mxu0 0.0
        %4115 = vmatprep.subr.mxu0 0.0
        %4116 = vmatpush1.msra.mxu0 0.0
        %4117 = vmatprep.subr.mxu0 0.0
        %4118 = vmatpush1.msra.mxu0 0.0
        %4119 = vmatprep.subr.mxu0 0.0
        %4120 = vmatpush1.msra.mxu0 0.0
        %4121 = vmatprep.mubr.f32.mxu0 0.0
        %4122 = vmatmul.mubr.f32.gmra.mrb[0].mxu0 %v3985
        %v4123 = vpop.f32.mrb[0].mxu0
        %v4124 = vadd.f32 0.0, %v4123
        %v4125 = vpop.f32.mrb[0].mxu0
        %4126 = vmatprep.mubr.f32.mxu0 0.0
        %4127 = vmatmul.mubr.f32.gmra.mrb[0].mxu0 %v3987
        %v4128 = vpop.f32.mrb[0].mxu0
        %v4129 = vadd.f32 0.0, %v4128
        %v4130 = vpop.f32.mrb[0].mxu0
        %4131 = vmatprep.mubr.f32.mxu0 0.0
        %4132 = vmatmul.mubr.f32.gmra.mrb[0].mxu0 %v3989
        %v4133 = vpop.f32.mrb[0].mxu0
        %v4134 = vadd.f32 0.0, %v4133
        %v4135 = vpop.f32.mrb[0].mxu0
        %4136 = vmatprep.mubr.f32.mxu0 0.0
        %4137 = vmatmul.mubr.f32.gmra.mrb[0].mxu0 %v3991
        %v4138 = vpop.f32.mrb[0].mxu0
        %v4139 = vadd.f32 0.0, %v4138
        %v4140 = vpop.f32.mrb[0].mxu0
        %4141 = vmatprep.mubr.f32.mxu0 0.0
        %4142 = vmatmul.mubr.f32.gmra.mrb[0].mxu0 %v3993
        %v4143 = vpop.f32.mrb[0].mxu0
        %v4144 = vadd.f32 0.0, %v4143
        %v4145 = vpop.f32.mrb[0].mxu0
        %4146 = vmatprep.mubr.f32.mxu0 0.0
        %4147 = vmatmul.mubr.f32.gmra.mrb[0].mxu0 %v3995
        %v4148 = vpop.f32.mrb[0].mxu0
        %v4149 = vadd.f32 0.0, %v4148
        %v4150 = vpop.f32.mrb[0].mxu0
        %4151 = vmatprep.mubr.f32.mxu0 0.0
        %4152 = vmatmul.mubr.f32.gmra.mrb[0].mxu0 %v3997
        %v4153 = vpop.f32.mrb[0].mxu0
        %v4154 = vadd.f32 0.0, %v4153
        %v4155 = vpop.f32.mrb[0].mxu0
        %4156 = vmatprep.mubr.f32.mxu0 0.0
        %4157 = vmatmul.mubr.f32.gmra.mrb[0].mxu0 %v3999
        %v4158 = vpop.f32.mrb[0].mxu0
        %v4159 = vadd.f32 0.0, %v4158
        %v4160 = vpop.f32.mrb[0].mxu0
        %4161 = vmatprep.mubr.f32.mxu0 0.0
        %4162 = vmatmul.mubr.f32.gmra.mrb[0].mxu0 %v4001
        %v4163 = vpop.f32.mrb[0].mxu0
        %v4164 = vadd.f32 0.0, %v4163
        %v4165 = vpop.f32.mrb[0].mxu0
        %4166 = vmatprep.mubr.f32.mxu0 0.0
        %4167 = vmatmul.mubr.f32.gmra.mrb[0].mxu0 %v4003
        %v4168 = vpop.f32.mrb[0].mxu0
        %v4169 = vadd.f32 0.0, %v4168
        %v4170 = vpop.f32.mrb[0].mxu0
        %4171 = vmatprep.mubr.f32.mxu0 0.0
        %4172 = vmatmul.mubr.f32.gmra.mrb[0].mxu0 %v4005
        %v4173 = vpop.f32.mrb[0].mxu0
        %v4174 = vadd.f32 0.0, %v4173
        %v4175 = vpop.f32.mrb[0].mxu0
        %4176 = vmatprep.mubr.f32.mxu0 0.0
        %4177 = vmatmul.mubr.f32.gmra.mrb[0].mxu0 %v4007
        %v4178 = vpop.f32.mrb[0].mxu0
        %v4179 = vadd.f32 0.0, %v4178
        %v4180 = vpop.f32.mrb[0].mxu0
        %4181 = vmatprep.mubr.f32.mxu0 0.0
        %4182 = vmatmul.mubr.f32.gmra.mrb[0].mxu0 %v4009
        %v4183 = vpop.f32.mrb[0].mxu0
        %v4184 = vadd.f32 0.0, %v4183
        %v4185 = vpop.f32.mrb[0].mxu0
        %4186 = vmatprep.mubr.f32.mxu0 0.0
        %4187 = vmatmul.mubr.f32.gmra.mrb[0].mxu0 %v4011
        %v4188 = vpop.f32.mrb[0].mxu0
        %v4189 = vadd.f32 0.0, %v4188
        %v4190 = vpop.f32.mrb[0].mxu0
        %4191 = vmatprep.mubr.f32.mxu0 0.0
        %4192 = vmatmul.mubr.f32.gmra.mrb[0].mxu0 %v4013
        %v4193 = vpop.f32.mrb[0].mxu0
        %v4194 = vadd.f32 0.0, %v4193
        %v4195 = vpop.f32.mrb[0].mxu0
        %4196 = vmatprep.mubr.f32.mxu0 0.0
        %4197 = vmatmul.mubr.f32.gmra.mrb[0].mxu0 %v4015
        %v4198 = vpop.f32.mrb[0].mxu0
        %v4199 = vadd.f32 0.0, %v4198
        %v4200 = vpop.f32.mrb[0].mxu0
        %4201 = vmatprep.mubr.f32.mxu0 0.0
        %4202 = vmatmul.mubr.f32.gmra.mrb[0].mxu0 %v4017
        %v4203 = vpop.f32.mrb[0].mxu0
        %v4204 = vadd.f32 0.0, %v4203
        %v4205 = vpop.f32.mrb[0].mxu0
        %4206 = vmatprep.mubr.f32.mxu0 0.0
        %4207 = vmatmul.mubr.f32.gmra.mrb[0].mxu0 %v4019
        %v4208 = vpop.f32.mrb[0].mxu0
        %v4209 = vadd.f32 0.0, %v4208
        %v4210 = vpop.f32.mrb[0].mxu0
        %4211 = vmatprep.mubr.f32.mxu0 0.0
        %4212 = vmatmul.mubr.f32.gmra.mrb[0].mxu0 %v4021
        %v4213 = vpop.f32.mrb[0].mxu0
        %v4214 = vadd.f32 0.0, %v4213
        %v4215 = vpop.f32.mrb[0].mxu0
        %4216 = vmatprep.mubr.f32.mxu0 0.0
        %4217 = vmatmul.mubr.f32.gmra.mrb[0].mxu0 %v4023
        %v4218 = vpop.f32.mrb[0].mxu0
        %v4219 = vadd.f32 0.0, %v4218
        %v4220 = vpop.f32.mrb[0].mxu0
        %4221 = vmatprep.mubr.f32.mxu0 0.0
        %4222 = vmatmul.mubr.f32.gmra.mrb[0].mxu0 %v4025
        %v4223 = vpop.f32.mrb[0].mxu0
        %v4224 = vadd.f32 0.0, %v4223
        %v4225 = vpop.f32.mrb[0].mxu0
        %4226 = vmatprep.mubr.f32.mxu0 0.0
        %4227 = vmatmul.mubr.f32.gmra.mrb[0].mxu0 %v4027
        %v4228 = vpop.f32.mrb[0].mxu0
        %v4229 = vadd.f32 0.0, %v4228
        %v4230 = vpop.f32.mrb[0].mxu0
        %4231 = vmatprep.mubr.f32.mxu0 0.0
        %4232 = vmatmul.mubr.f32.gmra.mrb[0].mxu0 %v4029
        %v4233 = vpop.f32.mrb[0].mxu0
        %v4234 = vadd.f32 0.0, %v4233
        %v4235 = vpop.f32.mrb[0].mxu0
        %4236 = vmatprep.mubr.f32.mxu0 0.0
        %4237 = vmatmul.mubr.f32.gmra.mrb[0].mxu0 %v4031
        %v4238 = vpop.f32.mrb[0].mxu0
        %v4239 = vadd.f32 0.0, %v4238
        %v4240 = vpop.f32.mrb[0].mxu0
        %4241 = vmatprep.mubr.f32.mxu0 0.0
        %4242 = vmatmul.mubr.f32.gmra.mrb[0].mxu0 %v4033
        %v4243 = vpop.f32.mrb[0].mxu0
        %v4244 = vadd.f32 0.0, %v4243
        %v4245 = vpop.f32.mrb[0].mxu0
        %4246 = vmatprep.mubr.f32.mxu0 0.0
        %4247 = vmatmul.mubr.f32.gmra.mrb[0].mxu0 %v4035
        %v4248 = vpop.f32.mrb[0].mxu0
        %v4249 = vadd.f32 0.0, %v4248
        %v4250 = vpop.f32.mrb[0].mxu0
        %4251 = vmatprep.mubr.f32.mxu0 0.0
        %4252 = vmatmul.mubr.f32.gmra.mrb[0].mxu0 %v4037
        %v4253 = vpop.f32.mrb[0].mxu0
        %v4254 = vadd.f32 0.0, %v4253
        %v4255 = vpop.f32.mrb[0].mxu0
        %4256 = vmatprep.mubr.f32.mxu0 0.0
        %4257 = vmatmul.mubr.f32.gmra.mrb[0].mxu0 %v4039
        %v4258 = vpop.f32.mrb[0].mxu0
        %v4259 = vadd.f32 0.0, %v4258
        %v4260 = vpop.f32.mrb[0].mxu0
        %4261 = vmatprep.mubr.f32.mxu0 0.0
        %4262 = vmatmul.mubr.f32.gmra.mrb[0].mxu0 %v4041
        %v4263 = vpop.f32.mrb[0].mxu0
        %v4264 = vadd.f32 0.0, %v4263
        %v4265 = vpop.f32.mrb[0].mxu0
        %4266 = vmatprep.mubr.f32.mxu0 0.0
        %4267 = vmatmul.mubr.f32.gmra.mrb[0].mxu0 %v4043
        %v4268 = vpop.f32.mrb[0].mxu0
        %v4269 = vadd.f32 0.0, %v4268
        %v4270 = vpop.f32.mrb[0].mxu0
        %4271 = vmatprep.mubr.f32.mxu0 0.0
        %4272 = vmatmul.mubr.f32.gmra.mrb[0].mxu0 %v4045
        %v4273 = vpop.f32.mrb[0].mxu0
        %v4274 = vadd.f32 0.0, %v4273
        %v4275 = vpop.f32.mrb[0].mxu0
        %4276 = vmatprep.mubr.f32.mxu0 0.0
        %4277 = vmatmul.mubr.f32.gmra.mrb[0].mxu0 %v4047
        %v4278 = vpop.f32.mrb[0].mxu0
        %v4279 = vadd.f32 0.0, %v4278
        %v4280 = vpop.f32.mrb[0].mxu0
        %4281 = vmatprep.mubr.f32.mxu0 0.0
        %4282 = vmatmul.mubr.f32.gmra.mrb[0].mxu0 %v4049
        %v4283 = vpop.f32.mrb[0].mxu0
        %v4284 = vadd.f32 0.0, %v4283
        %v4285 = vpop.f32.mrb[0].mxu0
        %4286 = vmatprep.mubr.f32.mxu0 0.0
        %4287 = vmatmul.mubr.f32.gmra.mrb[0].mxu0 %v4051
        %v4288 = vpop.f32.mrb[0].mxu0
        %v4289 = vadd.f32 0.0, %v4288
        %v4290 = vpop.f32.mrb[0].mxu0
        %4291 = vmatprep.mubr.f32.mxu0 0.0
        %4292 = vmatmul.mubr.f32.gmra.mrb[0].mxu0 %v4053
        %v4293 = vpop.f32.mrb[0].mxu0
        %v4294 = vadd.f32 0.0, %v4293
        %v4295 = vpop.f32.mrb[0].mxu0
        %4296 = vmatprep.mubr.f32.mxu0 0.0
        %4297 = vmatmul.mubr.f32.gmra.mrb[0].mxu0 %v4055
        %v4298 = vpop.f32.mrb[0].mxu0
        %v4299 = vadd.f32 0.0, %v4298
        %v4300 = vpop.f32.mrb[0].mxu0
        %4301 = vdwg.mxu0
        %v4302 = vadd.f32 %v3873, %v4124
        %v4303 = vadd.f32 %v3874, %v4129
        %v4304 = vadd.f32 %v3875, %v4134
        %v4305 = vadd.f32 %v3876, %v4139
        %v4306 = vadd.f32 %v3877, %v4144
        %v4307 = vadd.f32 %v3878, %v4149
        %v4308 = vadd.f32 %v3879, %v4154
        %v4309 = vadd.f32 %v3880, %v4159
        %v4310 = vadd.f32 %v3881, %v4164
        %v4311 = vadd.f32 %v3882, %v4169
        %v4312 = vadd.f32 %v3883, %v4174
        %v4313 = vadd.f32 %v3884, %v4179
        %v4314 = vadd.f32 %v3885, %v4184
        %v4315 = vadd.f32 %v3886, %v4189
        %v4316 = vadd.f32 %v3887, %v4194
        %v4317 = vadd.f32 %v3888, %v4199
        %v4318 = vadd.f32 %v3889, %v4204
        %v4319 = vadd.f32 %v3890, %v4209
        %v4320 = vadd.f32 %v3891, %v4214
        %v4321 = vadd.f32 %v3892, %v4219
        %v4322 = vadd.f32 %v3893, %v4224
        %v4323 = vadd.f32 %v3894, %v4229
        %v4324 = vadd.f32 %v3895, %v4234
        %v4325 = vadd.f32 %v3896, %v4239
        %v4326 = vadd.f32 %v3897, %v4244
        %v4327 = vadd.f32 %v3898, %v4249
        %v4328 = vadd.f32 %v3899, %v4254
        %v4329 = vadd.f32 %v3900, %v4259
        %v4330 = vadd.f32 %v3901, %v4264
        %v4331 = vadd.f32 %v3902, %v4269
        %v4332 = vadd.f32 %v3903, %v4274
        %v4333 = vadd.f32 %v3904, %v4279
        %v4334 = vadd.f32 %v3905, %v4284
        %v4335 = vadd.f32 %v3906, %v4289
        %v4336 = vadd.f32 %v3907, %v4294
        %v4337 = vadd.f32 %v3908, %v4299
        %s4338 = scalar_lea.vmem [#allocation13], 48
        %v4339 = vld [vmem:[%s4338] sm:$0xff]
        %v4342 = vrot.slane %v1935, 5
        %v4343 = vsel %vm3911, %v3983, %v4342
        %v4344 = vrot.slane %v1936, 5
        %v4345 = vsel %vm3911, %v4342, %v4344
        %v4346 = vsel %vm838, %v4343, 0
        %v4348 = vsel %vm838, %v4345, 0
        %4350 = vmatprep.subr.mxu0 0.0
        %4351 = vmatpush1.msra.mxu0 %v4339
        %4352 = vmatprep.subr.mxu0 0.0
        %4353 = vmatpush1.msra.mxu0 0.0
        %4354 = vmatprep.subr.mxu0 0.0
        %4355 = vmatpush1.msra.mxu0 0.0
        %4356 = vmatprep.subr.mxu0 0.0
        %4357 = vmatpush1.msra.mxu0 0.0
        %4358 = vmatprep.subr.mxu0 0.0
        %4359 = vmatpush1.msra.mxu0 0.0
        %4360 = vmatprep.subr.mxu0 0.0
        %4361 = vmatpush1.msra.mxu0 0.0
        %4362 = vmatprep.subr.mxu0 0.0
        %4363 = vmatpush1.msra.mxu0 0.0
        %4364 = vmatprep.subr.mxu0 0.0
        %4365 = vmatpush1.msra.mxu0 0.0
        %4366 = vmatprep.subr.mxu0 0.0
        %4367 = vmatpush1.msra.mxu0 0.0
        %4368 = vmatprep.subr.mxu0 0.0
        %4369 = vmatpush1.msra.mxu0 0.0
        %4370 = vmatprep.subr.mxu0 0.0
        %4371 = vmatpush1.msra.mxu0 0.0
        %4372 = vmatprep.subr.mxu0 0.0
        %4373 = vmatpush1.msra.mxu0 0.0
        %4374 = vmatprep.subr.mxu0 0.0
        %4375 = vmatpush1.msra.mxu0 0.0
        %4376 = vmatprep.subr.mxu0 0.0
        %4377 = vmatpush1.msra.mxu0 0.0
        %4378 = vmatprep.subr.mxu0 0.0
        %4379 = vmatpush1.msra.mxu0 0.0
        %4380 = vmatprep.subr.mxu0 0.0
        %4381 = vmatpush1.msra.mxu0 0.0
        %4382 = vmatprep.subr.mxu0 0.0
        %4383 = vmatpush1.msra.mxu0 0.0
        %4384 = vmatprep.subr.mxu0 0.0
        %4385 = vmatpush1.msra.mxu0 0.0
        %4386 = vmatprep.subr.mxu0 0.0
        %4387 = vmatpush1.msra.mxu0 0.0
        %4388 = vmatprep.subr.mxu0 0.0
        %4389 = vmatpush1.msra.mxu0 0.0
        %4390 = vmatprep.subr.mxu0 0.0
        %4391 = vmatpush1.msra.mxu0 0.0
        %4392 = vmatprep.subr.mxu0 0.0
        %4393 = vmatpush1.msra.mxu0 0.0
        %4394 = vmatprep.subr.mxu0 0.0
        %4395 = vmatpush1.msra.mxu0 0.0
        %4396 = vmatprep.subr.mxu0 0.0
        %4397 = vmatpush1.msra.mxu0 0.0
        %4398 = vmatprep.subr.mxu0 0.0
        %4399 = vmatpush1.msra.mxu0 0.0
        %4400 = vmatprep.subr.mxu0 0.0
        %4401 = vmatpush1.msra.mxu0 0.0
        %4402 = vmatprep.subr.mxu0 0.0
        %4403 = vmatpush1.msra.mxu0 0.0
        %4404 = vmatprep.subr.mxu0 0.0
        %4405 = vmatpush1.msra.mxu0 0.0
        %4406 = vmatprep.subr.mxu0 0.0
        %4407 = vmatpush1.msra.mxu0 0.0
        %4408 = vmatprep.subr.mxu0 0.0
        %4409 = vmatpush1.msra.mxu0 0.0
        %4410 = vmatprep.subr.mxu0 0.0
        %4411 = vmatpush1.msra.mxu0 0.0
        %4412 = vmatprep.subr.mxu0 0.0
        %4413 = vmatpush1.msra.mxu0 0.0
        %4414 = vmatprep.mubr.f32.mxu0 0.0
        %4415 = vmatmul.mubr.f32.gmra.mrb[0].mxu0 %v3989
        %v4416 = vpop.f32.mrb[0].mxu0
        %v4417 = vadd.f32 0.0, %v4416
        %v4418 = vpop.f32.mrb[0].mxu0
        %4419 = vmatprep.mubr.f32.mxu0 0.0
        %4420 = vmatmul.mubr.f32.gmra.mrb[0].mxu0 %v3991
        %v4421 = vpop.f32.mrb[0].mxu0
        %v4422 = vadd.f32 0.0, %v4421
        %v4423 = vpop.f32.mrb[0].mxu0
        %4424 = vmatprep.mubr.f32.mxu0 0.0
        %4425 = vmatmul.mubr.f32.gmra.mrb[0].mxu0 %v3993
        %v4426 = vpop.f32.mrb[0].mxu0
        %v4427 = vadd.f32 0.0, %v4426
        %v4428 = vpop.f32.mrb[0].mxu0
        %4429 = vmatprep.mubr.f32.mxu0 0.0
        %4430 = vmatmul.mubr.f32.gmra.mrb[0].mxu0 %v3995
        %v4431 = vpop.f32.mrb[0].mxu0
        %v4432 = vadd.f32 0.0, %v4431
        %v4433 = vpop.f32.mrb[0].mxu0
        %4434 = vmatprep.mubr.f32.mxu0 0.0
        %4435 = vmatmul.mubr.f32.gmra.mrb[0].mxu0 %v3997
        %v4436 = vpop.f32.mrb[0].mxu0
        %v4437 = vadd.f32 0.0, %v4436
        %v4438 = vpop.f32.mrb[0].mxu0
        %4439 = vmatprep.mubr.f32.mxu0 0.0
        %4440 = vmatmul.mubr.f32.gmra.mrb[0].mxu0 %v3999
        %v4441 = vpop.f32.mrb[0].mxu0
        %v4442 = vadd.f32 0.0, %v4441
        %v4443 = vpop.f32.mrb[0].mxu0
        %4444 = vmatprep.mubr.f32.mxu0 0.0
        %4445 = vmatmul.mubr.f32.gmra.mrb[0].mxu0 %v4001
        %v4446 = vpop.f32.mrb[0].mxu0
        %v4447 = vadd.f32 0.0, %v4446
        %v4448 = vpop.f32.mrb[0].mxu0
        %4449 = vmatprep.mubr.f32.mxu0 0.0
        %4450 = vmatmul.mubr.f32.gmra.mrb[0].mxu0 %v4003
        %v4451 = vpop.f32.mrb[0].mxu0
        %v4452 = vadd.f32 0.0, %v4451
        %v4453 = vpop.f32.mrb[0].mxu0
        %4454 = vmatprep.mubr.f32.mxu0 0.0
        %4455 = vmatmul.mubr.f32.gmra.mrb[0].mxu0 %v4005
        %v4456 = vpop.f32.mrb[0].mxu0
        %v4457 = vadd.f32 0.0, %v4456
        %v4458 = vpop.f32.mrb[0].mxu0
        %4459 = vmatprep.mubr.f32.mxu0 0.0
        %4460 = vmatmul.mubr.f32.gmra.mrb[0].mxu0 %v4007
        %v4461 = vpop.f32.mrb[0].mxu0
        %v4462 = vadd.f32 0.0, %v4461
        %v4463 = vpop.f32.mrb[0].mxu0
        %4464 = vmatprep.mubr.f32.mxu0 0.0
        %4465 = vmatmul.mubr.f32.gmra.mrb[0].mxu0 %v4009
        %v4466 = vpop.f32.mrb[0].mxu0
        %v4467 = vadd.f32 0.0, %v4466
        %v4468 = vpop.f32.mrb[0].mxu0
        %4469 = vmatprep.mubr.f32.mxu0 0.0
        %4470 = vmatmul.mubr.f32.gmra.mrb[0].mxu0 %v4011
        %v4471 = vpop.f32.mrb[0].mxu0
        %v4472 = vadd.f32 0.0, %v4471
        %v4473 = vpop.f32.mrb[0].mxu0
        %4474 = vmatprep.mubr.f32.mxu0 0.0
        %4475 = vmatmul.mubr.f32.gmra.mrb[0].mxu0 %v4013
        %v4476 = vpop.f32.mrb[0].mxu0
        %v4477 = vadd.f32 0.0, %v4476
        %v4478 = vpop.f32.mrb[0].mxu0
        %4479 = vmatprep.mubr.f32.mxu0 0.0
        %4480 = vmatmul.mubr.f32.gmra.mrb[0].mxu0 %v4015
        %v4481 = vpop.f32.mrb[0].mxu0
        %v4482 = vadd.f32 0.0, %v4481
        %v4483 = vpop.f32.mrb[0].mxu0
        %4484 = vmatprep.mubr.f32.mxu0 0.0
        %4485 = vmatmul.mubr.f32.gmra.mrb[0].mxu0 %v4017
        %v4486 = vpop.f32.mrb[0].mxu0
        %v4487 = vadd.f32 0.0, %v4486
        %v4488 = vpop.f32.mrb[0].mxu0
        %4489 = vmatprep.mubr.f32.mxu0 0.0
        %4490 = vmatmul.mubr.f32.gmra.mrb[0].mxu0 %v4019
        %v4491 = vpop.f32.mrb[0].mxu0
        %v4492 = vadd.f32 0.0, %v4491
        %v4493 = vpop.f32.mrb[0].mxu0
        %4494 = vmatprep.mubr.f32.mxu0 0.0
        %4495 = vmatmul.mubr.f32.gmra.mrb[0].mxu0 %v4021
        %v4496 = vpop.f32.mrb[0].mxu0
        %v4497 = vadd.f32 0.0, %v4496
        %v4498 = vpop.f32.mrb[0].mxu0
        %4499 = vmatprep.mubr.f32.mxu0 0.0
        %4500 = vmatmul.mubr.f32.gmra.mrb[0].mxu0 %v4023
        %v4501 = vpop.f32.mrb[0].mxu0
        %v4502 = vadd.f32 0.0, %v4501
        %v4503 = vpop.f32.mrb[0].mxu0
        %4504 = vmatprep.mubr.f32.mxu0 0.0
        %4505 = vmatmul.mubr.f32.gmra.mrb[0].mxu0 %v4025
        %v4506 = vpop.f32.mrb[0].mxu0
        %v4507 = vadd.f32 0.0, %v4506
        %v4508 = vpop.f32.mrb[0].mxu0
        %4509 = vmatprep.mubr.f32.mxu0 0.0
        %4510 = vmatmul.mubr.f32.gmra.mrb[0].mxu0 %v4027
        %v4511 = vpop.f32.mrb[0].mxu0
        %v4512 = vadd.f32 0.0, %v4511
        %v4513 = vpop.f32.mrb[0].mxu0
        %4514 = vmatprep.mubr.f32.mxu0 0.0
        %4515 = vmatmul.mubr.f32.gmra.mrb[0].mxu0 %v4029
        %v4516 = vpop.f32.mrb[0].mxu0
        %v4517 = vadd.f32 0.0, %v4516
        %v4518 = vpop.f32.mrb[0].mxu0
        %4519 = vmatprep.mubr.f32.mxu0 0.0
        %4520 = vmatmul.mubr.f32.gmra.mrb[0].mxu0 %v4031
        %v4521 = vpop.f32.mrb[0].mxu0
        %v4522 = vadd.f32 0.0, %v4521
        %v4523 = vpop.f32.mrb[0].mxu0
        %4524 = vmatprep.mubr.f32.mxu0 0.0
        %4525 = vmatmul.mubr.f32.gmra.mrb[0].mxu0 %v4033
        %v4526 = vpop.f32.mrb[0].mxu0
        %v4527 = vadd.f32 0.0, %v4526
        %v4528 = vpop.f32.mrb[0].mxu0
        %4529 = vmatprep.mubr.f32.mxu0 0.0
        %4530 = vmatmul.mubr.f32.gmra.mrb[0].mxu0 %v4035
        %v4531 = vpop.f32.mrb[0].mxu0
        %v4532 = vadd.f32 0.0, %v4531
        %v4533 = vpop.f32.mrb[0].mxu0
        %4534 = vmatprep.mubr.f32.mxu0 0.0
        %4535 = vmatmul.mubr.f32.gmra.mrb[0].mxu0 %v4037
        %v4536 = vpop.f32.mrb[0].mxu0
        %v4537 = vadd.f32 0.0, %v4536
        %v4538 = vpop.f32.mrb[0].mxu0
        %4539 = vmatprep.mubr.f32.mxu0 0.0
        %4540 = vmatmul.mubr.f32.gmra.mrb[0].mxu0 %v4039
        %v4541 = vpop.f32.mrb[0].mxu0
        %v4542 = vadd.f32 0.0, %v4541
        %v4543 = vpop.f32.mrb[0].mxu0
        %4544 = vmatprep.mubr.f32.mxu0 0.0
        %4545 = vmatmul.mubr.f32.gmra.mrb[0].mxu0 %v4041
        %v4546 = vpop.f32.mrb[0].mxu0
        %v4547 = vadd.f32 0.0, %v4546
        %v4548 = vpop.f32.mrb[0].mxu0
        %4549 = vmatprep.mubr.f32.mxu0 0.0
        %4550 = vmatmul.mubr.f32.gmra.mrb[0].mxu0 %v4043
        %v4551 = vpop.f32.mrb[0].mxu0
        %v4552 = vadd.f32 0.0, %v4551
        %v4553 = vpop.f32.mrb[0].mxu0
        %4554 = vmatprep.mubr.f32.mxu0 0.0
        %4555 = vmatmul.mubr.f32.gmra.mrb[0].mxu0 %v4045
        %v4556 = vpop.f32.mrb[0].mxu0
        %v4557 = vadd.f32 0.0, %v4556
        %v4558 = vpop.f32.mrb[0].mxu0
        %4559 = vmatprep.mubr.f32.mxu0 0.0
        %4560 = vmatmul.mubr.f32.gmra.mrb[0].mxu0 %v4047
        %v4561 = vpop.f32.mrb[0].mxu0
        %v4562 = vadd.f32 0.0, %v4561
        %v4563 = vpop.f32.mrb[0].mxu0
        %4564 = vmatprep.mubr.f32.mxu0 0.0
        %4565 = vmatmul.mubr.f32.gmra.mrb[0].mxu0 %v4049
        %v4566 = vpop.f32.mrb[0].mxu0
        %v4567 = vadd.f32 0.0, %v4566
        %v4568 = vpop.f32.mrb[0].mxu0
        %4569 = vmatprep.mubr.f32.mxu0 0.0
        %4570 = vmatmul.mubr.f32.gmra.mrb[0].mxu0 %v4051
        %v4571 = vpop.f32.mrb[0].mxu0
        %v4572 = vadd.f32 0.0, %v4571
        %v4573 = vpop.f32.mrb[0].mxu0
        %4574 = vmatprep.mubr.f32.mxu0 0.0
        %4575 = vmatmul.mubr.f32.gmra.mrb[0].mxu0 %v4053
        %v4576 = vpop.f32.mrb[0].mxu0
        %v4577 = vadd.f32 0.0, %v4576
        %v4578 = vpop.f32.mrb[0].mxu0
        %4579 = vmatprep.mubr.f32.mxu0 0.0
        %4580 = vmatmul.mubr.f32.gmra.mrb[0].mxu0 %v4055
        %v4581 = vpop.f32.mrb[0].mxu0
        %v4582 = vadd.f32 0.0, %v4581
        %v4583 = vpop.f32.mrb[0].mxu0
        %4584 = vmatprep.mubr.f32.mxu0 0.0
        %4585 = vmatmul.mubr.f32.gmra.mrb[0].mxu0 %v4346
        %v4586 = vpop.f32.mrb[0].mxu0
        %v4587 = vadd.f32 0.0, %v4586
        %v4588 = vpop.f32.mrb[0].mxu0
        %4589 = vmatprep.mubr.f32.mxu0 0.0
        %4590 = vmatmul.mubr.f32.gmra.mrb[0].mxu0 %v4348
        %v4591 = vpop.f32.mrb[0].mxu0
        %v4592 = vadd.f32 0.0, %v4591
        %v4593 = vpop.f32.mrb[0].mxu0
        %4594 = vdwg.mxu0
        %v4595 = vadd.f32 %v4302, %v4417
        %v4596 = vadd.f32 %v4303, %v4422
        %v4597 = vadd.f32 %v4304, %v4427
        %v4598 = vadd.f32 %v4305, %v4432
        %v4599 = vadd.f32 %v4306, %v4437
        %v4600 = vadd.f32 %v4307, %v4442
        %v4601 = vadd.f32 %v4308, %v4447
        %v4602 = vadd.f32 %v4309, %v4452
        %v4603 = vadd.f32 %v4310, %v4457
        %v4604 = vadd.f32 %v4311, %v4462
        %v4605 = vadd.f32 %v4312, %v4467
        %v4606 = vadd.f32 %v4313, %v4472
        %v4607 = vadd.f32 %v4314, %v4477
        %v4608 = vadd.f32 %v4315, %v4482
        %v4609 = vadd.f32 %v4316, %v4487
        %v4610 = vadd.f32 %v4317, %v4492
        %v4611 = vadd.f32 %v4318, %v4497
        %v4612 = vadd.f32 %v4319, %v4502
        %v4613 = vadd.f32 %v4320, %v4507
        %v4614 = vadd.f32 %v4321, %v4512
        %v4615 = vadd.f32 %v4322, %v4517
        %v4616 = vadd.f32 %v4323, %v4522
        %v4617 = vadd.f32 %v4324, %v4527
        %v4618 = vadd.f32 %v4325, %v4532
        %v4619 = vadd.f32 %v4326, %v4537
        %v4620 = vadd.f32 %v4327, %v4542
        %v4621 = vadd.f32 %v4328, %v4547
        %v4622 = vadd.f32 %v4329, %v4552
        %v4623 = vadd.f32 %v4330, %v4557
        %v4624 = vadd.f32 %v4331, %v4562
        %v4625 = vadd.f32 %v4332, %v4567
        %v4626 = vadd.f32 %v4333, %v4572
        %v4627 = vadd.f32 %v4334, %v4577
        %v4628 = vadd.f32 %v4335, %v4582
        %v4629 = vadd.f32 %v4336, %v4587
        %v4630 = vadd.f32 %v4337, %v4592
        %s4631 = scalar_lea.vmem [#allocation13], 56
        %v4632 = vld [vmem:[%s4631] sm:$0xff]
        %vm4633 = vcmask 1041408
        %v4634 = vrot.slane %v1900, 6
        %v4635 = vrot.slane %v1901, 6
        %v4636 = vsel %vm4633, %v4634, %v4635
        %v4637 = vrot.slane %v1902, 6
        %v4638 = vsel %vm4633, %v4635, %v4637
        %v4639 = vrot.slane %v1903, 6
        %v4640 = vsel %vm4633, %v4637, %v4639
        %v4641 = vrot.slane %v1904, 6
        %v4642 = vsel %vm4633, %v4639, %v4641
        %v4643 = vrot.slane %v1905, 6
        %v4644 = vsel %vm4633, %v4641, %v4643
        %v4645 = vrot.slane %v1906, 6
        %v4646 = vsel %vm4633, %v4643, %v4645
        %v4647 = vrot.slane %v1907, 6
        %v4648 = vsel %vm4633, %v4645, %v4647
        %v4649 = vrot.slane %v1908, 6
        %v4650 = vsel %vm4633, %v4647, %v4649
        %v4651 = vrot.slane %v1909, 6
        %v4652 = vsel %vm4633, %v4649, %v4651
        %v4653 = vrot.slane %v1910, 6
        %v4654 = vsel %vm4633, %v4651, %v4653
        %v4655 = vrot.slane %v1911, 6
        %v4656 = vsel %vm4633, %v4653, %v4655
        %v4657 = vrot.slane %v1912, 6
        %v4658 = vsel %vm4633, %v4655, %v4657
        %v4659 = vrot.slane %v1913, 6
        %v4660 = vsel %vm4633, %v4657, %v4659
        %v4661 = vrot.slane %v1914, 6
        %v4662 = vsel %vm4633, %v4659, %v4661
        %v4663 = vrot.slane %v1915, 6
        %v4664 = vsel %vm4633, %v4661, %v4663
        %v4665 = vrot.slane %v1916, 6
        %v4666 = vsel %vm4633, %v4663, %v4665
        %v4667 = vrot.slane %v1917, 6
        %v4668 = vsel %vm4633, %v4665, %v4667
        %v4669 = vrot.slane %v1918, 6
        %v4670 = vsel %vm4633, %v4667, %v4669
        %v4671 = vrot.slane %v1919, 6
        %v4672 = vsel %vm4633, %v4669, %v4671
        %v4673 = vrot.slane %v1920, 6
        %v4674 = vsel %vm4633, %v4671, %v4673
        %v4675 = vrot.slane %v1921, 6
        %v4676 = vsel %vm4633, %v4673, %v4675
        %v4677 = vrot.slane %v1922, 6
        %v4678 = vsel %vm4633, %v4675, %v4677
        %v4679 = vrot.slane %v1923, 6
        %v4680 = vsel %vm4633, %v4677, %v4679
        %v4681 = vrot.slane %v1924, 6
        %v4682 = vsel %vm4633, %v4679, %v4681
        %v4683 = vrot.slane %v1925, 6
        %v4684 = vsel %vm4633, %v4681, %v4683
        %v4685 = vrot.slane %v1926, 6
        %v4686 = vsel %vm4633, %v4683, %v4685
        %v4687 = vrot.slane %v1927, 6
        %v4688 = vsel %vm4633, %v4685, %v4687
        %v4689 = vrot.slane %v1928, 6
        %v4690 = vsel %vm4633, %v4687, %v4689
        %v4691 = vrot.slane %v1929, 6
        %v4692 = vsel %vm4633, %v4689, %v4691
        %v4693 = vrot.slane %v1930, 6
        %v4694 = vsel %vm4633, %v4691, %v4693
        %v4695 = vrot.slane %v1931, 6
        %v4696 = vsel %vm4633, %v4693, %v4695
        %v4697 = vrot.slane %v1932, 6
        %v4698 = vsel %vm4633, %v4695, %v4697
        %v4699 = vrot.slane %v1933, 6
        %v4700 = vsel %vm4633, %v4697, %v4699
        %v4701 = vrot.slane %v1934, 6
        %v4702 = vsel %vm4633, %v4699, %v4701
        %v4703 = vrot.slane %v1935, 6
        %v4704 = vsel %vm4633, %v4701, %v4703
        %v4705 = vrot.slane %v1936, 6
        %v4706 = vsel %vm4633, %v4703, %v4705
        %v4707 = vsel %vm838, %v4636, 0
        %v4709 = vsel %vm838, %v4638, 0
        %v4711 = vsel %vm838, %v4640, 0
        %v4713 = vsel %vm838, %v4642, 0
        %v4715 = vsel %vm838, %v4644, 0
        %v4717 = vsel %vm838, %v4646, 0
        %v4719 = vsel %vm838, %v4648, 0
        %v4721 = vsel %vm838, %v4650, 0
        %v4723 = vsel %vm838, %v4652, 0
        %v4725 = vsel %vm838, %v4654, 0
        %v4727 = vsel %vm838, %v4656, 0
        %v4729 = vsel %vm838, %v4658, 0
        %v4731 = vsel %vm838, %v4660, 0
        %v4733 = vsel %vm838, %v4662, 0
        %v4735 = vsel %vm838, %v4664, 0
        %v4737 = vsel %vm838, %v4666, 0
        %v4739 = vsel %vm838, %v4668, 0
        %v4741 = vsel %vm838, %v4670, 0
        %v4743 = vsel %vm838, %v4672, 0
        %v4745 = vsel %vm838, %v4674, 0
        %v4747 = vsel %vm838, %v4676, 0
        %v4749 = vsel %vm838, %v4678, 0
        %v4751 = vsel %vm838, %v4680, 0
        %v4753 = vsel %vm838, %v4682, 0
        %v4755 = vsel %vm838, %v4684, 0
        %v4757 = vsel %vm838, %v4686, 0
        %v4759 = vsel %vm838, %v4688, 0
        %v4761 = vsel %vm838, %v4690, 0
        %v4763 = vsel %vm838, %v4692, 0
        %v4765 = vsel %vm838, %v4694, 0
        %v4767 = vsel %vm838, %v4696, 0
        %v4769 = vsel %vm838, %v4698, 0
        %v4771 = vsel %vm838, %v4700, 0
        %v4773 = vsel %vm838, %v4702, 0
        %v4775 = vsel %vm838, %v4704, 0
        %v4777 = vsel %vm838, %v4706, 0
        %4779 = vmatprep.subr.mxu0 0.0
        %4780 = vmatpush1.msra.mxu0 %v4632
        %4781 = vmatprep.subr.mxu0 0.0
        %4782 = vmatpush1.msra.mxu0 0.0
        %4783 = vmatprep.subr.mxu0 0.0
        %4784 = vmatpush1.msra.mxu0 0.0
        %4785 = vmatprep.subr.mxu0 0.0
        %4786 = vmatpush1.msra.mxu0 0.0
        %4787 = vmatprep.subr.mxu0 0.0
        %4788 = vmatpush1.msra.mxu0 0.0
        %4789 = vmatprep.subr.mxu0 0.0
        %4790 = vmatpush1.msra.mxu0 0.0
        %4791 = vmatprep.subr.mxu0 0.0
        %4792 = vmatpush1.msra.mxu0 0.0
        %4793 = vmatprep.subr.mxu0 0.0
        %4794 = vmatpush1.msra.mxu0 0.0
        %4795 = vmatprep.subr.mxu0 0.0
        %4796 = vmatpush1.msra.mxu0 0.0
        %4797 = vmatprep.subr.mxu0 0.0
        %4798 = vmatpush1.msra.mxu0 0.0
        %4799 = vmatprep.subr.mxu0 0.0
        %4800 = vmatpush1.msra.mxu0 0.0
        %4801 = vmatprep.subr.mxu0 0.0
        %4802 = vmatpush1.msra.mxu0 0.0
        %4803 = vmatprep.subr.mxu0 0.0
        %4804 = vmatpush1.msra.mxu0 0.0
        %4805 = vmatprep.subr.mxu0 0.0
        %4806 = vmatpush1.msra.mxu0 0.0
        %4807 = vmatprep.subr.mxu0 0.0
        %4808 = vmatpush1.msra.mxu0 0.0
        %4809 = vmatprep.subr.mxu0 0.0
        %4810 = vmatpush1.msra.mxu0 0.0
        %4811 = vmatprep.subr.mxu0 0.0
        %4812 = vmatpush1.msra.mxu0 0.0
        %4813 = vmatprep.subr.mxu0 0.0
        %4814 = vmatpush1.msra.mxu0 0.0
        %4815 = vmatprep.subr.mxu0 0.0
        %4816 = vmatpush1.msra.mxu0 0.0
        %4817 = vmatprep.subr.mxu0 0.0
        %4818 = vmatpush1.msra.mxu0 0.0
        %4819 = vmatprep.subr.mxu0 0.0
        %4820 = vmatpush1.msra.mxu0 0.0
        %4821 = vmatprep.subr.mxu0 0.0
        %4822 = vmatpush1.msra.mxu0 0.0
        %4823 = vmatprep.subr.mxu0 0.0
        %4824 = vmatpush1.msra.mxu0 0.0
        %4825 = vmatprep.subr.mxu0 0.0
        %4826 = vmatpush1.msra.mxu0 0.0
        %4827 = vmatprep.subr.mxu0 0.0
        %4828 = vmatpush1.msra.mxu0 0.0
        %4829 = vmatprep.subr.mxu0 0.0
        %4830 = vmatpush1.msra.mxu0 0.0
        %4831 = vmatprep.subr.mxu0 0.0
        %4832 = vmatpush1.msra.mxu0 0.0
        %4833 = vmatprep.subr.mxu0 0.0
        %4834 = vmatpush1.msra.mxu0 0.0
        %4835 = vmatprep.subr.mxu0 0.0
        %4836 = vmatpush1.msra.mxu0 0.0
        %4837 = vmatprep.subr.mxu0 0.0
        %4838 = vmatpush1.msra.mxu0 0.0
        %4839 = vmatprep.subr.mxu0 0.0
        %4840 = vmatpush1.msra.mxu0 0.0
        %4841 = vmatprep.subr.mxu0 0.0
        %4842 = vmatpush1.msra.mxu0 0.0
        %4843 = vmatprep.mubr.f32.mxu0 0.0
        %4844 = vmatmul.mubr.f32.gmra.mrb[0].mxu0 %v4707
        %v4845 = vpop.f32.mrb[0].mxu0
        %v4846 = vadd.f32 0.0, %v4845
        %v4847 = vpop.f32.mrb[0].mxu0
        %4848 = vmatprep.mubr.f32.mxu0 0.0
        %4849 = vmatmul.mubr.f32.gmra.mrb[0].mxu0 %v4709
        %v4850 = vpop.f32.mrb[0].mxu0
        %v4851 = vadd.f32 0.0, %v4850
        %v4852 = vpop.f32.mrb[0].mxu0
        %4853 = vmatprep.mubr.f32.mxu0 0.0
        %4854 = vmatmul.mubr.f32.gmra.mrb[0].mxu0 %v4711
        %v4855 = vpop.f32.mrb[0].mxu0
        %v4856 = vadd.f32 0.0, %v4855
        %v4857 = vpop.f32.mrb[0].mxu0
        %4858 = vmatprep.mubr.f32.mxu0 0.0
        %4859 = vmatmul.mubr.f32.gmra.mrb[0].mxu0 %v4713
        %v4860 = vpop.f32.mrb[0].mxu0
        %v4861 = vadd.f32 0.0, %v4860
        %v4862 = vpop.f32.mrb[0].mxu0
        %4863 = vmatprep.mubr.f32.mxu0 0.0
        %4864 = vmatmul.mubr.f32.gmra.mrb[0].mxu0 %v4715
        %v4865 = vpop.f32.mrb[0].mxu0
        %v4866 = vadd.f32 0.0, %v4865
        %v4867 = vpop.f32.mrb[0].mxu0
        %4868 = vmatprep.mubr.f32.mxu0 0.0
        %4869 = vmatmul.mubr.f32.gmra.mrb[0].mxu0 %v4717
        %v4870 = vpop.f32.mrb[0].mxu0
        %v4871 = vadd.f32 0.0, %v4870
        %v4872 = vpop.f32.mrb[0].mxu0
        %4873 = vmatprep.mubr.f32.mxu0 0.0
        %4874 = vmatmul.mubr.f32.gmra.mrb[0].mxu0 %v4719
        %v4875 = vpop.f32.mrb[0].mxu0
        %v4876 = vadd.f32 0.0, %v4875
        %v4877 = vpop.f32.mrb[0].mxu0
        %4878 = vmatprep.mubr.f32.mxu0 0.0
        %4879 = vmatmul.mubr.f32.gmra.mrb[0].mxu0 %v4721
        %v4880 = vpop.f32.mrb[0].mxu0
        %v4881 = vadd.f32 0.0, %v4880
        %v4882 = vpop.f32.mrb[0].mxu0
        %4883 = vmatprep.mubr.f32.mxu0 0.0
        %4884 = vmatmul.mubr.f32.gmra.mrb[0].mxu0 %v4723
        %v4885 = vpop.f32.mrb[0].mxu0
        %v4886 = vadd.f32 0.0, %v4885
        %v4887 = vpop.f32.mrb[0].mxu0
        %4888 = vmatprep.mubr.f32.mxu0 0.0
        %4889 = vmatmul.mubr.f32.gmra.mrb[0].mxu0 %v4725
        %v4890 = vpop.f32.mrb[0].mxu0
        %v4891 = vadd.f32 0.0, %v4890
        %v4892 = vpop.f32.mrb[0].mxu0
        %4893 = vmatprep.mubr.f32.mxu0 0.0
        %4894 = vmatmul.mubr.f32.gmra.mrb[0].mxu0 %v4727
        %v4895 = vpop.f32.mrb[0].mxu0
        %v4896 = vadd.f32 0.0, %v4895
        %v4897 = vpop.f32.mrb[0].mxu0
        %4898 = vmatprep.mubr.f32.mxu0 0.0
        %4899 = vmatmul.mubr.f32.gmra.mrb[0].mxu0 %v4729
        %v4900 = vpop.f32.mrb[0].mxu0
        %v4901 = vadd.f32 0.0, %v4900
        %v4902 = vpop.f32.mrb[0].mxu0
        %4903 = vmatprep.mubr.f32.mxu0 0.0
        %4904 = vmatmul.mubr.f32.gmra.mrb[0].mxu0 %v4731
        %v4905 = vpop.f32.mrb[0].mxu0
        %v4906 = vadd.f32 0.0, %v4905
        %v4907 = vpop.f32.mrb[0].mxu0
        %4908 = vmatprep.mubr.f32.mxu0 0.0
        %4909 = vmatmul.mubr.f32.gmra.mrb[0].mxu0 %v4733
        %v4910 = vpop.f32.mrb[0].mxu0
        %v4911 = vadd.f32 0.0, %v4910
        %v4912 = vpop.f32.mrb[0].mxu0
        %4913 = vmatprep.mubr.f32.mxu0 0.0
        %4914 = vmatmul.mubr.f32.gmra.mrb[0].mxu0 %v4735
        %v4915 = vpop.f32.mrb[0].mxu0
        %v4916 = vadd.f32 0.0, %v4915
        %v4917 = vpop.f32.mrb[0].mxu0
        %4918 = vmatprep.mubr.f32.mxu0 0.0
        %4919 = vmatmul.mubr.f32.gmra.mrb[0].mxu0 %v4737
        %v4920 = vpop.f32.mrb[0].mxu0
        %v4921 = vadd.f32 0.0, %v4920
        %v4922 = vpop.f32.mrb[0].mxu0
        %4923 = vmatprep.mubr.f32.mxu0 0.0
        %4924 = vmatmul.mubr.f32.gmra.mrb[0].mxu0 %v4739
        %v4925 = vpop.f32.mrb[0].mxu0
        %v4926 = vadd.f32 0.0, %v4925
        %v4927 = vpop.f32.mrb[0].mxu0
        %4928 = vmatprep.mubr.f32.mxu0 0.0
        %4929 = vmatmul.mubr.f32.gmra.mrb[0].mxu0 %v4741
        %v4930 = vpop.f32.mrb[0].mxu0
        %v4931 = vadd.f32 0.0, %v4930
        %v4932 = vpop.f32.mrb[0].mxu0
        %4933 = vmatprep.mubr.f32.mxu0 0.0
        %4934 = vmatmul.mubr.f32.gmra.mrb[0].mxu0 %v4743
        %v4935 = vpop.f32.mrb[0].mxu0
        %v4936 = vadd.f32 0.0, %v4935
        %v4937 = vpop.f32.mrb[0].mxu0
        %4938 = vmatprep.mubr.f32.mxu0 0.0
        %4939 = vmatmul.mubr.f32.gmra.mrb[0].mxu0 %v4745
        %v4940 = vpop.f32.mrb[0].mxu0
        %v4941 = vadd.f32 0.0, %v4940
        %v4942 = vpop.f32.mrb[0].mxu0
        %4943 = vmatprep.mubr.f32.mxu0 0.0
        %4944 = vmatmul.mubr.f32.gmra.mrb[0].mxu0 %v4747
        %v4945 = vpop.f32.mrb[0].mxu0
        %v4946 = vadd.f32 0.0, %v4945
        %v4947 = vpop.f32.mrb[0].mxu0
        %4948 = vmatprep.mubr.f32.mxu0 0.0
        %4949 = vmatmul.mubr.f32.gmra.mrb[0].mxu0 %v4749
        %v4950 = vpop.f32.mrb[0].mxu0
        %v4951 = vadd.f32 0.0, %v4950
        %v4952 = vpop.f32.mrb[0].mxu0
        %4953 = vmatprep.mubr.f32.mxu0 0.0
        %4954 = vmatmul.mubr.f32.gmra.mrb[0].mxu0 %v4751
        %v4955 = vpop.f32.mrb[0].mxu0
        %v4956 = vadd.f32 0.0, %v4955
        %v4957 = vpop.f32.mrb[0].mxu0
        %4958 = vmatprep.mubr.f32.mxu0 0.0
        %4959 = vmatmul.mubr.f32.gmra.mrb[0].mxu0 %v4753
        %v4960 = vpop.f32.mrb[0].mxu0
        %v4961 = vadd.f32 0.0, %v4960
        %v4962 = vpop.f32.mrb[0].mxu0
        %4963 = vmatprep.mubr.f32.mxu0 0.0
        %4964 = vmatmul.mubr.f32.gmra.mrb[0].mxu0 %v4755
        %v4965 = vpop.f32.mrb[0].mxu0
        %v4966 = vadd.f32 0.0, %v4965
        %v4967 = vpop.f32.mrb[0].mxu0
        %4968 = vmatprep.mubr.f32.mxu0 0.0
        %4969 = vmatmul.mubr.f32.gmra.mrb[0].mxu0 %v4757
        %v4970 = vpop.f32.mrb[0].mxu0
        %v4971 = vadd.f32 0.0, %v4970
        %v4972 = vpop.f32.mrb[0].mxu0
        %4973 = vmatprep.mubr.f32.mxu0 0.0
        %4974 = vmatmul.mubr.f32.gmra.mrb[0].mxu0 %v4759
        %v4975 = vpop.f32.mrb[0].mxu0
        %v4976 = vadd.f32 0.0, %v4975
        %v4977 = vpop.f32.mrb[0].mxu0
        %4978 = vmatprep.mubr.f32.mxu0 0.0
        %4979 = vmatmul.mubr.f32.gmra.mrb[0].mxu0 %v4761
        %v4980 = vpop.f32.mrb[0].mxu0
        %v4981 = vadd.f32 0.0, %v4980
        %v4982 = vpop.f32.mrb[0].mxu0
        %4983 = vmatprep.mubr.f32.mxu0 0.0
        %4984 = vmatmul.mubr.f32.gmra.mrb[0].mxu0 %v4763
        %v4985 = vpop.f32.mrb[0].mxu0
        %v4986 = vadd.f32 0.0, %v4985
        %v4987 = vpop.f32.mrb[0].mxu0
        %4988 = vmatprep.mubr.f32.mxu0 0.0
        %4989 = vmatmul.mubr.f32.gmra.mrb[0].mxu0 %v4765
        %v4990 = vpop.f32.mrb[0].mxu0
        %v4991 = vadd.f32 0.0, %v4990
        %v4992 = vpop.f32.mrb[0].mxu0
        %4993 = vmatprep.mubr.f32.mxu0 0.0
        %4994 = vmatmul.mubr.f32.gmra.mrb[0].mxu0 %v4767
        %v4995 = vpop.f32.mrb[0].mxu0
        %v4996 = vadd.f32 0.0, %v4995
        %v4997 = vpop.f32.mrb[0].mxu0
        %4998 = vmatprep.mubr.f32.mxu0 0.0
        %4999 = vmatmul.mubr.f32.gmra.mrb[0].mxu0 %v4769
        %v5000 = vpop.f32.mrb[0].mxu0
        %v5001 = vadd.f32 0.0, %v5000
        %v5002 = vpop.f32.mrb[0].mxu0
        %5003 = vmatprep.mubr.f32.mxu0 0.0
        %5004 = vmatmul.mubr.f32.gmra.mrb[0].mxu0 %v4771
        %v5005 = vpop.f32.mrb[0].mxu0
        %v5006 = vadd.f32 0.0, %v5005
        %v5007 = vpop.f32.mrb[0].mxu0
        %5008 = vmatprep.mubr.f32.mxu0 0.0
        %5009 = vmatmul.mubr.f32.gmra.mrb[0].mxu0 %v4773
        %v5010 = vpop.f32.mrb[0].mxu0
        %v5011 = vadd.f32 0.0, %v5010
        %v5012 = vpop.f32.mrb[0].mxu0
        %5013 = vmatprep.mubr.f32.mxu0 0.0
        %5014 = vmatmul.mubr.f32.gmra.mrb[0].mxu0 %v4775
        %v5015 = vpop.f32.mrb[0].mxu0
        %v5016 = vadd.f32 0.0, %v5015
        %v5017 = vpop.f32.mrb[0].mxu0
        %5018 = vmatprep.mubr.f32.mxu0 0.0
        %5019 = vmatmul.mubr.f32.gmra.mrb[0].mxu0 %v4777
        %v5020 = vpop.f32.mrb[0].mxu0
        %v5021 = vadd.f32 0.0, %v5020
        %v5022 = vpop.f32.mrb[0].mxu0
        %5023 = vdwg.mxu0
        %v5024 = vadd.f32 %v4595, %v4846
        %v5025 = vadd.f32 %v4596, %v4851
        %v5026 = vadd.f32 %v4597, %v4856
        %v5027 = vadd.f32 %v4598, %v4861
        %v5028 = vadd.f32 %v4599, %v4866
        %v5029 = vadd.f32 %v4600, %v4871
        %v5030 = vadd.f32 %v4601, %v4876
        %v5031 = vadd.f32 %v4602, %v4881
        %v5032 = vadd.f32 %v4603, %v4886
        %v5033 = vadd.f32 %v4604, %v4891
        %v5034 = vadd.f32 %v4605, %v4896
        %v5035 = vadd.f32 %v4606, %v4901
        %v5036 = vadd.f32 %v4607, %v4906
        %v5037 = vadd.f32 %v4608, %v4911
        %v5038 = vadd.f32 %v4609, %v4916
        %v5039 = vadd.f32 %v4610, %v4921
        %v5040 = vadd.f32 %v4611, %v4926
        %v5041 = vadd.f32 %v4612, %v4931
        %v5042 = vadd.f32 %v4613, %v4936
        %v5043 = vadd.f32 %v4614, %v4941
        %v5044 = vadd.f32 %v4615, %v4946
        %v5045 = vadd.f32 %v4616, %v4951
        %v5046 = vadd.f32 %v4617, %v4956
        %v5047 = vadd.f32 %v4618, %v4961
        %v5048 = vadd.f32 %v4619, %v4966
        %v5049 = vadd.f32 %v4620, %v4971
        %v5050 = vadd.f32 %v4621, %v4976
        %v5051 = vadd.f32 %v4622, %v4981
        %v5052 = vadd.f32 %v4623, %v4986
        %v5053 = vadd.f32 %v4624, %v4991
        %v5054 = vadd.f32 %v4625, %v4996
        %v5055 = vadd.f32 %v4626, %v5001
        %v5056 = vadd.f32 %v4627, %v5006
        %v5057 = vadd.f32 %v4628, %v5011
        %v5058 = vadd.f32 %v4629, %v5016
        %v5059 = vadd.f32 %v4630, %v5021
        %s5060 = scalar_lea.vmem [#allocation13], 64
        %v5061 = vld [vmem:[%s5060] sm:$0xff]
        %vm5062 = vcmask 1040384
        %v5063 = vrot.slane %v1900, 7
        %v5064 = vrot.slane %v1901, 7
        %v5065 = vsel %vm5062, %v5063, %v5064
        %v5066 = vrot.slane %v1902, 7
        %v5067 = vsel %vm5062, %v5064, %v5066
        %v5068 = vrot.slane %v1903, 7
        %v5069 = vsel %vm5062, %v5066, %v5068
        %v5070 = vrot.slane %v1904, 7
        %v5071 = vsel %vm5062, %v5068, %v5070
        %v5072 = vrot.slane %v1905, 7
        %v5073 = vsel %vm5062, %v5070, %v5072
        %v5074 = vrot.slane %v1906, 7
        %v5075 = vsel %vm5062, %v5072, %v5074
        %v5076 = vrot.slane %v1907, 7
        %v5077 = vsel %vm5062, %v5074, %v5076
        %v5078 = vrot.slane %v1908, 7
        %v5079 = vsel %vm5062, %v5076, %v5078
        %v5080 = vrot.slane %v1909, 7
        %v5081 = vsel %vm5062, %v5078, %v5080
        %v5082 = vrot.slane %v1910, 7
        %v5083 = vsel %vm5062, %v5080, %v5082
        %v5084 = vrot.slane %v1911, 7
        %v5085 = vsel %vm5062, %v5082, %v5084
        %v5086 = vrot.slane %v1912, 7
        %v5087 = vsel %vm5062, %v5084, %v5086
        %v5088 = vrot.slane %v1913, 7
        %v5089 = vsel %vm5062, %v5086, %v5088
        %v5090 = vrot.slane %v1914, 7
        %v5091 = vsel %vm5062, %v5088, %v5090
        %v5092 = vrot.slane %v1915, 7
        %v5093 = vsel %vm5062, %v5090, %v5092
        %v5094 = vrot.slane %v1916, 7
        %v5095 = vsel %vm5062, %v5092, %v5094
        %v5096 = vrot.slane %v1917, 7
        %v5097 = vsel %vm5062, %v5094, %v5096
        %v5098 = vrot.slane %v1918, 7
        %v5099 = vsel %vm5062, %v5096, %v5098
        %v5100 = vrot.slane %v1919, 7
        %v5101 = vsel %vm5062, %v5098, %v5100
        %v5102 = vrot.slane %v1920, 7
        %v5103 = vsel %vm5062, %v5100, %v5102
        %v5104 = vrot.slane %v1921, 7
        %v5105 = vsel %vm5062, %v5102, %v5104
        %v5106 = vrot.slane %v1922, 7
        %v5107 = vsel %vm5062, %v5104, %v5106
        %v5108 = vrot.slane %v1923, 7
        %v5109 = vsel %vm5062, %v5106, %v5108
        %v5110 = vrot.slane %v1924, 7
        %v5111 = vsel %vm5062, %v5108, %v5110
        %v5112 = vrot.slane %v1925, 7
        %v5113 = vsel %vm5062, %v5110, %v5112
        %v5114 = vrot.slane %v1926, 7
        %v5115 = vsel %vm5062, %v5112, %v5114
        %v5116 = vrot.slane %v1927, 7
        %v5117 = vsel %vm5062, %v5114, %v5116
        %v5118 = vrot.slane %v1928, 7
        %v5119 = vsel %vm5062, %v5116, %v5118
        %v5120 = vrot.slane %v1929, 7
        %v5121 = vsel %vm5062, %v5118, %v5120
        %v5122 = vrot.slane %v1930, 7
        %v5123 = vsel %vm5062, %v5120, %v5122
        %v5124 = vrot.slane %v1931, 7
        %v5125 = vsel %vm5062, %v5122, %v5124
        %v5126 = vrot.slane %v1932, 7
        %v5127 = vsel %vm5062, %v5124, %v5126
        %v5128 = vrot.slane %v1933, 7
        %v5129 = vsel %vm5062, %v5126, %v5128
        %v5130 = vrot.slane %v1934, 7
        %v5131 = vsel %vm5062, %v5128, %v5130
        %v5132 = vrot.slane %v1935, 7
        %v5133 = vsel %vm5062, %v5130, %v5132
        %v5134 = vrot.slane %v1936, 7
        %v5135 = vsel %vm5062, %v5132, %v5134
        %v5136 = vsel %vm838, %v5065, 0
        %v5138 = vsel %vm838, %v5067, 0
        %v5140 = vsel %vm838, %v5069, 0
        %v5142 = vsel %vm838, %v5071, 0
        %v5144 = vsel %vm838, %v5073, 0
        %v5146 = vsel %vm838, %v5075, 0
        %v5148 = vsel %vm838, %v5077, 0
        %v5150 = vsel %vm838, %v5079, 0
        %v5152 = vsel %vm838, %v5081, 0
        %v5154 = vsel %vm838, %v5083, 0
        %v5156 = vsel %vm838, %v5085, 0
        %v5158 = vsel %vm838, %v5087, 0
        %v5160 = vsel %vm838, %v5089, 0
        %v5162 = vsel %vm838, %v5091, 0
        %v5164 = vsel %vm838, %v5093, 0
        %v5166 = vsel %vm838, %v5095, 0
        %v5168 = vsel %vm838, %v5097, 0
        %v5170 = vsel %vm838, %v5099, 0
        %v5172 = vsel %vm838, %v5101, 0
        %v5174 = vsel %vm838, %v5103, 0
        %v5176 = vsel %vm838, %v5105, 0
        %v5178 = vsel %vm838, %v5107, 0
        %v5180 = vsel %vm838, %v5109, 0
        %v5182 = vsel %vm838, %v5111, 0
        %v5184 = vsel %vm838, %v5113, 0
        %v5186 = vsel %vm838, %v5115, 0
        %v5188 = vsel %vm838, %v5117, 0
        %v5190 = vsel %vm838, %v5119, 0
        %v5192 = vsel %vm838, %v5121, 0
        %v5194 = vsel %vm838, %v5123, 0
        %v5196 = vsel %vm838, %v5125, 0
        %v5198 = vsel %vm838, %v5127, 0
        %v5200 = vsel %vm838, %v5129, 0
        %v5202 = vsel %vm838, %v5131, 0
        %v5204 = vsel %vm838, %v5133, 0
        %v5206 = vsel %vm838, %v5135, 0
        %5208 = vmatprep.subr.mxu0 0.0
        %5209 = vmatpush1.msra.mxu0 %v5061
        %5210 = vmatprep.subr.mxu0 0.0
        %5211 = vmatpush1.msra.mxu0 0.0
        %5212 = vmatprep.subr.mxu0 0.0
        %5213 = vmatpush1.msra.mxu0 0.0
        %5214 = vmatprep.subr.mxu0 0.0
        %5215 = vmatpush1.msra.mxu0 0.0
        %5216 = vmatprep.subr.mxu0 0.0
        %5217 = vmatpush1.msra.mxu0 0.0
        %5218 = vmatprep.subr.mxu0 0.0
        %5219 = vmatpush1.msra.mxu0 0.0
        %5220 = vmatprep.subr.mxu0 0.0
        %5221 = vmatpush1.msra.mxu0 0.0
        %5222 = vmatprep.subr.mxu0 0.0
        %5223 = vmatpush1.msra.mxu0 0.0
        %5224 = vmatprep.subr.mxu0 0.0
        %5225 = vmatpush1.msra.mxu0 0.0
        %5226 = vmatprep.subr.mxu0 0.0
        %5227 = vmatpush1.msra.mxu0 0.0
        %5228 = vmatprep.subr.mxu0 0.0
        %5229 = vmatpush1.msra.mxu0 0.0
        %5230 = vmatprep.subr.mxu0 0.0
        %5231 = vmatpush1.msra.mxu0 0.0
        %5232 = vmatprep.subr.mxu0 0.0
        %5233 = vmatpush1.msra.mxu0 0.0
        %5234 = vmatprep.subr.mxu0 0.0
        %5235 = vmatpush1.msra.mxu0 0.0
        %5236 = vmatprep.subr.mxu0 0.0
        %5237 = vmatpush1.msra.mxu0 0.0
        %5238 = vmatprep.subr.mxu0 0.0
        %5239 = vmatpush1.msra.mxu0 0.0
        %5240 = vmatprep.subr.mxu0 0.0
        %5241 = vmatpush1.msra.mxu0 0.0
        %5242 = vmatprep.subr.mxu0 0.0
        %5243 = vmatpush1.msra.mxu0 0.0
        %5244 = vmatprep.subr.mxu0 0.0
        %5245 = vmatpush1.msra.mxu0 0.0
        %5246 = vmatprep.subr.mxu0 0.0
        %5247 = vmatpush1.msra.mxu0 0.0
        %5248 = vmatprep.subr.mxu0 0.0
        %5249 = vmatpush1.msra.mxu0 0.0
        %5250 = vmatprep.subr.mxu0 0.0
        %5251 = vmatpush1.msra.mxu0 0.0
        %5252 = vmatprep.subr.mxu0 0.0
        %5253 = vmatpush1.msra.mxu0 0.0
        %5254 = vmatprep.subr.mxu0 0.0
        %5255 = vmatpush1.msra.mxu0 0.0
        %5256 = vmatprep.subr.mxu0 0.0
        %5257 = vmatpush1.msra.mxu0 0.0
        %5258 = vmatprep.subr.mxu0 0.0
        %5259 = vmatpush1.msra.mxu0 0.0
        %5260 = vmatprep.subr.mxu0 0.0
        %5261 = vmatpush1.msra.mxu0 0.0
        %5262 = vmatprep.subr.mxu0 0.0
        %5263 = vmatpush1.msra.mxu0 0.0
        %5264 = vmatprep.subr.mxu0 0.0
        %5265 = vmatpush1.msra.mxu0 0.0
        %5266 = vmatprep.subr.mxu0 0.0
        %5267 = vmatpush1.msra.mxu0 0.0
        %5268 = vmatprep.subr.mxu0 0.0
        %5269 = vmatpush1.msra.mxu0 0.0
        %5270 = vmatprep.subr.mxu0 0.0
        %5271 = vmatpush1.msra.mxu0 0.0
        %5272 = vmatprep.mubr.f32.mxu0 0.0
        %5273 = vmatmul.mubr.f32.gmra.mrb[0].mxu0 %v5136
        %v5274 = vpop.f32.mrb[0].mxu0
        %v5275 = vadd.f32 0.0, %v5274
        %v5276 = vpop.f32.mrb[0].mxu0
        %5277 = vmatprep.mubr.f32.mxu0 0.0
        %5278 = vmatmul.mubr.f32.gmra.mrb[0].mxu0 %v5138
        %v5279 = vpop.f32.mrb[0].mxu0
        %v5280 = vadd.f32 0.0, %v5279
        %v5281 = vpop.f32.mrb[0].mxu0
        %5282 = vmatprep.mubr.f32.mxu0 0.0
        %5283 = vmatmul.mubr.f32.gmra.mrb[0].mxu0 %v5140
        %v5284 = vpop.f32.mrb[0].mxu0
        %v5285 = vadd.f32 0.0, %v5284
        %v5286 = vpop.f32.mrb[0].mxu0
        %5287 = vmatprep.mubr.f32.mxu0 0.0
        %5288 = vmatmul.mubr.f32.gmra.mrb[0].mxu0 %v5142
        %v5289 = vpop.f32.mrb[0].mxu0
        %v5290 = vadd.f32 0.0, %v5289
        %v5291 = vpop.f32.mrb[0].mxu0
        %5292 = vmatprep.mubr.f32.mxu0 0.0
        %5293 = vmatmul.mubr.f32.gmra.mrb[0].mxu0 %v5144
        %v5294 = vpop.f32.mrb[0].mxu0
        %v5295 = vadd.f32 0.0, %v5294
        %v5296 = vpop.f32.mrb[0].mxu0
        %5297 = vmatprep.mubr.f32.mxu0 0.0
        %5298 = vmatmul.mubr.f32.gmra.mrb[0].mxu0 %v5146
        %v5299 = vpop.f32.mrb[0].mxu0
        %v5300 = vadd.f32 0.0, %v5299
        %v5301 = vpop.f32.mrb[0].mxu0
        %5302 = vmatprep.mubr.f32.mxu0 0.0
        %5303 = vmatmul.mubr.f32.gmra.mrb[0].mxu0 %v5148
        %v5304 = vpop.f32.mrb[0].mxu0
        %v5305 = vadd.f32 0.0, %v5304
        %v5306 = vpop.f32.mrb[0].mxu0
        %5307 = vmatprep.mubr.f32.mxu0 0.0
        %5308 = vmatmul.mubr.f32.gmra.mrb[0].mxu0 %v5150
        %v5309 = vpop.f32.mrb[0].mxu0
        %v5310 = vadd.f32 0.0, %v5309
        %v5311 = vpop.f32.mrb[0].mxu0
        %5312 = vmatprep.mubr.f32.mxu0 0.0
        %5313 = vmatmul.mubr.f32.gmra.mrb[0].mxu0 %v5152
        %v5314 = vpop.f32.mrb[0].mxu0
        %v5315 = vadd.f32 0.0, %v5314
        %v5316 = vpop.f32.mrb[0].mxu0
        %5317 = vmatprep.mubr.f32.mxu0 0.0
        %5318 = vmatmul.mubr.f32.gmra.mrb[0].mxu0 %v5154
        %v5319 = vpop.f32.mrb[0].mxu0
        %v5320 = vadd.f32 0.0, %v5319
        %v5321 = vpop.f32.mrb[0].mxu0
        %5322 = vmatprep.mubr.f32.mxu0 0.0
        %5323 = vmatmul.mubr.f32.gmra.mrb[0].mxu0 %v5156
        %v5324 = vpop.f32.mrb[0].mxu0
        %v5325 = vadd.f32 0.0, %v5324
        %v5326 = vpop.f32.mrb[0].mxu0
        %5327 = vmatprep.mubr.f32.mxu0 0.0
        %5328 = vmatmul.mubr.f32.gmra.mrb[0].mxu0 %v5158
        %v5329 = vpop.f32.mrb[0].mxu0
        %v5330 = vadd.f32 0.0, %v5329
        %v5331 = vpop.f32.mrb[0].mxu0
        %5332 = vmatprep.mubr.f32.mxu0 0.0
        %5333 = vmatmul.mubr.f32.gmra.mrb[0].mxu0 %v5160
        %v5334 = vpop.f32.mrb[0].mxu0
        %v5335 = vadd.f32 0.0, %v5334
        %v5336 = vpop.f32.mrb[0].mxu0
        %5337 = vmatprep.mubr.f32.mxu0 0.0
        %5338 = vmatmul.mubr.f32.gmra.mrb[0].mxu0 %v5162
        %v5339 = vpop.f32.mrb[0].mxu0
        %v5340 = vadd.f32 0.0, %v5339
        %v5341 = vpop.f32.mrb[0].mxu0
        %5342 = vmatprep.mubr.f32.mxu0 0.0
        %5343 = vmatmul.mubr.f32.gmra.mrb[0].mxu0 %v5164
        %v5344 = vpop.f32.mrb[0].mxu0
        %v5345 = vadd.f32 0.0, %v5344
        %v5346 = vpop.f32.mrb[0].mxu0
        %5347 = vmatprep.mubr.f32.mxu0 0.0
        %5348 = vmatmul.mubr.f32.gmra.mrb[0].mxu0 %v5166
        %v5349 = vpop.f32.mrb[0].mxu0
        %v5350 = vadd.f32 0.0, %v5349
        %v5351 = vpop.f32.mrb[0].mxu0
        %5352 = vmatprep.mubr.f32.mxu0 0.0
        %5353 = vmatmul.mubr.f32.gmra.mrb[0].mxu0 %v5168
        %v5354 = vpop.f32.mrb[0].mxu0
        %v5355 = vadd.f32 0.0, %v5354
        %v5356 = vpop.f32.mrb[0].mxu0
        %5357 = vmatprep.mubr.f32.mxu0 0.0
        %5358 = vmatmul.mubr.f32.gmra.mrb[0].mxu0 %v5170
        %v5359 = vpop.f32.mrb[0].mxu0
        %v5360 = vadd.f32 0.0, %v5359
        %v5361 = vpop.f32.mrb[0].mxu0
        %5362 = vmatprep.mubr.f32.mxu0 0.0
        %5363 = vmatmul.mubr.f32.gmra.mrb[0].mxu0 %v5172
        %v5364 = vpop.f32.mrb[0].mxu0
        %v5365 = vadd.f32 0.0, %v5364
        %v5366 = vpop.f32.mrb[0].mxu0
        %5367 = vmatprep.mubr.f32.mxu0 0.0
        %5368 = vmatmul.mubr.f32.gmra.mrb[0].mxu0 %v5174
        %v5369 = vpop.f32.mrb[0].mxu0
        %v5370 = vadd.f32 0.0, %v5369
        %v5371 = vpop.f32.mrb[0].mxu0
        %5372 = vmatprep.mubr.f32.mxu0 0.0
        %5373 = vmatmul.mubr.f32.gmra.mrb[0].mxu0 %v5176
        %v5374 = vpop.f32.mrb[0].mxu0
        %v5375 = vadd.f32 0.0, %v5374
        %v5376 = vpop.f32.mrb[0].mxu0
        %5377 = vmatprep.mubr.f32.mxu0 0.0
        %5378 = vmatmul.mubr.f32.gmra.mrb[0].mxu0 %v5178
        %v5379 = vpop.f32.mrb[0].mxu0
        %v5380 = vadd.f32 0.0, %v5379
        %v5381 = vpop.f32.mrb[0].mxu0
        %5382 = vmatprep.mubr.f32.mxu0 0.0
        %5383 = vmatmul.mubr.f32.gmra.mrb[0].mxu0 %v5180
        %v5384 = vpop.f32.mrb[0].mxu0
        %v5385 = vadd.f32 0.0, %v5384
        %v5386 = vpop.f32.mrb[0].mxu0
        %5387 = vmatprep.mubr.f32.mxu0 0.0
        %5388 = vmatmul.mubr.f32.gmra.mrb[0].mxu0 %v5182
        %v5389 = vpop.f32.mrb[0].mxu0
        %v5390 = vadd.f32 0.0, %v5389
        %v5391 = vpop.f32.mrb[0].mxu0
        %5392 = vmatprep.mubr.f32.mxu0 0.0
        %5393 = vmatmul.mubr.f32.gmra.mrb[0].mxu0 %v5184
        %v5394 = vpop.f32.mrb[0].mxu0
        %v5395 = vadd.f32 0.0, %v5394
        %v5396 = vpop.f32.mrb[0].mxu0
        %5397 = vmatprep.mubr.f32.mxu0 0.0
        %5398 = vmatmul.mubr.f32.gmra.mrb[0].mxu0 %v5186
        %v5399 = vpop.f32.mrb[0].mxu0
        %v5400 = vadd.f32 0.0, %v5399
        %v5401 = vpop.f32.mrb[0].mxu0
        %5402 = vmatprep.mubr.f32.mxu0 0.0
        %5403 = vmatmul.mubr.f32.gmra.mrb[0].mxu0 %v5188
        %v5404 = vpop.f32.mrb[0].mxu0
        %v5405 = vadd.f32 0.0, %v5404
        %v5406 = vpop.f32.mrb[0].mxu0
        %5407 = vmatprep.mubr.f32.mxu0 0.0
        %5408 = vmatmul.mubr.f32.gmra.mrb[0].mxu0 %v5190
        %v5409 = vpop.f32.mrb[0].mxu0
        %v5410 = vadd.f32 0.0, %v5409
        %v5411 = vpop.f32.mrb[0].mxu0
        %5412 = vmatprep.mubr.f32.mxu0 0.0
        %5413 = vmatmul.mubr.f32.gmra.mrb[0].mxu0 %v5192
        %v5414 = vpop.f32.mrb[0].mxu0
        %v5415 = vadd.f32 0.0, %v5414
        %v5416 = vpop.f32.mrb[0].mxu0
        %5417 = vmatprep.mubr.f32.mxu0 0.0
        %5418 = vmatmul.mubr.f32.gmra.mrb[0].mxu0 %v5194
        %v5419 = vpop.f32.mrb[0].mxu0
        %v5420 = vadd.f32 0.0, %v5419
        %v5421 = vpop.f32.mrb[0].mxu0
        %5422 = vmatprep.mubr.f32.mxu0 0.0
        %5423 = vmatmul.mubr.f32.gmra.mrb[0].mxu0 %v5196
        %v5424 = vpop.f32.mrb[0].mxu0
        %v5425 = vadd.f32 0.0, %v5424
        %v5426 = vpop.f32.mrb[0].mxu0
        %5427 = vmatprep.mubr.f32.mxu0 0.0
        %5428 = vmatmul.mubr.f32.gmra.mrb[0].mxu0 %v5198
        %v5429 = vpop.f32.mrb[0].mxu0
        %v5430 = vadd.f32 0.0, %v5429
        %v5431 = vpop.f32.mrb[0].mxu0
        %5432 = vmatprep.mubr.f32.mxu0 0.0
        %5433 = vmatmul.mubr.f32.gmra.mrb[0].mxu0 %v5200
        %v5434 = vpop.f32.mrb[0].mxu0
        %v5435 = vadd.f32 0.0, %v5434
        %v5436 = vpop.f32.mrb[0].mxu0
        %5437 = vmatprep.mubr.f32.mxu0 0.0
        %5438 = vmatmul.mubr.f32.gmra.mrb[0].mxu0 %v5202
        %v5439 = vpop.f32.mrb[0].mxu0
        %v5440 = vadd.f32 0.0, %v5439
        %v5441 = vpop.f32.mrb[0].mxu0
        %5442 = vmatprep.mubr.f32.mxu0 0.0
        %5443 = vmatmul.mubr.f32.gmra.mrb[0].mxu0 %v5204
        %v5444 = vpop.f32.mrb[0].mxu0
        %v5445 = vadd.f32 0.0, %v5444
        %v5446 = vpop.f32.mrb[0].mxu0
        %5447 = vmatprep.mubr.f32.mxu0 0.0
        %5448 = vmatmul.mubr.f32.gmra.mrb[0].mxu0 %v5206
        %v5449 = vpop.f32.mrb[0].mxu0
        %v5450 = vadd.f32 0.0, %v5449
        %v5451 = vpop.f32.mrb[0].mxu0
        %5452 = vdwg.mxu0
        %v5453 = vadd.f32 %v5024, %v5275
        %v5454 = vadd.f32 %v5025, %v5280
        %v5455 = vadd.f32 %v5026, %v5285
        %v5456 = vadd.f32 %v5027, %v5290
        %v5457 = vadd.f32 %v5028, %v5295
        %v5458 = vadd.f32 %v5029, %v5300
        %v5459 = vadd.f32 %v5030, %v5305
        %v5460 = vadd.f32 %v5031, %v5310
        %v5461 = vadd.f32 %v5032, %v5315
        %v5462 = vadd.f32 %v5033, %v5320
        %v5463 = vadd.f32 %v5034, %v5325
        %v5464 = vadd.f32 %v5035, %v5330
        %v5465 = vadd.f32 %v5036, %v5335
        %v5466 = vadd.f32 %v5037, %v5340
        %v5467 = vadd.f32 %v5038, %v5345
        %v5468 = vadd.f32 %v5039, %v5350
        %v5469 = vadd.f32 %v5040, %v5355
        %v5470 = vadd.f32 %v5041, %v5360
        %v5471 = vadd.f32 %v5042, %v5365
        %v5472 = vadd.f32 %v5043, %v5370
        %v5473 = vadd.f32 %v5044, %v5375
        %v5474 = vadd.f32 %v5045, %v5380
        %v5475 = vadd.f32 %v5046, %v5385
        %v5476 = vadd.f32 %v5047, %v5390
        %v5477 = vadd.f32 %v5048, %v5395
        %v5478 = vadd.f32 %v5049, %v5400
        %v5479 = vadd.f32 %v5050, %v5405
        %v5480 = vadd.f32 %v5051, %v5410
        %v5481 = vadd.f32 %v5052, %v5415
        %v5482 = vadd.f32 %v5053, %v5420
        %v5483 = vadd.f32 %v5054, %v5425
        %v5484 = vadd.f32 %v5055, %v5430
        %v5485 = vadd.f32 %v5056, %v5435
        %v5486 = vadd.f32 %v5057, %v5440
        %v5487 = vadd.f32 %v5058, %v5445
        %v5488 = vadd.f32 %v5059, %v5450
        %v5489 = vld [vmem:[#allocation14] sm:$0x1]
        %v5491 = vlaneseq
        %v5492 = vshrl.u32 %v5491, 7
        %v5493 = vsub.s32 0, %v5492
        %v5494 = vrot.slane %v5489, %v5493
        %v5496 = vadd.f32 %v5453, %v5494
        %v5497 = vadd.f32 %v5454, %v5494
        %v5498 = vadd.f32 %v5455, %v5494
        %v5499 = vadd.f32 %v5456, %v5494
        %v5500 = vadd.f32 %v5457, %v5494
        %v5501 = vadd.f32 %v5458, %v5494
        %v5502 = vadd.f32 %v5459, %v5494
        %v5503 = vadd.f32 %v5460, %v5494
        %v5504 = vadd.f32 %v5461, %v5494
        %v5505 = vadd.f32 %v5462, %v5494
        %v5506 = vadd.f32 %v5463, %v5494
        %v5507 = vadd.f32 %v5464, %v5494
        %v5508 = vadd.f32 %v5465, %v5494
        %v5509 = vadd.f32 %v5466, %v5494
        %v5510 = vadd.f32 %v5467, %v5494
        %v5511 = vadd.f32 %v5468, %v5494
        %v5512 = vadd.f32 %v5469, %v5494
        %v5513 = vadd.f32 %v5470, %v5494
        %v5514 = vadd.f32 %v5471, %v5494
        %v5515 = vadd.f32 %v5472, %v5494
        %v5516 = vadd.f32 %v5473, %v5494
        %v5517 = vadd.f32 %v5474, %v5494
        %v5518 = vadd.f32 %v5475, %v5494
        %v5519 = vadd.f32 %v5476, %v5494
        %v5520 = vadd.f32 %v5477, %v5494
        %v5521 = vadd.f32 %v5478, %v5494
        %v5522 = vadd.f32 %v5479, %v5494
        %v5523 = vadd.f32 %v5480, %v5494
        %v5524 = vadd.f32 %v5481, %v5494
        %v5525 = vadd.f32 %v5482, %v5494
        %v5526 = vadd.f32 %v5483, %v5494
        %v5527 = vadd.f32 %v5484, %v5494
        %v5528 = vadd.f32 %v5485, %v5494
        %v5529 = vadd.f32 %v5486, %v5494
        %v5530 = vadd.f32 %v5487, %v5494
        %v5531 = vadd.f32 %v5488, %v5494
        %v5532 = vld [vmem:[%s435] sm:$0x1]
        %v5534 = vlaneseq
        %v5535 = vshrl.u32 %v5534, 7
        %v5536 = vsub.s32 0, %v5535
        %v5537 = vrot.slane %v5532, %v5536
        %v5539 = vadd.f32 %v5496, %v5537
        %v5540 = vadd.f32 %v5497, %v5537
        %v5541 = vadd.f32 %v5498, %v5537
        %v5542 = vadd.f32 %v5499, %v5537
        %v5543 = vadd.f32 %v5500, %v5537
        %v5544 = vadd.f32 %v5501, %v5537
        %v5545 = vadd.f32 %v5502, %v5537
        %v5546 = vadd.f32 %v5503, %v5537
        %v5547 = vadd.f32 %v5504, %v5537
        %v5548 = vadd.f32 %v5505, %v5537
        %v5549 = vadd.f32 %v5506, %v5537
        %v5550 = vadd.f32 %v5507, %v5537
        %v5551 = vadd.f32 %v5508, %v5537
        %v5552 = vadd.f32 %v5509, %v5537
        %v5553 = vadd.f32 %v5510, %v5537
        %v5554 = vadd.f32 %v5511, %v5537
        %v5555 = vadd.f32 %v5512, %v5537
        %v5556 = vadd.f32 %v5513, %v5537
        %v5557 = vadd.f32 %v5514, %v5537
        %v5558 = vadd.f32 %v5515, %v5537
        %v5559 = vadd.f32 %v5516, %v5537
        %v5560 = vadd.f32 %v5517, %v5537
        %v5561 = vadd.f32 %v5518, %v5537
        %v5562 = vadd.f32 %v5519, %v5537
        %v5563 = vadd.f32 %v5520, %v5537
        %v5564 = vadd.f32 %v5521, %v5537
        %v5565 = vadd.f32 %v5522, %v5537
        %v5566 = vadd.f32 %v5523, %v5537
        %v5567 = vadd.f32 %v5524, %v5537
        %v5568 = vadd.f32 %v5525, %v5537
        %v5569 = vadd.f32 %v5526, %v5537
        %v5570 = vadd.f32 %v5527, %v5537
        %v5571 = vadd.f32 %v5528, %v5537
        %v5572 = vadd.f32 %v5529, %v5537
        %v5573 = vadd.f32 %v5530, %v5537
        %v5574 = vadd.f32 %v5531, %v5537
        %vm5575 = vcmask 130048
        %5576 = vst.msk [vmem:[%s473] sm:$0xff] %vm5575, 0.0
        %5577 = vst.msk [vmem:[%s473 + $0x8] sm:$0xff] %vm5575, 0.0
        %5578 = vst.msk [vmem:[%s473 + $0x10] sm:$0xff] %vm5575, 0.0
        %5579 = vst.msk [vmem:[%s473 + $0x18] sm:$0xff] %vm5575, 0.0
        %5580 = vst.msk [vmem:[%s473 + $0x20] sm:$0xff] %vm5575, 0.0
        %5581 = vst.msk [vmem:[%s473 + $0x28] sm:$0xff] %vm5575, 0.0
        %5582 = vst.msk [vmem:[%s473 + $0x30] sm:$0xff] %vm5575, 0.0
        %5583 = vst.msk [vmem:[%s473 + $0x38] sm:$0xff] %vm5575, 0.0
        %5584 = vst.msk [vmem:[%s473 + $0x40] sm:$0xff] %vm5575, 0.0
        %5585 = vst.msk [vmem:[%s473 + $0x48] sm:$0xff] %vm5575, 0.0
        %5586 = vst.msk [vmem:[%s473 + $0x50] sm:$0xff] %vm5575, 0.0
        %5587 = vst.msk [vmem:[%s473 + $0x58] sm:$0xff] %vm5575, 0.0
        %5588 = vst.msk [vmem:[%s473 + $0x60] sm:$0xff] %vm5575, 0.0
        %5589 = vst.msk [vmem:[%s473 + $0x68] sm:$0xff] %vm5575, 0.0
        %5590 = vst.msk [vmem:[%s473 + $0x70] sm:$0xff] %vm5575, 0.0
        %5591 = vst.msk [vmem:[%s473 + $0x78] sm:$0xff] %vm5575, 0.0
        %5592 = vst.msk [vmem:[%s473 + $0x80] sm:$0xff] %vm5575, 0.0
        %5593 = vst.msk [vmem:[%s473 + $0x88] sm:$0xff] %vm5575, 0.0
        %5594 = vst.msk [vmem:[%s473 + $0x90] sm:$0xff] %vm5575, 0.0
        %5595 = vst.msk [vmem:[%s473 + $0x98] sm:$0xff] %vm5575, 0.0
        %5596 = vst.msk [vmem:[%s473 + $0xa0] sm:$0xff] %vm5575, 0.0
        %5597 = vst.msk [vmem:[%s473 + $0xa8] sm:$0xff] %vm5575, 0.0
        %5598 = vst.msk [vmem:[%s473 + $0xb0] sm:$0xff] %vm5575, 0.0
        %5599 = vst.msk [vmem:[%s473 + $0xb8] sm:$0xff] %vm5575, 0.0
        %5600 = vst.msk [vmem:[%s473 + $0xc0] sm:$0xff] %vm5575, 0.0
        %5601 = vst.msk [vmem:[%s473 + $0xc8] sm:$0xff] %vm5575, 0.0
        %5602 = vst.msk [vmem:[%s473 + $0xd0] sm:$0xff] %vm5575, 0.0
        %5603 = vst.msk [vmem:[%s473 + $0xd8] sm:$0xff] %vm5575, 0.0
        %5604 = vst.msk [vmem:[%s473 + $0xe0] sm:$0xff] %vm5575, 0.0
        %5605 = vst.msk [vmem:[%s473 + $0xe8] sm:$0xff] %vm5575, 0.0
        %5606 = vst.msk [vmem:[%s473 + $0xf0] sm:$0xff] %vm5575, 0.0
        %5607 = vst.msk [vmem:[%s473 + $0xf8] sm:$0xff] %vm5575, 0.0
        %5608 = vst.msk [vmem:[%s473 + $0x100] sm:$0xff] %vm5575, 0.0
        %5609 = vst.msk [vmem:[%s473 + $0x108] sm:$0xff] %vm5575, 0.0
        %5610 = vst.msk [vmem:[%s473 + $0x110] sm:$0xff] %vm5575, 0.0
        %5611 = vst.msk [vmem:[%s473 + $0x118] sm:$0xff] %vm5575, 0.0
        %5612 = vst.msk [vmem:[%s473 + $0x120] sm:$0xff] %vm5575, 0.0
        %5613 = vst.msk [vmem:[%s473 + $0x128] sm:$0xff] %vm5575, 0.0
        %5614 = vst.msk [vmem:[%s473 + $0x130] sm:$0xff] %vm5575, 0.0
        %5615 = vst.msk [vmem:[%s473 + $0x138] sm:$0xff] %vm5575, 0.0
        %5616 = vst.msk [vmem:[%s473 + $0x140] sm:$0xff] %vm5575, 0.0
        %5617 = vst.msk [vmem:[%s473 + $0x148] sm:$0xff] %vm5575, 0.0
        %5618 = vst.msk [vmem:[%s473 + $0x150] sm:$0xff] %vm5575, 0.0
        %5619 = vst.msk [vmem:[%s473 + $0x158] sm:$0xff] %vm5575, 0.0
        %5620 = vst.msk [vmem:[%s473 + $0x160] sm:$0xff] %vm5575, 0.0
        %5621 = vst.msk [vmem:[%s473 + $0x24] sm:$0xff] %vm5575, %v5539
        %5622 = vst.msk [vmem:[%s473 + $0x2c] sm:$0xff] %vm5575, %v5540
        %5623 = vst.msk [vmem:[%s473 + $0x34] sm:$0xff] %vm5575, %v5541
        %5624 = vst.msk [vmem:[%s473 + $0x3c] sm:$0xff] %vm5575, %v5542
        %5625 = vst.msk [vmem:[%s473 + $0x44] sm:$0xff] %vm5575, %v5543
        %5626 = vst.msk [vmem:[%s473 + $0x4c] sm:$0xff] %vm5575, %v5544
        %5627 = vst.msk [vmem:[%s473 + $0x54] sm:$0xff] %vm5575, %v5545
        %5628 = vst.msk [vmem:[%s473 + $0x5c] sm:$0xff] %vm5575, %v5546
        %5629 = vst.msk [vmem:[%s473 + $0x64] sm:$0xff] %vm5575, %v5547
        %5630 = vst.msk [vmem:[%s473 + $0x6c] sm:$0xff] %vm5575, %v5548
        %5631 = vst.msk [vmem:[%s473 + $0x74] sm:$0xff] %vm5575, %v5549
        %5632 = vst.msk [vmem:[%s473 + $0x7c] sm:$0xff] %vm5575, %v5550
        %5633 = vst.msk [vmem:[%s473 + $0x84] sm:$0xff] %vm5575, %v5551
        %5634 = vst.msk [vmem:[%s473 + $0x8c] sm:$0xff] %vm5575, %v5552
        %5635 = vst.msk [vmem:[%s473 + $0x94] sm:$0xff] %vm5575, %v5553
        %5636 = vst.msk [vmem:[%s473 + $0x9c] sm:$0xff] %vm5575, %v5554
        %5637 = vst.msk [vmem:[%s473 + $0xa4] sm:$0xff] %vm5575, %v5555
        %5638 = vst.msk [vmem:[%s473 + $0xac] sm:$0xff] %vm5575, %v5556
        %5639 = vst.msk [vmem:[%s473 + $0xb4] sm:$0xff] %vm5575, %v5557
        %5640 = vst.msk [vmem:[%s473 + $0xbc] sm:$0xff] %vm5575, %v5558
        %5641 = vst.msk [vmem:[%s473 + $0xc4] sm:$0xff] %vm5575, %v5559
        %5642 = vst.msk [vmem:[%s473 + $0xcc] sm:$0xff] %vm5575, %v5560
        %5643 = vst.msk [vmem:[%s473 + $0xd4] sm:$0xff] %vm5575, %v5561
        %5644 = vst.msk [vmem:[%s473 + $0xdc] sm:$0xff] %vm5575, %v5562
        %5645 = vst.msk [vmem:[%s473 + $0xe4] sm:$0xff] %vm5575, %v5563
        %5646 = vst.msk [vmem:[%s473 + $0xec] sm:$0xff] %vm5575, %v5564
        %5647 = vst.msk [vmem:[%s473 + $0xf4] sm:$0xff] %vm5575, %v5565
        %5648 = vst.msk [vmem:[%s473 + $0xfc] sm:$0xff] %vm5575, %v5566
        %5649 = vst.msk [vmem:[%s473 + $0x104] sm:$0xff] %vm5575, %v5567
        %5650 = vst.msk [vmem:[%s473 + $0x10c] sm:$0xff] %vm5575, %v5568
        %5651 = vst.msk [vmem:[%s473 + $0x114] sm:$0xff] %vm5575, %v5569
        %5652 = vst.msk [vmem:[%s473 + $0x11c] sm:$0xff] %vm5575, %v5570
        %5653 = vst.msk [vmem:[%s473 + $0x124] sm:$0xff] %vm5575, %v5571
        %5654 = vst.msk [vmem:[%s473 + $0x12c] sm:$0xff] %vm5575, %v5572
        %5655 = vst.msk [vmem:[%s473 + $0x134] sm:$0xff] %vm5575, %v5573
        %5656 = vst.msk [vmem:[%s473 + $0x13c] sm:$0xff] %vm5575, %v5574
        %s5657 = sand.u32 %s237, 1
        %s5658 = scalar_lea.sflag [#allocation4], %s5657
        %s5659 = sand.u32 %s237, 1
        %s5660 = smul.addr %s5659, 360
        %s5661 = scalar_lea.vmem [#allocation17], %s5660
        // Predicated region
        $region93: #{tpu_custom_call.1} parent=55 // pred_check
          %p5662 = pneg %p247
        $region94: #{tpu_custom_call.1} parent=55 // pred_check_branch
          %5664 = sbr.rel (%p5662) target = $region96
        $region95: #{tpu_custom_call.1} parent=55 // pred_region
          %s5666 = ssub.s32 5760, 5760
          %5667 = vsyncadd %s5658, %s5666
          %s5668 = smul.addr %s30, 45
          %s5669 = smul.addr %s5668, 128
          %s5670 = scalar_lea.hbm %s9, %s5669
          %s5671 = sshll.u32 %s5661, 4
          %s5672 = int_to_ptr.vmem [resolvable:$true] %s5671
          %5677 = dma.vmem_to_hbm [thread:$0]  %s5672, 5760, %s5670, %s5658, 128, 128, 8
        $region96: #{tpu_custom_call.1} parent=55 // pred_fallthru
          _
      $region56: #{tpu_custom_call.1} parent=5 // pred_fallthru
        _
      %p5678 = scmp.le.s32.totalorder 2, %s25
      // Predicated region
      $region97: #{tpu_custom_call.1} parent=5 // pred_check
        %p5679 = pneg %p5678
      $region98: #{tpu_custom_call.1} parent=5 // pred_check_branch
        %5681 = sbr.rel (%p5679) target = $region100
      $region99: #{tpu_custom_call.1} parent=5 // pred_region
        %s5682 = ssub.s32 %s25, 2
        // Predicated region
        $region101: #{tpu_custom_call.1} parent=99 // pred_check
          %p5683 = pneg %p253
        $region102: #{tpu_custom_call.1} parent=99 // pred_check_branch
          %5685 = sbr.rel (%p5683) target = $region104
        $region103: #{tpu_custom_call.1} parent=99 // pred_region
          %s5686 = sand.u32 %s238, 1
          %s5687 = scalar_lea.sflag [#allocation4], %s5686
          %s5688 = sand.u32 %s238, 1
          %s5689 = smul.addr %s5688, 360
          %s5690 = scalar_lea.vmem [#allocation17], %s5689
          %5691 = dma.done %s5687, 5760
        $region104: #{tpu_custom_call.1} parent=99 // pred_fallthru
          _
      $region100: #{tpu_custom_call.1} parent=5 // pred_fallthru
        _
    $region6: #{tpu_custom_call.1} parent=1 // loop_footer
      %s29 = sadd.s32 1, %s25
    $region7: #{tpu_custom_call.1} parent=1 // loop_footer_branch
      %24 = sbr.rel target = $region3
    $region8: #{tpu_custom_call.1} parent=1 // loop_exit
      _
    %5692 = vsyncpa [#allocation3], 1
    %s5693 = scalar_lea.sflag [#allocation3], 1
    %5694 = vsyncpa %s5693, 1
    %5695 = vsyncpa [#allocation6], 1
    %5696 = vsyncpa [#allocation9], 1
    %5697 = vsyncpa [#allocation12], 1
    %5698 = vsyncpa [#allocation15], 1
    %5699 = vsyncpa [#allocation4], 1
    %s5700 = scalar_lea.sflag [#allocation4], 1
    %5701 = vsyncpa %s5700, 1

</llo_original>
